<compile_context>
chip_gen: v5e
topology: v5e:2x2
jax: 0.10.0
libtpu: 0.0.40
codegen_flags: <defaults>
</compile_context>

<pallas_src>
import math
from functools import partial

import jax
import jax.numpy as jnp
from jax.experimental import pallas as pl
from jax.experimental.pallas import tpu as pltpu


# ----------------------------------------------------------------------------
# Preprocessing glue (diff + fourier_encode) — matches the torch ordering:
# channels = [x (6), sin(scaled) (18, channel-major over freqs),
#             sin(scaled + pi/2) (18)]  -> 42 channels total.
# ----------------------------------------------------------------------------
def _preprocess(positions: jax.Array) -> jax.Array:
    # positions: (B, 3, L) in torch NCL layout
    x = jnp.transpose(positions, (0, 2, 1))                                   # (B, L, 3)
    x = jnp.concatenate([x[:, 1:, :], x[:, 1:, :] - x[:, :-1, :]], axis=-1)   # (B, T, 6)
    B, T, C = x.shape
    coeffs = 2.0 ** jnp.arange(3, dtype=x.dtype)                              # (3,)
    scaled = (x[..., :, None] * coeffs).reshape(B, T, C * 3)                  # channel-major
    return jnp.concatenate(
        [x, jnp.sin(scaled), jnp.sin(scaled + jnp.pi / 2.0)], axis=-1)        # (B, T, 42)


# ----------------------------------------------------------------------------
# Fused kernel.
# ----------------------------------------------------------------------------
def _shifted_conv_relu(x, wa, wb, wc, b, mask, cdt):
    """Conv1d(k=3, padding=1) + ReLU on the flattened (B*T_pad, Cin) activation.

    The +-1 shifts along rows use pltpu.roll (XLU slot, no VMEM copies).
    Correctness of the wrap / cross-batch rows relies on the invariant that
    pad rows (t >= T inside each T_pad block) are zero on entry; the mask
    multiply re-establishes the invariant for the output.
    """
    rows = x.shape[0]
    x_prev = pltpu.roll(x, shift=1, axis=0)            # row r gets x[r-1]
    x_next = pltpu.roll(x, shift=rows - 1, axis=0)     # row r gets x[r+1]
    acc = jnp.dot(x_prev, wa, preferred_element_type=jnp.float32)
    acc = acc + jnp.dot(x, wb, preferred_element_type=jnp.float32)
    acc = acc + jnp.dot(x_next, wc, preferred_element_type=jnp.float32)
    acc = acc + b                                       # (1, Cout) broadcasts
    return (jnp.maximum(acc, 0.0) * mask).astype(cdt)


def _egoexo_fused_kernel(B, T, T_pad, n_rest, cdt,
                         x_ref, mask_ref, w0_ref, b0_ref, ws_ref, bs_ref,
                         w1_ref, b1_ref, wh_ref, bh_ref, out_ref):
    mask = mask_ref[...]                                # (B*T_pad, 1) f32, 1 on valid rows

    # Layer 0: Cin = 42.
    x = _shifted_conv_relu(x_ref[...], w0_ref[0], w0_ref[1], w0_ref[2],
                           b0_ref[...], mask, cdt)

    # Layers 1..n_rest: identical C -> C convs, weights sliced (statically) from
    # a single stacked VMEM ref.  Fully unrolled on purpose (7 small layers) so
    # the scheduler can overlap weight reads with MXU work.
    for i in range(n_rest):
        x = _shifted_conv_relu(x, ws_ref[i, 0], ws_ref[i, 1], ws_ref[i, 2],
                               bs_ref[i], mask, cdt)

    # Global average pool over the true (unpadded) length T (pad rows are zero).
    ch = x.shape[-1]
    x3 = x.astype(jnp.float32).reshape(B, T_pad, ch)
    pooled = jnp.sum(x3, axis=1) * (1.0 / T)            # (B, C)

    # fc1 + ReLU, then all three heads as one lane-padded matmul.
    h = jnp.dot(pooled.astype(cdt), w1_ref[...], preferred_element_type=jnp.float32)
    h = jnp.maximum(h + b1_ref[...], 0.0)
    out = jnp.dot(h.astype(cdt), wh_ref[...], preferred_element_type=jnp.float32)
    out_ref[...] = (out + bh_ref[...]).astype(out_ref.dtype)


def _forward(positions, params, compute_dtype):
    (w0, b0, ws, bs, w1, b1, wh, bh) = params
    x = _preprocess(positions)                          # (B, T, 42) f32, T = L-1
    B, T, C0 = x.shape

    # Pad T to a multiple of 8 with at least one extra zero row per batch so the
    # rolled shifts never see valid data from a neighbouring batch.
    T_pad = ((T + 8) // 8) * 8
    BT = B * T_pad

    xp = jnp.zeros((B, T_pad, C0), compute_dtype).at[:, :T, :].set(x.astype(compute_dtype))
    x_flat = xp.reshape(BT, C0)
    row_mask = (jnp.arange(T_pad) < T).astype(jnp.float32)                   # (T_pad,)
    mask = jnp.broadcast_to(row_mask[None, :, None], (B, T_pad, 1)).reshape(BT, 1)

    n_rest = ws.shape[0]
    out = pl.pallas_call(
        partial(_egoexo_fused_kernel, B, T, T_pad, n_rest, compute_dtype),
        out_shape=jax.ShapeDtypeStruct((B, wh.shape[1]), jnp.float32),
        compiler_params=pltpu.CompilerParams(vmem_limit_bytes=32 * 1024 * 1024),
    )(x_flat, mask, w0, b0, ws, bs, w1, b1, wh, bh)
    return out                                          # (B, 128); first 16 cols are real


# ----------------------------------------------------------------------------
# Model wrapper with deterministic synthetic parameters.
# ----------------------------------------------------------------------------
class EgoExoSequenceClassifierPallas:
    def __init__(self, num_floor_height_classes: int = 13, num_layers: int = 8,
                 num_channels: int = 256, param_seed: int = 42,
                 compute_dtype=jnp.float32):
        def uniform(key, shape, fan_in):
            bound = 1.0 / math.sqrt(fan_in)
            return jax.random.uniform(key, shape, jnp.float32, -bound, bound)

        keys = iter(jax.random.split(jax.random.PRNGKey(param_seed),
                                     2 * (num_layers + 4)))
        in_ch = 6 + 3 * 6 * 2  # 42 fourier-encoded channels
        self.convs = []
        c_in = in_ch
        for _ in range(num_layers):
            fan = c_in * 3
            w = uniform(next(keys), (3, c_in, num_channels), fan)   # (K, Cin, Cout)
            b = uniform(next(keys), (1, num_channels), fan)
            self.convs.append((w, b))
            c_in = num_channels
        self.fc1 = (uniform(next(keys), (num_channels, 128), num_channels),
                    uniform(next(keys), (1, 128), num_channels))
        self.take = (uniform(next(keys), (128, 2), 128),
                     uniform(next(keys), (1, 2), 128))
        self.fh = (uniform(next(keys), (128, num_floor_height_classes), 128),
                   uniform(next(keys), (1, num_floor_height_classes), 128))
        self.reg = (uniform(next(keys), (128, 1), 128),
                    uniform(next(keys), (1, 1), 128))
        self.compute_dtype = compute_dtype

        # Kernel-layout parameters: stacked layers 1.., fused + lane-padded heads.
        w0, b0 = self.convs[0]
        ws = jnp.stack([w for w, _ in self.convs[1:]], axis=0)      # (L-1, 3, C, C)
        bs = jnp.stack([b for _, b in self.convs[1:]], axis=0)      # (L-1, 1, C)
        head_w = jnp.concatenate([self.take[0], self.fh[0], self.reg[0]], axis=1)
        head_b = jnp.concatenate([self.take[1], self.fh[1], self.reg[1]], axis=1)
        hp = 128  # lane-dense output width
        head_w = jnp.pad(head_w, ((0, 0), (0, hp - head_w.shape[1])))
        head_b = jnp.pad(head_b, ((0, 0), (0, hp - head_b.shape[1])))
        self._kernel_params = tuple(
            p.astype(compute_dtype)
            for p in (w0, b0, ws, bs, self.fc1[0], self.fc1[1], head_w, head_b))
        self._fwd = jax.jit(partial(_forward, compute_dtype=compute_dtype))

    def __call__(self, positions):
        out = self._fwd(positions, self._kernel_params)
        n_take = self.take[0].shape[1]
        n_fh = self.fh[0].shape[1]
        take = out[:, :n_take]
        fh = out[:, n_take:n_take + n_fh]
        reg = out[:, n_take + n_fh:n_take + n_fh + 1]
        return take, fh, reg

    # Pure-JAX reference (no Pallas) for correctness checking.
    def reference(self, positions):
        x = _preprocess(positions)
        for w, b in self.convs:
            x = jax.lax.conv_general_dilated(
                x, w, window_strides=(1,), padding=((1, 1),),
                dimension_numbers=("NHC", "HIO", "NHC"))
            x = jax.nn.relu(x + b)
        pooled = jnp.mean(x, axis=1)
        h = jax.nn.relu(pooled @ self.fc1[0] + self.fc1[1])
        return (h @ self.take[0] + self.take[1],
                h @ self.fh[0] + self.fh[1],
                h @ self.reg[0] + self.reg[1])


if __name__ == "__main__":
    key = jax.random.PRNGKey(0)
    B, L = 2, 16
    positions = jax.random.normal(key, (B, 3, L), dtype=jnp.float32)  # torch NCL

    model = EgoExoSequenceClassifierPallas()  # defaults: 13 classes, 8 layers, 256 ch
    take_type, floor_logits, floor_reg = model(positions)
    jax.block_until_ready((take_type, floor_logits, floor_reg))

    # sanity: shapes + agreement with plain-JAX reference
    assert take_type.shape == (B, 2)
    assert floor_logits.shape == (B, 13)
    assert floor_reg.shape == (B, 1)
    ref = model.reference(positions)
    for out, r in zip((take_type, floor_logits, floor_reg), ref):
        assert jnp.allclose(out, r, rtol=1e-3, atol=1e-3)

    print("KERNEL_OK")
</pallas_src>

<mosaic_0001>
module attributes {stable_mosaic.version = 11 : i64} {
  func.func @_egoexo_fused_kernel(%arg0: memref<32x42xf32, #tpu.memory_space<vmem>>, %arg1: memref<32x1xf32, #tpu.memory_space<vmem>>, %arg2: memref<3x42x256xf32, #tpu.memory_space<vmem>>, %arg3: memref<1x256xf32, #tpu.memory_space<vmem>>, %arg4: memref<7x3x256x256xf32, #tpu.memory_space<vmem>>, %arg5: memref<7x1x256xf32, #tpu.memory_space<vmem>>, %arg6: memref<256x128xf32, #tpu.memory_space<vmem>>, %arg7: memref<1x128xf32, #tpu.memory_space<vmem>>, %arg8: memref<128x128xf32, #tpu.memory_space<vmem>>, %arg9: memref<1x128xf32, #tpu.memory_space<vmem>>, %arg10: memref<2x128xf32, #tpu.memory_space<vmem>>) attributes {dimension_semantics = [], scalar_prefetch = 0 : i64, scratch_operands = 0 : i64, tpu.core_type = #tpu.core_type<tc>} {
    %c0 = arith.constant 0 : index
    %c0_0 = arith.constant 0 : index
    %0 = vector.load %arg1[%c0, %c0_0] : memref<32x1xf32, #tpu.memory_space<vmem>>, vector<32x1xf32>
    %c0_1 = arith.constant 0 : index
    %c0_2 = arith.constant 0 : index
    %1 = vector.load %arg0[%c0_1, %c0_2] : memref<32x42xf32, #tpu.memory_space<vmem>>, vector<32x42xf32>
    %c0_3 = arith.constant 0 : index
    %c0_4 = arith.constant 0 : index
    %c0_5 = arith.constant 0 : index
    %2 = vector.load %arg2[%c0_3, %c0_4, %c0_5] : memref<3x42x256xf32, #tpu.memory_space<vmem>>, vector<1x42x256xf32>
    %3 = vector.shape_cast %2 : vector<1x42x256xf32> to vector<42x256xf32>
    %c1 = arith.constant 1 : index
    %c0_6 = arith.constant 0 : index
    %c0_7 = arith.constant 0 : index
    %4 = vector.load %arg2[%c1, %c0_6, %c0_7] : memref<3x42x256xf32, #tpu.memory_space<vmem>>, vector<1x42x256xf32>
    %5 = vector.shape_cast %4 : vector<1x42x256xf32> to vector<42x256xf32>
    %c2 = arith.constant 2 : index
    %c0_8 = arith.constant 0 : index
    %c0_9 = arith.constant 0 : index
    %6 = vector.load %arg2[%c2, %c0_8, %c0_9] : memref<3x42x256xf32, #tpu.memory_space<vmem>>, vector<1x42x256xf32>
    %7 = vector.shape_cast %6 : vector<1x42x256xf32> to vector<42x256xf32>
    %c0_10 = arith.constant 0 : index
    %c0_11 = arith.constant 0 : index
    %8 = vector.load %arg3[%c0_10, %c0_11] : memref<1x256xf32, #tpu.memory_space<vmem>>, vector<1x256xf32>
    %c1_i32 = arith.constant 1 : i32
    %9 = tpu.dynamic_rotate %1 by %c1_i32 dim 0 : vector<32x42xf32>, i32 -> vector<32x42xf32>
    %c31_i32 = arith.constant 31 : i32
    %10 = tpu.dynamic_rotate %1 by %c31_i32 dim 0 : vector<32x42xf32>, i32 -> vector<32x42xf32>
    %cst = arith.constant dense<0.000000e+00> : vector<32x256xf32>
    %11 = tpu.matmul %9, %3, %cst {dimension_numbers = #tpu.dot_dimension_numbers<[1], [0], [0], [1], [0, 0, 1, 1], [], []>} : vector<32x42xf32>, vector<42x256xf32>, vector<32x256xf32> -> vector<32x256xf32>
    %cst_12 = arith.constant dense<0.000000e+00> : vector<32x256xf32>
    %12 = tpu.matmul %1, %5, %cst_12 {dimension_numbers = #tpu.dot_dimension_numbers<[1], [0], [0], [1], [0, 0, 1, 1], [], []>} : vector<32x42xf32>, vector<42x256xf32>, vector<32x256xf32> -> vector<32x256xf32>
    %13 = arith.addf %11, %12 : vector<32x256xf32>
    %cst_13 = arith.constant dense<0.000000e+00> : vector<32x256xf32>
    %14 = tpu.matmul %10, %7, %cst_13 {dimension_numbers = #tpu.dot_dimension_numbers<[1], [0], [0], [1], [0, 0, 1, 1], [], []>} : vector<32x42xf32>, vector<42x256xf32>, vector<32x256xf32> -> vector<32x256xf32>
    %15 = arith.addf %13, %14 : vector<32x256xf32>
    %16 = vector.broadcast %8 : vector<1x256xf32> to vector<32x256xf32>
    %17 = arith.addf %15, %16 : vector<32x256xf32>
    %cst_14 = arith.constant 0.000000e+00 : f32
    %18 = vector.broadcast %cst_14 : f32 to vector<32x256xf32>
    %19 = arith.maximumf %17, %18 : vector<32x256xf32>
    %20 = vector.broadcast %0 : vector<32x1xf32> to vector<32x256xf32>
    %21 = arith.mulf %19, %20 : vector<32x256xf32>
    %c0_15 = arith.constant 0 : index
    %c0_16 = arith.constant 0 : index
    %c0_17 = arith.constant 0 : index
    %c0_18 = arith.constant 0 : index
    %22 = vector.load %arg4[%c0_15, %c0_16, %c0_17, %c0_18] : memref<7x3x256x256xf32, #tpu.memory_space<vmem>>, vector<1x1x256x256xf32>
    %23 = vector.shape_cast %22 : vector<1x1x256x256xf32> to vector<256x256xf32>
    %c0_19 = arith.constant 0 : index
    %c1_20 = arith.constant 1 : index
    %c0_21 = arith.constant 0 : index
    %c0_22 = arith.constant 0 : index
    %24 = vector.load %arg4[%c0_19, %c1_20, %c0_21, %c0_22] : memref<7x3x256x256xf32, #tpu.memory_space<vmem>>, vector<1x1x256x256xf32>
    %25 = vector.shape_cast %24 : vector<1x1x256x256xf32> to vector<256x256xf32>
    %c0_23 = arith.constant 0 : index
    %c2_24 = arith.constant 2 : index
    %c0_25 = arith.constant 0 : index
    %c0_26 = arith.constant 0 : index
    %26 = vector.load %arg4[%c0_23, %c2_24, %c0_25, %c0_26] : memref<7x3x256x256xf32, #tpu.memory_space<vmem>>, vector<1x1x256x256xf32>
    %27 = vector.shape_cast %26 : vector<1x1x256x256xf32> to vector<256x256xf32>
    %c0_27 = arith.constant 0 : index
    %c0_28 = arith.constant 0 : index
    %c0_29 = arith.constant 0 : index
    %28 = vector.load %arg5[%c0_27, %c0_28, %c0_29] : memref<7x1x256xf32, #tpu.memory_space<vmem>>, vector<1x1x256xf32>
    %29 = vector.shape_cast %28 : vector<1x1x256xf32> to vector<1x256xf32>
    %c1_i32_30 = arith.constant 1 : i32
    %30 = tpu.dynamic_rotate %21 by %c1_i32_30 dim 0 : vector<32x256xf32>, i32 -> vector<32x256xf32>
    %c31_i32_31 = arith.constant 31 : i32
    %31 = tpu.dynamic_rotate %21 by %c31_i32_31 dim 0 : vector<32x256xf32>, i32 -> vector<32x256xf32>
    %cst_32 = arith.constant dense<0.000000e+00> : vector<32x256xf32>
    %32 = tpu.matmul %30, %23, %cst_32 {dimension_numbers = #tpu.dot_dimension_numbers<[1], [0], [0], [1], [0, 0, 1, 1], [], []>} : vector<32x256xf32>, vector<256x256xf32>, vector<32x256xf32> -> vector<32x256xf32>
    %cst_33 = arith.constant dense<0.000000e+00> : vector<32x256xf32>
    %33 = tpu.matmul %21, %25, %cst_33 {dimension_numbers = #tpu.dot_dimension_numbers<[1], [0], [0], [1], [0, 0, 1, 1], [], []>} : vector<32x256xf32>, vector<256x256xf32>, vector<32x256xf32> -> vector<32x256xf32>
    %34 = arith.addf %32, %33 : vector<32x256xf32>
    %cst_34 = arith.constant dense<0.000000e+00> : vector<32x256xf32>
    %35 = tpu.matmul %31, %27, %cst_34 {dimension_numbers = #tpu.dot_dimension_numbers<[1], [0], [0], [1], [0, 0, 1, 1], [], []>} : vector<32x256xf32>, vector<256x256xf32>, vector<32x256xf32> -> vector<32x256xf32>
    %36 = arith.addf %34, %35 : vector<32x256xf32>
    %37 = vector.broadcast %29 : vector<1x256xf32> to vector<32x256xf32>
    %38 = arith.addf %36, %37 : vector<32x256xf32>
    %cst_35 = arith.constant 0.000000e+00 : f32
    %39 = vector.broadcast %cst_35 : f32 to vector<32x256xf32>
    %40 = arith.maximumf %38, %39 : vector<32x256xf32>
    %41 = vector.broadcast %0 : vector<32x1xf32> to vector<32x256xf32>
    %42 = arith.mulf %40, %41 : vector<32x256xf32>
    %c1_36 = arith.constant 1 : index
    %c0_37 = arith.constant 0 : index
    %c0_38 = arith.constant 0 : index
    %c0_39 = arith.constant 0 : index
    %43 = vector.load %arg4[%c1_36, %c0_37, %c0_38, %c0_39] : memref<7x3x256x256xf32, #tpu.memory_space<vmem>>, vector<1x1x256x256xf32>
    %44 = vector.shape_cast %43 : vector<1x1x256x256xf32> to vector<256x256xf32>
    %c1_40 = arith.constant 1 : index
    %c1_41 = arith.constant 1 : index
    %c0_42 = arith.constant 0 : index
    %c0_43 = arith.constant 0 : index
    %45 = vector.load %arg4[%c1_40, %c1_41, %c0_42, %c0_43] : memref<7x3x256x256xf32, #tpu.memory_space<vmem>>, vector<1x1x256x256xf32>
    %46 = vector.shape_cast %45 : vector<1x1x256x256xf32> to vector<256x256xf32>
    %c1_44 = arith.constant 1 : index
    %c2_45 = arith.constant 2 : index
    %c0_46 = arith.constant 0 : index
    %c0_47 = arith.constant 0 : index
    %47 = vector.load %arg4[%c1_44, %c2_45, %c0_46, %c0_47] : memref<7x3x256x256xf32, #tpu.memory_space<vmem>>, vector<1x1x256x256xf32>
    %48 = vector.shape_cast %47 : vector<1x1x256x256xf32> to vector<256x256xf32>
    %c1_48 = arith.constant 1 : index
    %c0_49 = arith.constant 0 : index
    %c0_50 = arith.constant 0 : index
    %49 = vector.load %arg5[%c1_48, %c0_49, %c0_50] : memref<7x1x256xf32, #tpu.memory_space<vmem>>, vector<1x1x256xf32>
    %50 = vector.shape_cast %49 : vector<1x1x256xf32> to vector<1x256xf32>
    %c1_i32_51 = arith.constant 1 : i32
    %51 = tpu.dynamic_rotate %42 by %c1_i32_51 dim 0 : vector<32x256xf32>, i32 -> vector<32x256xf32>
    %c31_i32_52 = arith.constant 31 : i32
    %52 = tpu.dynamic_rotate %42 by %c31_i32_52 dim 0 : vector<32x256xf32>, i32 -> vector<32x256xf32>
    %cst_53 = arith.constant dense<0.000000e+00> : vector<32x256xf32>
    %53 = tpu.matmul %51, %44, %cst_53 {dimension_numbers = #tpu.dot_dimension_numbers<[1], [0], [0], [1], [0, 0, 1, 1], [], []>} : vector<32x256xf32>, vector<256x256xf32>, vector<32x256xf32> -> vector<32x256xf32>
    %cst_54 = arith.constant dense<0.000000e+00> : vector<32x256xf32>
    %54 = tpu.matmul %42, %46, %cst_54 {dimension_numbers = #tpu.dot_dimension_numbers<[1], [0], [0], [1], [0, 0, 1, 1], [], []>} : vector<32x256xf32>, vector<256x256xf32>, vector<32x256xf32> -> vector<32x256xf32>
    %55 = arith.addf %53, %54 : vector<32x256xf32>
    %cst_55 = arith.constant dense<0.000000e+00> : vector<32x256xf32>
    %56 = tpu.matmul %52, %48, %cst_55 {dimension_numbers = #tpu.dot_dimension_numbers<[1], [0], [0], [1], [0, 0, 1, 1], [], []>} : vector<32x256xf32>, vector<256x256xf32>, vector<32x256xf32> -> vector<32x256xf32>
    %57 = arith.addf %55, %56 : vector<32x256xf32>
    %58 = vector.broadcast %50 : vector<1x256xf32> to vector<32x256xf32>
    %59 = arith.addf %57, %58 : vector<32x256xf32>
    %cst_56 = arith.constant 0.000000e+00 : f32
    %60 = vector.broadcast %cst_56 : f32 to vector<32x256xf32>
    %61 = arith.maximumf %59, %60 : vector<32x256xf32>
    %62 = vector.broadcast %0 : vector<32x1xf32> to vector<32x256xf32>
    %63 = arith.mulf %61, %62 : vector<32x256xf32>
    %c2_57 = arith.constant 2 : index
    %c0_58 = arith.constant 0 : index
    %c0_59 = arith.constant 0 : index
    %c0_60 = arith.constant 0 : index
    %64 = vector.load %arg4[%c2_57, %c0_58, %c0_59, %c0_60] : memref<7x3x256x256xf32, #tpu.memory_space<vmem>>, vector<1x1x256x256xf32>
    %65 = vector.shape_cast %64 : vector<1x1x256x256xf32> to vector<256x256xf32>
    %c2_61 = arith.constant 2 : index
    %c1_62 = arith.constant 1 : index
    %c0_63 = arith.constant 0 : index
    %c0_64 = arith.constant 0 : index
    %66 = vector.load %arg4[%c2_61, %c1_62, %c0_63, %c0_64] : memref<7x3x256x256xf32, #tpu.memory_space<vmem>>, vector<1x1x256x256xf32>
    %67 = vector.shape_cast %66 : vector<1x1x256x256xf32> to vector<256x256xf32>
    %c2_65 = arith.constant 2 : index
    %c2_66 = arith.constant 2 : index
    %c0_67 = arith.constant 0 : index
    %c0_68 = arith.constant 0 : index
    %68 = vector.load %arg4[%c2_65, %c2_66, %c0_67, %c0_68] : memref<7x3x256x256xf32, #tpu.memory_space<vmem>>, vector<1x1x256x256xf32>
    %69 = vector.shape_cast %68 : vector<1x1x256x256xf32> to vector<256x256xf32>
    %c2_69 = arith.constant 2 : index
    %c0_70 = arith.constant 0 : index
    %c0_71 = arith.constant 0 : index
    %70 = vector.load %arg5[%c2_69, %c0_70, %c0_71] : memref<7x1x256xf32, #tpu.memory_space<vmem>>, vector<1x1x256xf32>
    %71 = vector.shape_cast %70 : vector<1x1x256xf32> to vector<1x256xf32>
    %c1_i32_72 = arith.constant 1 : i32
    %72 = tpu.dynamic_rotate %63 by %c1_i32_72 dim 0 : vector<32x256xf32>, i32 -> vector<32x256xf32>
    %c31_i32_73 = arith.constant 31 : i32
    %73 = tpu.dynamic_rotate %63 by %c31_i32_73 dim 0 : vector<32x256xf32>, i32 -> vector<32x256xf32>
    %cst_74 = arith.constant dense<0.000000e+00> : vector<32x256xf32>
    %74 = tpu.matmul %72, %65, %cst_74 {dimension_numbers = #tpu.dot_dimension_numbers<[1], [0], [0], [1], [0, 0, 1, 1], [], []>} : vector<32x256xf32>, vector<256x256xf32>, vector<32x256xf32> -> vector<32x256xf32>
    %cst_75 = arith.constant dense<0.000000e+00> : vector<32x256xf32>
    %75 = tpu.matmul %63, %67, %cst_75 {dimension_numbers = #tpu.dot_dimension_numbers<[1], [0], [0], [1], [0, 0, 1, 1], [], []>} : vector<32x256xf32>, vector<256x256xf32>, vector<32x256xf32> -> vector<32x256xf32>
    %76 = arith.addf %74, %75 : vector<32x256xf32>
    %cst_76 = arith.constant dense<0.000000e+00> : vector<32x256xf32>
    %77 = tpu.matmul %73, %69, %cst_76 {dimension_numbers = #tpu.dot_dimension_numbers<[1], [0], [0], [1], [0, 0, 1, 1], [], []>} : vector<32x256xf32>, vector<256x256xf32>, vector<32x256xf32> -> vector<32x256xf32>
    %78 = arith.addf %76, %77 : vector<32x256xf32>
    %79 = vector.broadcast %71 : vector<1x256xf32> to vector<32x256xf32>
    %80 = arith.addf %78, %79 : vector<32x256xf32>
    %cst_77 = arith.constant 0.000000e+00 : f32
    %81 = vector.broadcast %cst_77 : f32 to vector<32x256xf32>
    %82 = arith.maximumf %80, %81 : vector<32x256xf32>
    %83 = vector.broadcast %0 : vector<32x1xf32> to vector<32x256xf32>
    %84 = arith.mulf %82, %83 : vector<32x256xf32>
    %c3 = arith.constant 3 : index
    %c0_78 = arith.constant 0 : index
    %c0_79 = arith.constant 0 : index
    %c0_80 = arith.constant 0 : index
    %85 = vector.load %arg4[%c3, %c0_78, %c0_79, %c0_80] : memref<7x3x256x256xf32, #tpu.memory_space<vmem>>, vector<1x1x256x256xf32>
    %86 = vector.shape_cast %85 : vector<1x1x256x256xf32> to vector<256x256xf32>
    %c3_81 = arith.constant 3 : index
    %c1_82 = arith.constant 1 : index
    %c0_83 = arith.constant 0 : index
    %c0_84 = arith.constant 0 : index
    %87 = vector.load %arg4[%c3_81, %c1_82, %c0_83, %c0_84] : memref<7x3x256x256xf32, #tpu.memory_space<vmem>>, vector<1x1x256x256xf32>
    %88 = vector.shape_cast %87 : vector<1x1x256x256xf32> to vector<256x256xf32>
    %c3_85 = arith.constant 3 : index
    %c2_86 = arith.constant 2 : index
    %c0_87 = arith.constant 0 : index
    %c0_88 = arith.constant 0 : index
    %89 = vector.load %arg4[%c3_85, %c2_86, %c0_87, %c0_88] : memref<7x3x256x256xf32, #tpu.memory_space<vmem>>, vector<1x1x256x256xf32>
    %90 = vector.shape_cast %89 : vector<1x1x256x256xf32> to vector<256x256xf32>
    %c3_89 = arith.constant 3 : index
    %c0_90 = arith.constant 0 : index
    %c0_91 = arith.constant 0 : index
    %91 = vector.load %arg5[%c3_89, %c0_90, %c0_91] : memref<7x1x256xf32, #tpu.memory_space<vmem>>, vector<1x1x256xf32>
    %92 = vector.shape_cast %91 : vector<1x1x256xf32> to vector<1x256xf32>
    %c1_i32_92 = arith.constant 1 : i32
    %93 = tpu.dynamic_rotate %84 by %c1_i32_92 dim 0 : vector<32x256xf32>, i32 -> vector<32x256xf32>
    %c31_i32_93 = arith.constant 31 : i32
    %94 = tpu.dynamic_rotate %84 by %c31_i32_93 dim 0 : vector<32x256xf32>, i32 -> vector<32x256xf32>
    %cst_94 = arith.constant dense<0.000000e+00> : vector<32x256xf32>
    %95 = tpu.matmul %93, %86, %cst_94 {dimension_numbers = #tpu.dot_dimension_numbers<[1], [0], [0], [1], [0, 0, 1, 1], [], []>} : vector<32x256xf32>, vector<256x256xf32>, vector<32x256xf32> -> vector<32x256xf32>
    %cst_95 = arith.constant dense<0.000000e+00> : vector<32x256xf32>
    %96 = tpu.matmul %84, %88, %cst_95 {dimension_numbers = #tpu.dot_dimension_numbers<[1], [0], [0], [1], [0, 0, 1, 1], [], []>} : vector<32x256xf32>, vector<256x256xf32>, vector<32x256xf32> -> vector<32x256xf32>
    %97 = arith.addf %95, %96 : vector<32x256xf32>
    %cst_96 = arith.constant dense<0.000000e+00> : vector<32x256xf32>
    %98 = tpu.matmul %94, %90, %cst_96 {dimension_numbers = #tpu.dot_dimension_numbers<[1], [0], [0], [1], [0, 0, 1, 1], [], []>} : vector<32x256xf32>, vector<256x256xf32>, vector<32x256xf32> -> vector<32x256xf32>
    %99 = arith.addf %97, %98 : vector<32x256xf32>
    %100 = vector.broadcast %92 : vector<1x256xf32> to vector<32x256xf32>
    %101 = arith.addf %99, %100 : vector<32x256xf32>
    %cst_97 = arith.constant 0.000000e+00 : f32
    %102 = vector.broadcast %cst_97 : f32 to vector<32x256xf32>
    %103 = arith.maximumf %101, %102 : vector<32x256xf32>
    %104 = vector.broadcast %0 : vector<32x1xf32> to vector<32x256xf32>
    %105 = arith.mulf %103, %104 : vector<32x256xf32>
    %c4 = arith.constant 4 : index
    %c0_98 = arith.constant 0 : index
    %c0_99 = arith.constant 0 : index
    %c0_100 = arith.constant 0 : index
    %106 = vector.load %arg4[%c4, %c0_98, %c0_99, %c0_100] : memref<7x3x256x256xf32, #tpu.memory_space<vmem>>, vector<1x1x256x256xf32>
    %107 = vector.shape_cast %106 : vector<1x1x256x256xf32> to vector<256x256xf32>
    %c4_101 = arith.constant 4 : index
    %c1_102 = arith.constant 1 : index
    %c0_103 = arith.constant 0 : index
    %c0_104 = arith.constant 0 : index
    %108 = vector.load %arg4[%c4_101, %c1_102, %c0_103, %c0_104] : memref<7x3x256x256xf32, #tpu.memory_space<vmem>>, vector<1x1x256x256xf32>
    %109 = vector.shape_cast %108 : vector<1x1x256x256xf32> to vector<256x256xf32>
    %c4_105 = arith.constant 4 : index
    %c2_106 = arith.constant 2 : index
    %c0_107 = arith.constant 0 : index
    %c0_108 = arith.constant 0 : index
    %110 = vector.load %arg4[%c4_105, %c2_106, %c0_107, %c0_108] : memref<7x3x256x256xf32, #tpu.memory_space<vmem>>, vector<1x1x256x256xf32>
    %111 = vector.shape_cast %110 : vector<1x1x256x256xf32> to vector<256x256xf32>
    %c4_109 = arith.constant 4 : index
    %c0_110 = arith.constant 0 : index
    %c0_111 = arith.constant 0 : index
    %112 = vector.load %arg5[%c4_109, %c0_110, %c0_111] : memref<7x1x256xf32, #tpu.memory_space<vmem>>, vector<1x1x256xf32>
    %113 = vector.shape_cast %112 : vector<1x1x256xf32> to vector<1x256xf32>
    %c1_i32_112 = arith.constant 1 : i32
    %114 = tpu.dynamic_rotate %105 by %c1_i32_112 dim 0 : vector<32x256xf32>, i32 -> vector<32x256xf32>
    %c31_i32_113 = arith.constant 31 : i32
    %115 = tpu.dynamic_rotate %105 by %c31_i32_113 dim 0 : vector<32x256xf32>, i32 -> vector<32x256xf32>
    %cst_114 = arith.constant dense<0.000000e+00> : vector<32x256xf32>
    %116 = tpu.matmul %114, %107, %cst_114 {dimension_numbers = #tpu.dot_dimension_numbers<[1], [0], [0], [1], [0, 0, 1, 1], [], []>} : vector<32x256xf32>, vector<256x256xf32>, vector<32x256xf32> -> vector<32x256xf32>
    %cst_115 = arith.constant dense<0.000000e+00> : vector<32x256xf32>
    %117 = tpu.matmul %105, %109, %cst_115 {dimension_numbers = #tpu.dot_dimension_numbers<[1], [0], [0], [1], [0, 0, 1, 1], [], []>} : vector<32x256xf32>, vector<256x256xf32>, vector<32x256xf32> -> vector<32x256xf32>
    %118 = arith.addf %116, %117 : vector<32x256xf32>
    %cst_116 = arith.constant dense<0.000000e+00> : vector<32x256xf32>
    %119 = tpu.matmul %115, %111, %cst_116 {dimension_numbers = #tpu.dot_dimension_numbers<[1], [0], [0], [1], [0, 0, 1, 1], [], []>} : vector<32x256xf32>, vector<256x256xf32>, vector<32x256xf32> -> vector<32x256xf32>
    %120 = arith.addf %118, %119 : vector<32x256xf32>
    %121 = vector.broadcast %113 : vector<1x256xf32> to vector<32x256xf32>
    %122 = arith.addf %120, %121 : vector<32x256xf32>
    %cst_117 = arith.constant 0.000000e+00 : f32
    %123 = vector.broadcast %cst_117 : f32 to vector<32x256xf32>
    %124 = arith.maximumf %122, %123 : vector<32x256xf32>
    %125 = vector.broadcast %0 : vector<32x1xf32> to vector<32x256xf32>
    %126 = arith.mulf %124, %125 : vector<32x256xf32>
    %c5 = arith.constant 5 : index
    %c0_118 = arith.constant 0 : index
    %c0_119 = arith.constant 0 : index
    %c0_120 = arith.constant 0 : index
    %127 = vector.load %arg4[%c5, %c0_118, %c0_119, %c0_120] : memref<7x3x256x256xf32, #tpu.memory_space<vmem>>, vector<1x1x256x256xf32>
    %128 = vector.shape_cast %127 : vector<1x1x256x256xf32> to vector<256x256xf32>
    %c5_121 = arith.constant 5 : index
    %c1_122 = arith.constant 1 : index
    %c0_123 = arith.constant 0 : index
    %c0_124 = arith.constant 0 : index
    %129 = vector.load %arg4[%c5_121, %c1_122, %c0_123, %c0_124] : memref<7x3x256x256xf32, #tpu.memory_space<vmem>>, vector<1x1x256x256xf32>
    %130 = vector.shape_cast %129 : vector<1x1x256x256xf32> to vector<256x256xf32>
    %c5_125 = arith.constant 5 : index
    %c2_126 = arith.constant 2 : index
    %c0_127 = arith.constant 0 : index
    %c0_128 = arith.constant 0 : index
    %131 = vector.load %arg4[%c5_125, %c2_126, %c0_127, %c0_128] : memref<7x3x256x256xf32, #tpu.memory_space<vmem>>, vector<1x1x256x256xf32>
    %132 = vector.shape_cast %131 : vector<1x1x256x256xf32> to vector<256x256xf32>
    %c5_129 = arith.constant 5 : index
    %c0_130 = arith.constant 0 : index
    %c0_131 = arith.constant 0 : index
    %133 = vector.load %arg5[%c5_129, %c0_130, %c0_131] : memref<7x1x256xf32, #tpu.memory_space<vmem>>, vector<1x1x256xf32>
    %134 = vector.shape_cast %133 : vector<1x1x256xf32> to vector<1x256xf32>
    %c1_i32_132 = arith.constant 1 : i32
    %135 = tpu.dynamic_rotate %126 by %c1_i32_132 dim 0 : vector<32x256xf32>, i32 -> vector<32x256xf32>
    %c31_i32_133 = arith.constant 31 : i32
    %136 = tpu.dynamic_rotate %126 by %c31_i32_133 dim 0 : vector<32x256xf32>, i32 -> vector<32x256xf32>
    %cst_134 = arith.constant dense<0.000000e+00> : vector<32x256xf32>
    %137 = tpu.matmul %135, %128, %cst_134 {dimension_numbers = #tpu.dot_dimension_numbers<[1], [0], [0], [1], [0, 0, 1, 1], [], []>} : vector<32x256xf32>, vector<256x256xf32>, vector<32x256xf32> -> vector<32x256xf32>
    %cst_135 = arith.constant dense<0.000000e+00> : vector<32x256xf32>
    %138 = tpu.matmul %126, %130, %cst_135 {dimension_numbers = #tpu.dot_dimension_numbers<[1], [0], [0], [1], [0, 0, 1, 1], [], []>} : vector<32x256xf32>, vector<256x256xf32>, vector<32x256xf32> -> vector<32x256xf32>
    %139 = arith.addf %137, %138 : vector<32x256xf32>
    %cst_136 = arith.constant dense<0.000000e+00> : vector<32x256xf32>
    %140 = tpu.matmul %136, %132, %cst_136 {dimension_numbers = #tpu.dot_dimension_numbers<[1], [0], [0], [1], [0, 0, 1, 1], [], []>} : vector<32x256xf32>, vector<256x256xf32>, vector<32x256xf32> -> vector<32x256xf32>
    %141 = arith.addf %139, %140 : vector<32x256xf32>
    %142 = vector.broadcast %134 : vector<1x256xf32> to vector<32x256xf32>
    %143 = arith.addf %141, %142 : vector<32x256xf32>
    %cst_137 = arith.constant 0.000000e+00 : f32
    %144 = vector.broadcast %cst_137 : f32 to vector<32x256xf32>
    %145 = arith.maximumf %143, %144 : vector<32x256xf32>
    %146 = vector.broadcast %0 : vector<32x1xf32> to vector<32x256xf32>
    %147 = arith.mulf %145, %146 : vector<32x256xf32>
    %c6 = arith.constant 6 : index
    %c0_138 = arith.constant 0 : index
    %c0_139 = arith.constant 0 : index
    %c0_140 = arith.constant 0 : index
    %148 = vector.load %arg4[%c6, %c0_138, %c0_139, %c0_140] : memref<7x3x256x256xf32, #tpu.memory_space<vmem>>, vector<1x1x256x256xf32>
    %149 = vector.shape_cast %148 : vector<1x1x256x256xf32> to vector<256x256xf32>
    %c6_141 = arith.constant 6 : index
    %c1_142 = arith.constant 1 : index
    %c0_143 = arith.constant 0 : index
    %c0_144 = arith.constant 0 : index
    %150 = vector.load %arg4[%c6_141, %c1_142, %c0_143, %c0_144] : memref<7x3x256x256xf32, #tpu.memory_space<vmem>>, vector<1x1x256x256xf32>
    %151 = vector.shape_cast %150 : vector<1x1x256x256xf32> to vector<256x256xf32>
    %c6_145 = arith.constant 6 : index
    %c2_146 = arith.constant 2 : index
    %c0_147 = arith.constant 0 : index
    %c0_148 = arith.constant 0 : index
    %152 = vector.load %arg4[%c6_145, %c2_146, %c0_147, %c0_148] : memref<7x3x256x256xf32, #tpu.memory_space<vmem>>, vector<1x1x256x256xf32>
    %153 = vector.shape_cast %152 : vector<1x1x256x256xf32> to vector<256x256xf32>
    %c6_149 = arith.constant 6 : index
    %c0_150 = arith.constant 0 : index
    %c0_151 = arith.constant 0 : index
    %154 = vector.load %arg5[%c6_149, %c0_150, %c0_151] : memref<7x1x256xf32, #tpu.memory_space<vmem>>, vector<1x1x256xf32>
    %155 = vector.shape_cast %154 : vector<1x1x256xf32> to vector<1x256xf32>
    %c1_i32_152 = arith.constant 1 : i32
    %156 = tpu.dynamic_rotate %147 by %c1_i32_152 dim 0 : vector<32x256xf32>, i32 -> vector<32x256xf32>
    %c31_i32_153 = arith.constant 31 : i32
    %157 = tpu.dynamic_rotate %147 by %c31_i32_153 dim 0 : vector<32x256xf32>, i32 -> vector<32x256xf32>
    %cst_154 = arith.constant dense<0.000000e+00> : vector<32x256xf32>
    %158 = tpu.matmul %156, %149, %cst_154 {dimension_numbers = #tpu.dot_dimension_numbers<[1], [0], [0], [1], [0, 0, 1, 1], [], []>} : vector<32x256xf32>, vector<256x256xf32>, vector<32x256xf32> -> vector<32x256xf32>
    %cst_155 = arith.constant dense<0.000000e+00> : vector<32x256xf32>
    %159 = tpu.matmul %147, %151, %cst_155 {dimension_numbers = #tpu.dot_dimension_numbers<[1], [0], [0], [1], [0, 0, 1, 1], [], []>} : vector<32x256xf32>, vector<256x256xf32>, vector<32x256xf32> -> vector<32x256xf32>
    %160 = arith.addf %158, %159 : vector<32x256xf32>
    %cst_156 = arith.constant dense<0.000000e+00> : vector<32x256xf32>
    %161 = tpu.matmul %157, %153, %cst_156 {dimension_numbers = #tpu.dot_dimension_numbers<[1], [0], [0], [1], [0, 0, 1, 1], [], []>} : vector<32x256xf32>, vector<256x256xf32>, vector<32x256xf32> -> vector<32x256xf32>
    %162 = arith.addf %160, %161 : vector<32x256xf32>
    %163 = vector.broadcast %155 : vector<1x256xf32> to vector<32x256xf32>
    %164 = arith.addf %162, %163 : vector<32x256xf32>
    %cst_157 = arith.constant 0.000000e+00 : f32
    %165 = vector.broadcast %cst_157 : f32 to vector<32x256xf32>
    %166 = arith.maximumf %164, %165 : vector<32x256xf32>
    %167 = vector.broadcast %0 : vector<32x1xf32> to vector<32x256xf32>
    %168 = arith.mulf %166, %167 : vector<32x256xf32>
    %169 = vector.shape_cast %168 : vector<32x256xf32> to vector<2x16x256xf32>
    %cst_158 = arith.constant dense<0.000000e+00> : vector<2x256xf32>
    %170 = vector.multi_reduction <add>, %169, %cst_158 [1] : vector<2x16x256xf32> to vector<2x256xf32>
    %cst_159 = arith.constant 0.0666666701 : f32
    %171 = vector.broadcast %cst_159 : f32 to vector<2x256xf32>
    %172 = arith.mulf %170, %171 : vector<2x256xf32>
    %c0_160 = arith.constant 0 : index
    %c0_161 = arith.constant 0 : index
    %173 = vector.load %arg6[%c0_160, %c0_161] : memref<256x128xf32, #tpu.memory_space<vmem>>, vector<256x128xf32>
    %cst_162 = arith.constant dense<0.000000e+00> : vector<2x128xf32>
    %174 = tpu.matmul %172, %173, %cst_162 {dimension_numbers = #tpu.dot_dimension_numbers<[1], [0], [0], [1], [0, 0, 1, 1], [], []>} : vector<2x256xf32>, vector<256x128xf32>, vector<2x128xf32> -> vector<2x128xf32>
    %c0_163 = arith.constant 0 : index
    %c0_164 = arith.constant 0 : index
    %175 = vector.load %arg7[%c0_163, %c0_164] : memref<1x128xf32, #tpu.memory_space<vmem>>, vector<1x128xf32>
    %176 = vector.broadcast %175 : vector<1x128xf32> to vector<2x128xf32>
    %177 = arith.addf %174, %176 : vector<2x128xf32>
    %cst_165 = arith.constant 0.000000e+00 : f32
    %178 = vector.broadcast %cst_165 : f32 to vector<2x128xf32>
    %179 = arith.maximumf %177, %178 : vector<2x128xf32>
    %c0_166 = arith.constant 0 : index
    %c0_167 = arith.constant 0 : index
    %180 = vector.load %arg8[%c0_166, %c0_167] : memref<128x128xf32, #tpu.memory_space<vmem>>, vector<128x128xf32>
    %cst_168 = arith.constant dense<0.000000e+00> : vector<2x128xf32>
    %181 = tpu.matmul %179, %180, %cst_168 {dimension_numbers = #tpu.dot_dimension_numbers<[1], [0], [0], [1], [0, 0, 1, 1], [], []>} : vector<2x128xf32>, vector<128x128xf32>, vector<2x128xf32> -> vector<2x128xf32>
    %c0_169 = arith.constant 0 : index
    %c0_170 = arith.constant 0 : index
    %182 = vector.load %arg9[%c0_169, %c0_170] : memref<1x128xf32, #tpu.memory_space<vmem>>, vector<1x128xf32>
    %183 = vector.broadcast %182 : vector<1x128xf32> to vector<2x128xf32>
    %184 = arith.addf %181, %183 : vector<2x128xf32>
    %c0_171 = arith.constant 0 : index
    %c0_172 = arith.constant 0 : index
    %185 = vector.load %arg10[%c0_171, %c0_172] : memref<2x128xf32, #tpu.memory_space<vmem>>, vector<2x128xf32>
    tpu.vector_store %arg10[%c0_171, %c0_172], %184 {strides = array<i32>} : memref<2x128xf32, #tpu.memory_space<vmem>>, vector<2x128xf32>,
    return
  }
}

</mosaic_0001>

<llo_original>
// kernel: _forward.1
$region0: #{_forward.1}
  #allocation0 [shape = 'u32[]', space=smem, size = 0x4, offset = 0x4, fixed_abs, tag = 'smem constant byte address 0x4 - core index']
  #allocation1 [shape = 'u32[72,128]{1,0:T(1,128)}', space=vmem, size = 0x9000, scoped, tag = 'internal scratch']
  %s0 = inlined_call_operand.vmem [shape: f32[32,42], index: 0, kind: input, shape index: {}]
  %s1 = inlined_call_operand.vmem [shape: f32[32,1], index: 1, kind: input, shape index: {}]
  %s2 = inlined_call_operand.hbm [shape: f32[3,42,256], index: 2, kind: input, shape index: {}]
  %s3 = inlined_call_operand.hbm [shape: f32[1,256], index: 3, kind: input, shape index: {}]
  %s4 = inlined_call_operand.hbm [shape: f32[7,3,256,256], index: 4, kind: input, shape index: {}]
  %s5 = inlined_call_operand.hbm [shape: f32[7,1,256], index: 5, kind: input, shape index: {}]
  %s6 = inlined_call_operand.hbm [shape: f32[256,128], index: 6, kind: input, shape index: {}]
  %s7 = inlined_call_operand.hbm [shape: f32[1,128], index: 7, kind: input, shape index: {}]
  %s8 = inlined_call_operand.hbm [shape: f32[128,128], index: 8, kind: input, shape index: {}]
  %s9 = inlined_call_operand.hbm [shape: f32[1,128], index: 9, kind: input, shape index: {}]
  %s10 = inlined_call_operand.hbm [shape: f32[2,128], index: 10, kind: output, shape index: {}]
  %s11 = sld [smem:[#allocation0]]
  $region82: #{_forward.1} parent=0
    _
  %s13 = ssub.s32 1, %s11
  %s14 = scalar_select 0, %s13, %s11
  $region1: #{_forward.1} parent=0
    #allocation2 [shape = 'u8[147456]{0}', space=vmem, size = 0x24000, scoped, tag = 'input window, operand 2, single buffered']
    #allocation3 [shape = 's32[1]{0}', space=sflag, size = 0x4, scoped, tag = 'scoped memory for _forward.1']
    #allocation4 [shape = 's32[1]{0}', space=sflag, size = 0x4, scoped, tag = 'scoped memory for _forward.1']
    #allocation5 [shape = 'u8[1024]{0}', space=vmem, size = 0x400, scoped, tag = 'input window, operand 3, single buffered']
    #allocation6 [shape = 's32[1]{0}', space=sflag, size = 0x4, scoped, tag = 'scoped memory for _forward.1']
    #allocation7 [shape = 'u8[5505024]{0}', space=vmem, size = 0x540000, scoped, tag = 'input window, operand 4, single buffered']
    #allocation8 [shape = 'u8[7168]{0}', space=vmem, size = 0x1c00, scoped, tag = 'input window, operand 5, single buffered']
    #allocation9 [shape = 's32[1]{0}', space=sflag, size = 0x4, scoped, tag = 'scoped memory for _forward.1']
    #allocation10 [shape = 'u8[131072]{0}', space=vmem, size = 0x20000, scoped, tag = 'input window, operand 6, single buffered']
    #allocation11 [shape = 'u8[512]{0}', space=vmem, size = 0x400, scoped, tag = 'input window, operand 7, single buffered']
    #allocation12 [shape = 's32[1]{0}', space=sflag, size = 0x4, scoped, tag = 'scoped memory for _forward.1']
    #allocation13 [shape = 'u8[65536]{0}', space=vmem, size = 0x10000, scoped, tag = 'input window, operand 8, single buffered']
    #allocation14 [shape = 'u8[512]{0}', space=vmem, size = 0x400, scoped, tag = 'input window, operand 9, single buffered']
    #allocation15 [shape = 's32[1]{0}', space=sflag, size = 0x4, scoped, tag = 'scoped memory for _forward.1']
    #allocation16 [shape = 'u8[1024]{0}', space=vmem, size = 0x400, scoped, tag = 'output window, operand 0, single buffered']
    %15 = vsyncpa [#allocation3], 0
    %16 = vsyncpa [#allocation6], 0
    %17 = vsyncpa [#allocation9], 0
    %18 = vsyncpa [#allocation12], 0
    %19 = vsyncpa [#allocation15], 0
    %20 = vsyncpa [#allocation4], 0
    // Predicated region
    $region2: #{_forward.1} parent=1 // pred_check
      _
    $region3: #{_forward.1} parent=1 // pred_check_branch
      %22 = sbr.rel (0) target = $region5
    $region4: #{_forward.1} parent=1 // pred_region
      _
    $region5: #{_forward.1} parent=1 // pred_fallthru
      _
    // Predicated region
    $region6: #{_forward.1} parent=1 // pred_check
      _
    $region7: #{_forward.1} parent=1 // pred_check_branch
      %24 = sbr.rel (0) target = $region9
    $region8: #{_forward.1} parent=1 // pred_region
      _
    $region9: #{_forward.1} parent=1 // pred_fallthru
      _
    // Predicated region
    $region10: #{_forward.1} parent=1 // pred_check
      _
    $region11: #{_forward.1} parent=1 // pred_check_branch
      %26 = sbr.rel (0) target = $region13
    $region12: #{_forward.1} parent=1 // pred_region
      %28 = vsyncadd [#allocation3], 0
      %s29 = sshll.u32 %s2, 4
      %s30 = int_to_ptr.hbm [resolvable:$true] %s29
      %s31 = sshll.u32 [#allocation2], 4
      %s32 = int_to_ptr.vmem [resolvable:$true] %s31
      %37 = dma.hbm_to_vmem [thread:$0]  %s30, 4608, %s32, [#allocation3], 256, 256, 16
    $region13: #{_forward.1} parent=1 // pred_fallthru
      _
    // Predicated region
    $region14: #{_forward.1} parent=1 // pred_check
      _
    $region15: #{_forward.1} parent=1 // pred_check_branch
      %39 = sbr.rel (0) target = $region17
    $region16: #{_forward.1} parent=1 // pred_region
      %41 = vsyncadd [#allocation6], 0
      %s43 = sshll.u32 %s3, 4
      %s44 = int_to_ptr.hbm [resolvable:$true] %s43
      %s45 = sshll.u32 [#allocation5], 4
      %s46 = int_to_ptr.vmem [resolvable:$true] %s45
      %48 = dma.hbm_to_vmem [thread:$0]  %s44, 32, %s46, [#allocation6]
    $region17: #{_forward.1} parent=1 // pred_fallthru
      _
    // Predicated region
    $region18: #{_forward.1} parent=1 // pred_check
      _
    $region19: #{_forward.1} parent=1 // pred_check_branch
      %50 = sbr.rel (0) target = $region21
    $region20: #{_forward.1} parent=1 // pred_region
      %52 = vsyncadd [#allocation6], 0
      %s53 = sshll.u32 %s4, 4
      %s54 = int_to_ptr.hbm [resolvable:$true] %s53
      %s55 = sshll.u32 [#allocation7], 4
      %s56 = int_to_ptr.vmem [resolvable:$true] %s55
      %61 = dma.hbm_to_vmem [thread:$0]  %s54, 172032, %s56, [#allocation6], 256, 256, 16
    $region21: #{_forward.1} parent=1 // pred_fallthru
      _
    // Predicated region
    $region22: #{_forward.1} parent=1 // pred_check
      _
    $region23: #{_forward.1} parent=1 // pred_check_branch
      %63 = sbr.rel (0) target = $region25
    $region24: #{_forward.1} parent=1 // pred_region
      %65 = vsyncadd [#allocation9], 0
      %s66 = sshll.u32 %s5, 4
      %s67 = int_to_ptr.hbm [resolvable:$true] %s66
      %s68 = sshll.u32 [#allocation8], 4
      %s69 = int_to_ptr.vmem [resolvable:$true] %s68
      %74 = dma.hbm_to_vmem [thread:$0]  %s67, 224, %s69, [#allocation9], 32, 32, 2
    $region25: #{_forward.1} parent=1 // pred_fallthru
      _
    // Predicated region
    $region26: #{_forward.1} parent=1 // pred_check
      _
    $region27: #{_forward.1} parent=1 // pred_check_branch
      %76 = sbr.rel (0) target = $region29
    $region28: #{_forward.1} parent=1 // pred_region
      %78 = vsyncadd [#allocation9], 0
      %s79 = sshll.u32 %s6, 4
      %s80 = int_to_ptr.hbm [resolvable:$true] %s79
      %s81 = sshll.u32 [#allocation10], 4
      %s82 = int_to_ptr.vmem [resolvable:$true] %s81
      %87 = dma.hbm_to_vmem [thread:$0]  %s80, 4096, %s82, [#allocation9], 128, 128, 8
    $region29: #{_forward.1} parent=1 // pred_fallthru
      _
    // Predicated region
    $region30: #{_forward.1} parent=1 // pred_check
      _
    $region31: #{_forward.1} parent=1 // pred_check_branch
      %89 = sbr.rel (0) target = $region33
    $region32: #{_forward.1} parent=1 // pred_region
      %91 = vsyncadd [#allocation12], 0
      %s93 = sshll.u32 %s7, 4
      %s94 = int_to_ptr.hbm [resolvable:$true] %s93
      %s95 = sshll.u32 [#allocation11], 4
      %s96 = int_to_ptr.vmem [resolvable:$true] %s95
      %98 = dma.hbm_to_vmem [thread:$0]  %s94, 16, %s96, [#allocation12]
    $region33: #{_forward.1} parent=1 // pred_fallthru
      _
    // Predicated region
    $region34: #{_forward.1} parent=1 // pred_check
      _
    $region35: #{_forward.1} parent=1 // pred_check_branch
      %100 = sbr.rel (0) target = $region37
    $region36: #{_forward.1} parent=1 // pred_region
      %102 = vsyncadd [#allocation12], 0
      %s103 = sshll.u32 %s8, 4
      %s104 = int_to_ptr.hbm [resolvable:$true] %s103
      %s105 = sshll.u32 [#allocation13], 4
      %s106 = int_to_ptr.vmem [resolvable:$true] %s105
      %111 = dma.hbm_to_vmem [thread:$0]  %s104, 2048, %s106, [#allocation12], 128, 128, 8
    $region37: #{_forward.1} parent=1 // pred_fallthru
      _
    // Predicated region
    $region38: #{_forward.1} parent=1 // pred_check
      _
    $region39: #{_forward.1} parent=1 // pred_check_branch
      %113 = sbr.rel (0) target = $region41
    $region40: #{_forward.1} parent=1 // pred_region
      %115 = vsyncadd [#allocation15], 0
      %s117 = sshll.u32 %s9, 4
      %s118 = int_to_ptr.hbm [resolvable:$true] %s117
      %s119 = sshll.u32 [#allocation14], 4
      %s120 = int_to_ptr.vmem [resolvable:$true] %s119
      %122 = dma.hbm_to_vmem [thread:$0]  %s118, 16, %s120, [#allocation15]
    $region41: #{_forward.1} parent=1 // pred_fallthru
      _
    // Predicated region
    $region42: #{_forward.1} parent=1 // pred_check
      _
    $region43: #{_forward.1} parent=1 // pred_check_branch
      %124 = sbr.rel (0) target = $region45
    $region44: #{_forward.1} parent=1 // pred_region
      %126 = dma.done [#allocation3], 4608
    $region45: #{_forward.1} parent=1 // pred_fallthru
      _
    // Predicated region
    $region46: #{_forward.1} parent=1 // pred_check
      _
    $region47: #{_forward.1} parent=1 // pred_check_branch
      %128 = sbr.rel (0) target = $region49
    $region48: #{_forward.1} parent=1 // pred_region
      %130 = dma.done [#allocation6], 32
    $region49: #{_forward.1} parent=1 // pred_fallthru
      _
    // Predicated region
    $region50: #{_forward.1} parent=1 // pred_check
      _
    $region51: #{_forward.1} parent=1 // pred_check_branch
      %132 = sbr.rel (0) target = $region53
    $region52: #{_forward.1} parent=1 // pred_region
      %134 = dma.done [#allocation6], 172032
    $region53: #{_forward.1} parent=1 // pred_fallthru
      _
    // Predicated region
    $region54: #{_forward.1} parent=1 // pred_check
      _
    $region55: #{_forward.1} parent=1 // pred_check_branch
      %136 = sbr.rel (0) target = $region57
    $region56: #{_forward.1} parent=1 // pred_region
      %138 = dma.done [#allocation9], 224
    $region57: #{_forward.1} parent=1 // pred_fallthru
      _
    // Predicated region
    $region58: #{_forward.1} parent=1 // pred_check
      _
    $region59: #{_forward.1} parent=1 // pred_check_branch
      %140 = sbr.rel (0) target = $region61
    $region60: #{_forward.1} parent=1 // pred_region
      %142 = dma.done [#allocation9], 4096
    $region61: #{_forward.1} parent=1 // pred_fallthru
      _
    // Predicated region
    $region62: #{_forward.1} parent=1 // pred_check
      _
    $region63: #{_forward.1} parent=1 // pred_check_branch
      %144 = sbr.rel (0) target = $region65
    $region64: #{_forward.1} parent=1 // pred_region
      %146 = dma.done [#allocation12], 16
    $region65: #{_forward.1} parent=1 // pred_fallthru
      _
    // Predicated region
    $region66: #{_forward.1} parent=1 // pred_check
      _
    $region67: #{_forward.1} parent=1 // pred_check_branch
      %148 = sbr.rel (0) target = $region69
    $region68: #{_forward.1} parent=1 // pred_region
      %150 = dma.done [#allocation12], 2048
    $region69: #{_forward.1} parent=1 // pred_fallthru
      _
    // Predicated region
    $region70: #{_forward.1} parent=1 // pred_check
      _
    $region71: #{_forward.1} parent=1 // pred_check_branch
      %152 = sbr.rel (0) target = $region73
    $region72: #{_forward.1} parent=1 // pred_region
      %154 = dma.done [#allocation15], 16
    $region73: #{_forward.1} parent=1 // pred_fallthru
      _
    %v155 = vld [vmem:[%s1] sm:$0xff]
    %v156 = vld [vmem:[%s1 + $0x8] sm:$0xff]
    %v157 = vld [vmem:[%s1 + $0x10] sm:$0xff]
    %v158 = vld [vmem:[%s1 + $0x18] sm:$0xff]
    %v159 = vld [vmem:[%s0] sm:$0xff]
    %v160 = vld [vmem:[%s0 + $0x8] sm:$0xff]
    %v161 = vld [vmem:[%s0 + $0x10] sm:$0xff]
    %v162 = vld [vmem:[%s0 + $0x18] sm:$0xff]
    %v163 = vld [vmem:[#allocation2] sm:$0xff]
    %v164 = vld [vmem:[#allocation2 + $0x8] sm:$0xff]
    %v165 = vld [vmem:[#allocation2 + $0x10] sm:$0xff]
    %v166 = vld [vmem:[#allocation2 + $0x18] sm:$0xff]
    %v167 = vld [vmem:[#allocation2 + $0x20] sm:$0xff]
    %v168 = vld [vmem:[#allocation2 + $0x28] sm:$0xff]
    %v169 = vld [vmem:[#allocation2 + $0x30] sm:$0xff]
    %v170 = vld [vmem:[#allocation2 + $0x38] sm:$0xff]
    %v171 = vld [vmem:[#allocation2 + $0x40] sm:$0xff]
    %v172 = vld [vmem:[#allocation2 + $0x48] sm:$0xff]
    %v173 = vld [vmem:[#allocation2 + $0x50] sm:$0x3]
    %v174 = vld [vmem:[#allocation2 + $0x58] sm:$0x3]
    %s175 = scalar_lea.vmem [#allocation2], 96
    %v176 = vld [vmem:[%s175] sm:$0xff]
    %v177 = vld [vmem:[%s175 + $0x8] sm:$0xff]
    %v178 = vld [vmem:[%s175 + $0x10] sm:$0xff]
    %v179 = vld [vmem:[%s175 + $0x18] sm:$0xff]
    %v180 = vld [vmem:[%s175 + $0x20] sm:$0xff]
    %v181 = vld [vmem:[%s175 + $0x28] sm:$0xff]
    %v182 = vld [vmem:[%s175 + $0x30] sm:$0xff]
    %v183 = vld [vmem:[%s175 + $0x38] sm:$0xff]
    %v184 = vld [vmem:[%s175 + $0x40] sm:$0xff]
    %v185 = vld [vmem:[%s175 + $0x48] sm:$0xff]
    %v186 = vld [vmem:[%s175 + $0x50] sm:$0x3]
    %v187 = vld [vmem:[%s175 + $0x58] sm:$0x3]
    %s188 = scalar_lea.vmem [#allocation2], 192
    %v189 = vld [vmem:[%s188] sm:$0xff]
    %v190 = vld [vmem:[%s188 + $0x8] sm:$0xff]
    %v191 = vld [vmem:[%s188 + $0x10] sm:$0xff]
    %v192 = vld [vmem:[%s188 + $0x18] sm:$0xff]
    %v193 = vld [vmem:[%s188 + $0x20] sm:$0xff]
    %v194 = vld [vmem:[%s188 + $0x28] sm:$0xff]
    %v195 = vld [vmem:[%s188 + $0x30] sm:$0xff]
    %v196 = vld [vmem:[%s188 + $0x38] sm:$0xff]
    %v197 = vld [vmem:[%s188 + $0x40] sm:$0xff]
    %v198 = vld [vmem:[%s188 + $0x48] sm:$0xff]
    %v199 = vld [vmem:[%s188 + $0x50] sm:$0x3]
    %v200 = vld [vmem:[%s188 + $0x58] sm:$0x3]
    %v201 = vld [vmem:[#allocation5] sm:$0x3]
    %v202 = vrot.slane %v159, 7
    %v203 = vrot.slane %v160, 7
    %v204 = vrot.slane %v161, 7
    %v205 = vrot.slane %v162, 7
    %v206 = vlaneseq
    %v207 = vshrl.u32 %v206, 7
    %vm208 = vcmp.lt.s32.totalorder %v207, 1
    %v209 = vsel %vm208, %v204, %v205
    %v210 = vsel %vm208, %v203, %v204
    %v211 = vsel %vm208, %v202, %v203
    %v212 = vsel %vm208, %v205, %v202
    %v213 = vrot.slane %v159, 1
    %v214 = vrot.slane %v160, 1
    %v215 = vrot.slane %v161, 1
    %v216 = vrot.slane %v162, 1
    %vm217 = vcmp.lt.s32.totalorder %v207, 7
    %v218 = vsel %vm217, %v215, %v216
    %v219 = vsel %vm217, %v214, %v215
    %v220 = vsel %vm217, %v213, %v214
    %v221 = vsel %vm217, %v216, %v213
    %vm222 = vcmask 343040
    %v224 = vsel %vm222, %v159, 0
    %v227 = vsel %vm222, %v160, 0
    %v230 = vsel %vm222, %v161, 0
    %v233 = vsel %vm222, %v162, 0
    %vm235 = vcmask 1041408
    %v237 = vsel %vm235, %v186, 0
    %v240 = vsel %vm235, %v187, 0
    %242 = vmatpush.msra.mxu0 0.0
    %243 = vmatpush.msra.mxu0 0.0
    %244 = vmatpush.msra.mxu0 0.0
    %245 = vmatpush.msra.mxu0 0.0
    %246 = vmatpush.msra.mxu0 0.0
    %247 = vmatpush.msra.mxu0 0.0
    %248 = vmatpush.msra.mxu0 0.0
    %249 = vmatpush.msra.mxu0 0.0
    %250 = vmatpush.msra.mxu0 0.0
    %251 = vmatpush.msra.mxu0 0.0
    %252 = vmatpush.msra.mxu0 %v237
    %253 = vmatpush.msra.mxu0 %v184
    %254 = vmatpush.msra.mxu0 %v182
    %255 = vmatpush.msra.mxu0 %v180
    %256 = vmatpush.msra.mxu0 %v178
    %257 = vmatpush.msra.mxu0 %v176
    %258 = vmatmul.f32.gmra.mxu0 %v224
    %v259 = vpop.f32.mrf.mxu0
    %v260 = vadd.f32 0.0, %v259
    %261 = vmatmul.f32.gmra.mxu0 %v227
    %v262 = vpop.f32.mrf.mxu0
    %v263 = vadd.f32 0.0, %v262
    %264 = vmatmul.f32.gmra.mxu0 %v230
    %v265 = vpop.f32.mrf.mxu0
    %v266 = vadd.f32 0.0, %v265
    %267 = vmatmul.f32.gmra.mxu0 %v233
    %v268 = vpop.f32.mrf.mxu0
    %v269 = vadd.f32 0.0, %v268
    %270 = vdwg.mxu0
    %271 = vmatpush.msra.mxu0 0.0
    %272 = vmatpush.msra.mxu0 0.0
    %273 = vmatpush.msra.mxu0 0.0
    %274 = vmatpush.msra.mxu0 0.0
    %275 = vmatpush.msra.mxu0 0.0
    %276 = vmatpush.msra.mxu0 0.0
    %277 = vmatpush.msra.mxu0 0.0
    %278 = vmatpush.msra.mxu0 0.0
    %279 = vmatpush.msra.mxu0 0.0
    %280 = vmatpush.msra.mxu0 0.0
    %281 = vmatpush.msra.mxu0 %v240
    %282 = vmatpush.msra.mxu0 %v185
    %283 = vmatpush.msra.mxu0 %v183
    %284 = vmatpush.msra.mxu0 %v181
    %285 = vmatpush.msra.mxu0 %v179
    %286 = vmatpush.msra.mxu0 %v177
    %287 = vmatmul.f32.gmra.mxu0 %v224
    %v288 = vpop.f32.mrf.mxu0
    %v289 = vadd.f32 0.0, %v288
    %290 = vmatmul.f32.gmra.mxu0 %v227
    %v291 = vpop.f32.mrf.mxu0
    %v292 = vadd.f32 0.0, %v291
    %293 = vmatmul.f32.gmra.mxu0 %v230
    %v294 = vpop.f32.mrf.mxu0
    %v295 = vadd.f32 0.0, %v294
    %296 = vmatmul.f32.gmra.mxu0 %v233
    %v297 = vpop.f32.mrf.mxu0
    %v298 = vadd.f32 0.0, %v297
    %299 = vdwg.mxu0
    %v301 = vsel %vm222, %v212, 0
    %v304 = vsel %vm222, %v211, 0
    %v307 = vsel %vm222, %v210, 0
    %v310 = vsel %vm222, %v209, 0
    %v313 = vsel %vm235, %v173, 0
    %v316 = vsel %vm235, %v174, 0
    %318 = vmatpush.msra.mxu0 0.0
    %319 = vmatpush.msra.mxu0 0.0
    %320 = vmatpush.msra.mxu0 0.0
    %321 = vmatpush.msra.mxu0 0.0
    %322 = vmatpush.msra.mxu0 0.0
    %323 = vmatpush.msra.mxu0 0.0
    %324 = vmatpush.msra.mxu0 0.0
    %325 = vmatpush.msra.mxu0 0.0
    %326 = vmatpush.msra.mxu0 0.0
    %327 = vmatpush.msra.mxu0 0.0
    %328 = vmatpush.msra.mxu0 %v313
    %329 = vmatpush.msra.mxu0 %v171
    %330 = vmatpush.msra.mxu0 %v169
    %331 = vmatpush.msra.mxu0 %v167
    %332 = vmatpush.msra.mxu0 %v165
    %333 = vmatpush.msra.mxu0 %v163
    %334 = vmatmul.f32.gmra.mxu0 %v301
    %v335 = vpop.f32.mrf.mxu0
    %v336 = vadd.f32 %v260, %v335
    %337 = vmatmul.f32.gmra.mxu0 %v304
    %v338 = vpop.f32.mrf.mxu0
    %v339 = vadd.f32 %v263, %v338
    %340 = vmatmul.f32.gmra.mxu0 %v307
    %v341 = vpop.f32.mrf.mxu0
    %v342 = vadd.f32 %v266, %v341
    %343 = vmatmul.f32.gmra.mxu0 %v310
    %v344 = vpop.f32.mrf.mxu0
    %v345 = vadd.f32 %v269, %v344
    %346 = vdwg.mxu0
    %347 = vmatpush.msra.mxu0 0.0
    %348 = vmatpush.msra.mxu0 0.0
    %349 = vmatpush.msra.mxu0 0.0
    %350 = vmatpush.msra.mxu0 0.0
    %351 = vmatpush.msra.mxu0 0.0
    %352 = vmatpush.msra.mxu0 0.0
    %353 = vmatpush.msra.mxu0 0.0
    %354 = vmatpush.msra.mxu0 0.0
    %355 = vmatpush.msra.mxu0 0.0
    %356 = vmatpush.msra.mxu0 0.0
    %357 = vmatpush.msra.mxu0 %v316
    %358 = vmatpush.msra.mxu0 %v172
    %359 = vmatpush.msra.mxu0 %v170
    %360 = vmatpush.msra.mxu0 %v168
    %361 = vmatpush.msra.mxu0 %v166
    %362 = vmatpush.msra.mxu0 %v164
    %363 = vmatmul.f32.gmra.mxu0 %v301
    %v364 = vpop.f32.mrf.mxu0
    %v365 = vadd.f32 %v289, %v364
    %366 = vmatmul.f32.gmra.mxu0 %v304
    %v367 = vpop.f32.mrf.mxu0
    %v368 = vadd.f32 %v292, %v367
    %369 = vmatmul.f32.gmra.mxu0 %v307
    %v370 = vpop.f32.mrf.mxu0
    %v371 = vadd.f32 %v295, %v370
    %372 = vmatmul.f32.gmra.mxu0 %v310
    %v373 = vpop.f32.mrf.mxu0
    %v374 = vadd.f32 %v298, %v373
    %375 = vdwg.mxu0
    %v377 = vsel %vm222, %v220, 0
    %v380 = vsel %vm222, %v219, 0
    %v383 = vsel %vm222, %v218, 0
    %v386 = vsel %vm222, %v221, 0
    %v389 = vsel %vm235, %v199, 0
    %v392 = vsel %vm235, %v200, 0
    %394 = vmatpush.msra.mxu0 0.0
    %395 = vmatpush.msra.mxu0 0.0
    %396 = vmatpush.msra.mxu0 0.0
    %397 = vmatpush.msra.mxu0 0.0
    %398 = vmatpush.msra.mxu0 0.0
    %399 = vmatpush.msra.mxu0 0.0
    %400 = vmatpush.msra.mxu0 0.0
    %401 = vmatpush.msra.mxu0 0.0
    %402 = vmatpush.msra.mxu0 0.0
    %403 = vmatpush.msra.mxu0 0.0
    %404 = vmatpush.msra.mxu0 %v389
    %405 = vmatpush.msra.mxu0 %v197
    %406 = vmatpush.msra.mxu0 %v195
    %407 = vmatpush.msra.mxu0 %v193
    %408 = vmatpush.msra.mxu0 %v191
    %409 = vmatpush.msra.mxu0 %v189
    %410 = vmatmul.f32.gmra.mxu0 %v377
    %v411 = vpop.f32.mrf.mxu0
    %v412 = vadd.f32 0.0, %v411
    %413 = vmatmul.f32.gmra.mxu0 %v380
    %v414 = vpop.f32.mrf.mxu0
    %v415 = vadd.f32 0.0, %v414
    %416 = vmatmul.f32.gmra.mxu0 %v383
    %v417 = vpop.f32.mrf.mxu0
    %v418 = vadd.f32 0.0, %v417
    %419 = vmatmul.f32.gmra.mxu0 %v386
    %v420 = vpop.f32.mrf.mxu0
    %v421 = vadd.f32 0.0, %v420
    %422 = vdwg.mxu0
    %423 = vmatpush.msra.mxu0 0.0
    %424 = vmatpush.msra.mxu0 0.0
    %425 = vmatpush.msra.mxu0 0.0
    %426 = vmatpush.msra.mxu0 0.0
    %427 = vmatpush.msra.mxu0 0.0
    %428 = vmatpush.msra.mxu0 0.0
    %429 = vmatpush.msra.mxu0 0.0
    %430 = vmatpush.msra.mxu0 0.0
    %431 = vmatpush.msra.mxu0 0.0
    %432 = vmatpush.msra.mxu0 0.0
    %433 = vmatpush.msra.mxu0 %v392
    %434 = vmatpush.msra.mxu0 %v198
    %435 = vmatpush.msra.mxu0 %v196
    %436 = vmatpush.msra.mxu0 %v194
    %437 = vmatpush.msra.mxu0 %v192
    %438 = vmatpush.msra.mxu0 %v190
    %439 = vmatmul.f32.gmra.mxu0 %v377
    %v440 = vpop.f32.mrf.mxu0
    %v441 = vadd.f32 0.0, %v440
    %442 = vmatmul.f32.gmra.mxu0 %v380
    %v443 = vpop.f32.mrf.mxu0
    %v444 = vadd.f32 0.0, %v443
    %445 = vmatmul.f32.gmra.mxu0 %v383
    %v446 = vpop.f32.mrf.mxu0
    %v447 = vadd.f32 0.0, %v446
    %448 = vmatmul.f32.gmra.mxu0 %v386
    %v449 = vpop.f32.mrf.mxu0
    %v450 = vadd.f32 0.0, %v449
    %451 = vdwg.mxu0
    %v452 = vadd.f32 %v336, %v412
    %v453 = vadd.f32 %v365, %v441
    %v454 = vadd.f32 %v339, %v415
    %v455 = vadd.f32 %v368, %v444
    %v456 = vadd.f32 %v342, %v418
    %v457 = vadd.f32 %v371, %v447
    %v458 = vadd.f32 %v345, %v421
    %v459 = vadd.f32 %v374, %v450
    %v461 = vperm.slane %v201, 0
    %v462 = vperm.slane %v201, 1
    %v465 = vadd.f32 %v452, %v461
    %v466 = vadd.f32 %v453, %v462
    %v467 = vadd.f32 %v454, %v461
    %v468 = vadd.f32 %v455, %v462
    %v469 = vadd.f32 %v456, %v461
    %v470 = vadd.f32 %v457, %v462
    %v471 = vadd.f32 %v458, %v461
    %v472 = vadd.f32 %v459, %v462
    %v473 = vmax.f32 %v465, 0.0
    %v474 = vmax.f32 %v466, 0.0
    %v475 = vmax.f32 %v467, 0.0
    %v476 = vmax.f32 %v468, 0.0
    %v477 = vmax.f32 %v469, 0.0
    %v478 = vmax.f32 %v470, 0.0
    %v479 = vmax.f32 %v471, 0.0
    %v480 = vmax.f32 %v472, 0.0
    %482 = vset.pattern.permute.xlu0 0
    %483 = vperm.xlu0 %482, %v155
    %v484 = vpop.permute.xlu0 %483
    %487 = vset.pattern.permute.xlu0 0
    %488 = vperm.xlu0 %487, %v156
    %v489 = vpop.permute.xlu0 %488
    %492 = vset.pattern.permute.xlu0 0
    %493 = vperm.xlu0 %492, %v157
    %v494 = vpop.permute.xlu0 %493
    %497 = vset.pattern.permute.xlu0 0
    %498 = vperm.xlu0 %497, %v158
    %v499 = vpop.permute.xlu0 %498
    %v501 = vmul.f32 %v473, %v484
    %v502 = vmul.f32 %v474, %v484
    %v503 = vmul.f32 %v475, %v489
    %v504 = vmul.f32 %v476, %v489
    %v505 = vmul.f32 %v477, %v494
    %v506 = vmul.f32 %v478, %v494
    %v507 = vmul.f32 %v479, %v499
    %v508 = vmul.f32 %v480, %v499
    %v509 = vld [vmem:[#allocation7] sm:$0xff]
    %v510 = vld [vmem:[#allocation7 + $0x8] sm:$0xff]
    %v511 = vld [vmem:[#allocation7 + $0x10] sm:$0xff]
    %v512 = vld [vmem:[#allocation7 + $0x18] sm:$0xff]
    %v513 = vld [vmem:[#allocation7 + $0x20] sm:$0xff]
    %v514 = vld [vmem:[#allocation7 + $0x28] sm:$0xff]
    %v515 = vld [vmem:[#allocation7 + $0x30] sm:$0xff]
    %v516 = vld [vmem:[#allocation7 + $0x38] sm:$0xff]
    %v517 = vld [vmem:[#allocation7 + $0x40] sm:$0xff]
    %v518 = vld [vmem:[#allocation7 + $0x48] sm:$0xff]
    %v519 = vld [vmem:[#allocation7 + $0x50] sm:$0xff]
    %v520 = vld [vmem:[#allocation7 + $0x58] sm:$0xff]
    %v521 = vld [vmem:[#allocation7 + $0x60] sm:$0xff]
    %v522 = vld [vmem:[#allocation7 + $0x68] sm:$0xff]
    %v523 = vld [vmem:[#allocation7 + $0x70] sm:$0xff]
    %v524 = vld [vmem:[#allocation7 + $0x78] sm:$0xff]
    %v525 = vld [vmem:[#allocation7 + $0x80] sm:$0xff]
    %v526 = vld [vmem:[#allocation7 + $0x88] sm:$0xff]
    %v527 = vld [vmem:[#allocation7 + $0x90] sm:$0xff]
    %v528 = vld [vmem:[#allocation7 + $0x98] sm:$0xff]
    %v529 = vld [vmem:[#allocation7 + $0xa0] sm:$0xff]
    %v530 = vld [vmem:[#allocation7 + $0xa8] sm:$0xff]
    %v531 = vld [vmem:[#allocation7 + $0xb0] sm:$0xff]
    %v532 = vld [vmem:[#allocation7 + $0xb8] sm:$0xff]
    %v533 = vld [vmem:[#allocation7 + $0xc0] sm:$0xff]
    %v534 = vld [vmem:[#allocation7 + $0xc8] sm:$0xff]
    %v535 = vld [vmem:[#allocation7 + $0xd0] sm:$0xff]
    %v536 = vld [vmem:[#allocation7 + $0xd8] sm:$0xff]
    %v537 = vld [vmem:[#allocation7 + $0xe0] sm:$0xff]
    %v538 = vld [vmem:[#allocation7 + $0xe8] sm:$0xff]
    %v539 = vld [vmem:[#allocation7 + $0xf0] sm:$0xff]
    %v540 = vld [vmem:[#allocation7 + $0xf8] sm:$0xff]
    %v541 = vld [vmem:[#allocation7 + $0x100] sm:$0xff]
    %v542 = vld [vmem:[#allocation7 + $0x108] sm:$0xff]
    %v543 = vld [vmem:[#allocation7 + $0x110] sm:$0xff]
    %v544 = vld [vmem:[#allocation7 + $0x118] sm:$0xff]
    %v545 = vld [vmem:[#allocation7 + $0x120] sm:$0xff]
    %v546 = vld [vmem:[#allocation7 + $0x128] sm:$0xff]
    %v547 = vld [vmem:[#allocation7 + $0x130] sm:$0xff]
    %v548 = vld [vmem:[#allocation7 + $0x138] sm:$0xff]
    %v549 = vld [vmem:[#allocation7 + $0x140] sm:$0xff]
    %v550 = vld [vmem:[#allocation7 + $0x148] sm:$0xff]
    %v551 = vld [vmem:[#allocation7 + $0x150] sm:$0xff]
    %v552 = vld [vmem:[#allocation7 + $0x158] sm:$0xff]
    %v553 = vld [vmem:[#allocation7 + $0x160] sm:$0xff]
    %v554 = vld [vmem:[#allocation7 + $0x168] sm:$0xff]
    %v555 = vld [vmem:[#allocation7 + $0x170] sm:$0xff]
    %v556 = vld [vmem:[#allocation7 + $0x178] sm:$0xff]
    %v557 = vld [vmem:[#allocation7 + $0x180] sm:$0xff]
    %v558 = vld [vmem:[#allocation7 + $0x188] sm:$0xff]
    %v559 = vld [vmem:[#allocation7 + $0x190] sm:$0xff]
    %v560 = vld [vmem:[#allocation7 + $0x198] sm:$0xff]
    %v561 = vld [vmem:[#allocation7 + $0x1a0] sm:$0xff]
    %v562 = vld [vmem:[#allocation7 + $0x1a8] sm:$0xff]
    %v563 = vld [vmem:[#allocation7 + $0x1b0] sm:$0xff]
    %v564 = vld [vmem:[#allocation7 + $0x1b8] sm:$0xff]
    %v565 = vld [vmem:[#allocation7 + $0x1c0] sm:$0xff]
    %v566 = vld [vmem:[#allocation7 + $0x1c8] sm:$0xff]
    %v567 = vld [vmem:[#allocation7 + $0x1d0] sm:$0xff]
    %v568 = vld [vmem:[#allocation7 + $0x1d8] sm:$0xff]
    %v569 = vld [vmem:[#allocation7 + $0x1e0] sm:$0xff]
    %v570 = vld [vmem:[#allocation7 + $0x1e8] sm:$0xff]
    %v571 = vld [vmem:[#allocation7 + $0x1f0] sm:$0xff]
    %v572 = vld [vmem:[#allocation7 + $0x1f8] sm:$0xff]
    %s573 = scalar_lea.vmem [#allocation7], 512
    %v574 = vld [vmem:[%s573] sm:$0xff]
    %v575 = vld [vmem:[%s573 + $0x8] sm:$0xff]
    %v576 = vld [vmem:[%s573 + $0x10] sm:$0xff]
    %v577 = vld [vmem:[%s573 + $0x18] sm:$0xff]
    %v578 = vld [vmem:[%s573 + $0x20] sm:$0xff]
    %v579 = vld [vmem:[%s573 + $0x28] sm:$0xff]
    %v580 = vld [vmem:[%s573 + $0x30] sm:$0xff]
    %v581 = vld [vmem:[%s573 + $0x38] sm:$0xff]
    %v582 = vld [vmem:[%s573 + $0x40] sm:$0xff]
    %v583 = vld [vmem:[%s573 + $0x48] sm:$0xff]
    %v584 = vld [vmem:[%s573 + $0x50] sm:$0xff]
    %v585 = vld [vmem:[%s573 + $0x58] sm:$0xff]
    %v586 = vld [vmem:[%s573 + $0x60] sm:$0xff]
    %v587 = vld [vmem:[%s573 + $0x68] sm:$0xff]
    %v588 = vld [vmem:[%s573 + $0x70] sm:$0xff]
    %v589 = vld [vmem:[%s573 + $0x78] sm:$0xff]
    %v590 = vld [vmem:[%s573 + $0x80] sm:$0xff]
    %v591 = vld [vmem:[%s573 + $0x88] sm:$0xff]
    %v592 = vld [vmem:[%s573 + $0x90] sm:$0xff]
    %v593 = vld [vmem:[%s573 + $0x98] sm:$0xff]
    %v594 = vld [vmem:[%s573 + $0xa0] sm:$0xff]
    %v595 = vld [vmem:[%s573 + $0xa8] sm:$0xff]
    %v596 = vld [vmem:[%s573 + $0xb0] sm:$0xff]
    %v597 = vld [vmem:[%s573 + $0xb8] sm:$0xff]
    %v598 = vld [vmem:[%s573 + $0xc0] sm:$0xff]
    %v599 = vld [vmem:[%s573 + $0xc8] sm:$0xff]
    %v600 = vld [vmem:[%s573 + $0xd0] sm:$0xff]
    %v601 = vld [vmem:[%s573 + $0xd8] sm:$0xff]
    %v602 = vld [vmem:[%s573 + $0xe0] sm:$0xff]
    %v603 = vld [vmem:[%s573 + $0xe8] sm:$0xff]
    %v604 = vld [vmem:[%s573 + $0xf0] sm:$0xff]
    %v605 = vld [vmem:[%s573 + $0xf8] sm:$0xff]
    %v606 = vld [vmem:[%s573 + $0x100] sm:$0xff]
    %v607 = vld [vmem:[%s573 + $0x108] sm:$0xff]
    %v608 = vld [vmem:[%s573 + $0x110] sm:$0xff]
    %v609 = vld [vmem:[%s573 + $0x118] sm:$0xff]
    %v610 = vld [vmem:[%s573 + $0x120] sm:$0xff]
    %v611 = vld [vmem:[%s573 + $0x128] sm:$0xff]
    %v612 = vld [vmem:[%s573 + $0x130] sm:$0xff]
    %v613 = vld [vmem:[%s573 + $0x138] sm:$0xff]
    %v614 = vld [vmem:[%s573 + $0x140] sm:$0xff]
    %v615 = vld [vmem:[%s573 + $0x148] sm:$0xff]
    %v616 = vld [vmem:[%s573 + $0x150] sm:$0xff]
    %v617 = vld [vmem:[%s573 + $0x158] sm:$0xff]
    %v618 = vld [vmem:[%s573 + $0x160] sm:$0xff]
    %v619 = vld [vmem:[%s573 + $0x168] sm:$0xff]
    %v620 = vld [vmem:[%s573 + $0x170] sm:$0xff]
    %v621 = vld [vmem:[%s573 + $0x178] sm:$0xff]
    %v622 = vld [vmem:[%s573 + $0x180] sm:$0xff]
    %v623 = vld [vmem:[%s573 + $0x188] sm:$0xff]
    %v624 = vld [vmem:[%s573 + $0x190] sm:$0xff]
    %v625 = vld [vmem:[%s573 + $0x198] sm:$0xff]
    %v626 = vld [vmem:[%s573 + $0x1a0] sm:$0xff]
    %v627 = vld [vmem:[%s573 + $0x1a8] sm:$0xff]
    %v628 = vld [vmem:[%s573 + $0x1b0] sm:$0xff]
    %v629 = vld [vmem:[%s573 + $0x1b8] sm:$0xff]
    %v630 = vld [vmem:[%s573 + $0x1c0] sm:$0xff]
    %v631 = vld [vmem:[%s573 + $0x1c8] sm:$0xff]
    %v632 = vld [vmem:[%s573 + $0x1d0] sm:$0xff]
    %v633 = vld [vmem:[%s573 + $0x1d8] sm:$0xff]
    %v634 = vld [vmem:[%s573 + $0x1e0] sm:$0xff]
    %v635 = vld [vmem:[%s573 + $0x1e8] sm:$0xff]
    %v636 = vld [vmem:[%s573 + $0x1f0] sm:$0xff]
    %v637 = vld [vmem:[%s573 + $0x1f8] sm:$0xff]
    %s638 = scalar_lea.vmem [#allocation7], 1024
    %v639 = vld [vmem:[%s638] sm:$0xff]
    %v640 = vld [vmem:[%s638 + $0x8] sm:$0xff]
    %v641 = vld [vmem:[%s638 + $0x10] sm:$0xff]
    %v642 = vld [vmem:[%s638 + $0x18] sm:$0xff]
    %v643 = vld [vmem:[%s638 + $0x20] sm:$0xff]
    %v644 = vld [vmem:[%s638 + $0x28] sm:$0xff]
    %v645 = vld [vmem:[%s638 + $0x30] sm:$0xff]
    %v646 = vld [vmem:[%s638 + $0x38] sm:$0xff]
    %v647 = vld [vmem:[%s638 + $0x40] sm:$0xff]
    %v648 = vld [vmem:[%s638 + $0x48] sm:$0xff]
    %v649 = vld [vmem:[%s638 + $0x50] sm:$0xff]
    %v650 = vld [vmem:[%s638 + $0x58] sm:$0xff]
    %v651 = vld [vmem:[%s638 + $0x60] sm:$0xff]
    %v652 = vld [vmem:[%s638 + $0x68] sm:$0xff]
    %v653 = vld [vmem:[%s638 + $0x70] sm:$0xff]
    %v654 = vld [vmem:[%s638 + $0x78] sm:$0xff]
    %v655 = vld [vmem:[%s638 + $0x80] sm:$0xff]
    %v656 = vld [vmem:[%s638 + $0x88] sm:$0xff]
    %v657 = vld [vmem:[%s638 + $0x90] sm:$0xff]
    %v658 = vld [vmem:[%s638 + $0x98] sm:$0xff]
    %v659 = vld [vmem:[%s638 + $0xa0] sm:$0xff]
    %v660 = vld [vmem:[%s638 + $0xa8] sm:$0xff]
    %v661 = vld [vmem:[%s638 + $0xb0] sm:$0xff]
    %v662 = vld [vmem:[%s638 + $0xb8] sm:$0xff]
    %v663 = vld [vmem:[%s638 + $0xc0] sm:$0xff]
    %v664 = vld [vmem:[%s638 + $0xc8] sm:$0xff]
    %v665 = vld [vmem:[%s638 + $0xd0] sm:$0xff]
    %v666 = vld [vmem:[%s638 + $0xd8] sm:$0xff]
    %v667 = vld [vmem:[%s638 + $0xe0] sm:$0xff]
    %v668 = vld [vmem:[%s638 + $0xe8] sm:$0xff]
    %v669 = vld [vmem:[%s638 + $0xf0] sm:$0xff]
    %v670 = vld [vmem:[%s638 + $0xf8] sm:$0xff]
    %v671 = vld [vmem:[%s638 + $0x100] sm:$0xff]
    %v672 = vld [vmem:[%s638 + $0x108] sm:$0xff]
    %v673 = vld [vmem:[%s638 + $0x110] sm:$0xff]
    %v674 = vld [vmem:[%s638 + $0x118] sm:$0xff]
    %v675 = vld [vmem:[%s638 + $0x120] sm:$0xff]
    %v676 = vld [vmem:[%s638 + $0x128] sm:$0xff]
    %v677 = vld [vmem:[%s638 + $0x130] sm:$0xff]
    %v678 = vld [vmem:[%s638 + $0x138] sm:$0xff]
    %v679 = vld [vmem:[%s638 + $0x140] sm:$0xff]
    %v680 = vld [vmem:[%s638 + $0x148] sm:$0xff]
    %v681 = vld [vmem:[%s638 + $0x150] sm:$0xff]
    %v682 = vld [vmem:[%s638 + $0x158] sm:$0xff]
    %v683 = vld [vmem:[%s638 + $0x160] sm:$0xff]
    %v684 = vld [vmem:[%s638 + $0x168] sm:$0xff]
    %v685 = vld [vmem:[%s638 + $0x170] sm:$0xff]
    %v686 = vld [vmem:[%s638 + $0x178] sm:$0xff]
    %v687 = vld [vmem:[%s638 + $0x180] sm:$0xff]
    %v688 = vld [vmem:[%s638 + $0x188] sm:$0xff]
    %v689 = vld [vmem:[%s638 + $0x190] sm:$0xff]
    %v690 = vld [vmem:[%s638 + $0x198] sm:$0xff]
    %v691 = vld [vmem:[%s638 + $0x1a0] sm:$0xff]
    %v692 = vld [vmem:[%s638 + $0x1a8] sm:$0xff]
    %v693 = vld [vmem:[%s638 + $0x1b0] sm:$0xff]
    %v694 = vld [vmem:[%s638 + $0x1b8] sm:$0xff]
    %v695 = vld [vmem:[%s638 + $0x1c0] sm:$0xff]
    %v696 = vld [vmem:[%s638 + $0x1c8] sm:$0xff]
    %v697 = vld [vmem:[%s638 + $0x1d0] sm:$0xff]
    %v698 = vld [vmem:[%s638 + $0x1d8] sm:$0xff]
    %v699 = vld [vmem:[%s638 + $0x1e0] sm:$0xff]
    %v700 = vld [vmem:[%s638 + $0x1e8] sm:$0xff]
    %v701 = vld [vmem:[%s638 + $0x1f0] sm:$0xff]
    %v702 = vld [vmem:[%s638 + $0x1f8] sm:$0xff]
    %v703 = vld [vmem:[#allocation8] sm:$0x3]
    %v704 = vrot.slane %v501, 7
    %v705 = vrot.slane %v502, 7
    %v706 = vrot.slane %v503, 7
    %v707 = vrot.slane %v504, 7
    %v708 = vrot.slane %v505, 7
    %v709 = vrot.slane %v506, 7
    %v710 = vrot.slane %v507, 7
    %v711 = vrot.slane %v508, 7
    %v712 = vsel %vm208, %v708, %v710
    %v713 = vsel %vm208, %v709, %v711
    %v714 = vsel %vm208, %v706, %v708
    %v715 = vsel %vm208, %v707, %v709
    %v716 = vsel %vm208, %v704, %v706
    %v717 = vsel %vm208, %v705, %v707
    %v718 = vsel %vm208, %v710, %v704
    %v719 = vsel %vm208, %v711, %v705
    %v720 = vrot.slane %v501, 1
    %v721 = vrot.slane %v502, 1
    %v722 = vrot.slane %v503, 1
    %v723 = vrot.slane %v504, 1
    %v724 = vrot.slane %v505, 1
    %v725 = vrot.slane %v506, 1
    %v726 = vrot.slane %v507, 1
    %v727 = vrot.slane %v508, 1
    %v728 = vsel %vm217, %v724, %v726
    %v729 = vsel %vm217, %v725, %v727
    %v730 = vsel %vm217, %v722, %v724
    %v731 = vsel %vm217, %v723, %v725
    %v732 = vsel %vm217, %v720, %v722
    %v733 = vsel %vm217, %v721, %v723
    %v734 = vsel %vm217, %v726, %v720
    %v735 = vsel %vm217, %v727, %v721
    %736 = vmatpush.msra.mxu0 %v604
    %737 = vmatpush.msra.mxu0 %v602
    %738 = vmatpush.msra.mxu0 %v600
    %739 = vmatpush.msra.mxu0 %v598
    %740 = vmatpush.msra.mxu0 %v596
    %741 = vmatpush.msra.mxu0 %v594
    %742 = vmatpush.msra.mxu0 %v592
    %743 = vmatpush.msra.mxu0 %v590
    %744 = vmatpush.msra.mxu0 %v588
    %745 = vmatpush.msra.mxu0 %v586
    %746 = vmatpush.msra.mxu0 %v584
    %747 = vmatpush.msra.mxu0 %v582
    %748 = vmatpush.msra.mxu0 %v580
    %749 = vmatpush.msra.mxu0 %v578
    %750 = vmatpush.msra.mxu0 %v576
    %751 = vmatpush.msra.mxu0 %v574
    %752 = vmatmul.f32.gmra.mxu0 %v501
    %v753 = vpop.f32.mrf.mxu0
    %v754 = vadd.f32 0.0, %v753
    %755 = vmatmul.f32.gmra.mxu0 %v503
    %v756 = vpop.f32.mrf.mxu0
    %v757 = vadd.f32 0.0, %v756
    %758 = vmatmul.f32.gmra.mxu0 %v505
    %v759 = vpop.f32.mrf.mxu0
    %v760 = vadd.f32 0.0, %v759
    %761 = vmatmul.f32.gmra.mxu0 %v507
    %v762 = vpop.f32.mrf.mxu0
    %v763 = vadd.f32 0.0, %v762
    %764 = vdwg.mxu0
    %765 = vmatpush.msra.mxu0 %v636
    %766 = vmatpush.msra.mxu0 %v634
    %767 = vmatpush.msra.mxu0 %v632
    %768 = vmatpush.msra.mxu0 %v630
    %769 = vmatpush.msra.mxu0 %v628
    %770 = vmatpush.msra.mxu0 %v626
    %771 = vmatpush.msra.mxu0 %v624
    %772 = vmatpush.msra.mxu0 %v622
    %773 = vmatpush.msra.mxu0 %v620
    %774 = vmatpush.msra.mxu0 %v618
    %775 = vmatpush.msra.mxu0 %v616
    %776 = vmatpush.msra.mxu0 %v614
    %777 = vmatpush.msra.mxu0 %v612
    %778 = vmatpush.msra.mxu0 %v610
    %779 = vmatpush.msra.mxu0 %v608
    %780 = vmatpush.msra.mxu0 %v606
    %781 = vmatmul.f32.gmra.mxu0 %v502
    %v782 = vpop.f32.mrf.mxu0
    %v783 = vadd.f32 %v754, %v782
    %784 = vmatmul.f32.gmra.mxu0 %v504
    %v785 = vpop.f32.mrf.mxu0
    %v786 = vadd.f32 %v757, %v785
    %787 = vmatmul.f32.gmra.mxu0 %v506
    %v788 = vpop.f32.mrf.mxu0
    %v789 = vadd.f32 %v760, %v788
    %790 = vmatmul.f32.gmra.mxu0 %v508
    %v791 = vpop.f32.mrf.mxu0
    %v792 = vadd.f32 %v763, %v791
    %793 = vdwg.mxu0
    %794 = vmatpush.msra.mxu0 %v605
    %795 = vmatpush.msra.mxu0 %v603
    %796 = vmatpush.msra.mxu0 %v601
    %797 = vmatpush.msra.mxu0 %v599
    %798 = vmatpush.msra.mxu0 %v597
    %799 = vmatpush.msra.mxu0 %v595
    %800 = vmatpush.msra.mxu0 %v593
    %801 = vmatpush.msra.mxu0 %v591
    %802 = vmatpush.msra.mxu0 %v589
    %803 = vmatpush.msra.mxu0 %v587
    %804 = vmatpush.msra.mxu0 %v585
    %805 = vmatpush.msra.mxu0 %v583
    %806 = vmatpush.msra.mxu0 %v581
    %807 = vmatpush.msra.mxu0 %v579
    %808 = vmatpush.msra.mxu0 %v577
    %809 = vmatpush.msra.mxu0 %v575
    %810 = vmatmul.f32.gmra.mxu0 %v501
    %v811 = vpop.f32.mrf.mxu0
    %v812 = vadd.f32 0.0, %v811
    %813 = vmatmul.f32.gmra.mxu0 %v503
    %v814 = vpop.f32.mrf.mxu0
    %v815 = vadd.f32 0.0, %v814
    %816 = vmatmul.f32.gmra.mxu0 %v505
    %v817 = vpop.f32.mrf.mxu0
    %v818 = vadd.f32 0.0, %v817
    %819 = vmatmul.f32.gmra.mxu0 %v507
    %v820 = vpop.f32.mrf.mxu0
    %v821 = vadd.f32 0.0, %v820
    %822 = vdwg.mxu0
    %823 = vmatpush.msra.mxu0 %v637
    %824 = vmatpush.msra.mxu0 %v635
    %825 = vmatpush.msra.mxu0 %v633
    %826 = vmatpush.msra.mxu0 %v631
    %827 = vmatpush.msra.mxu0 %v629
    %828 = vmatpush.msra.mxu0 %v627
    %829 = vmatpush.msra.mxu0 %v625
    %830 = vmatpush.msra.mxu0 %v623
    %831 = vmatpush.msra.mxu0 %v621
    %832 = vmatpush.msra.mxu0 %v619
    %833 = vmatpush.msra.mxu0 %v617
    %834 = vmatpush.msra.mxu0 %v615
    %835 = vmatpush.msra.mxu0 %v613
    %836 = vmatpush.msra.mxu0 %v611
    %837 = vmatpush.msra.mxu0 %v609
    %838 = vmatpush.msra.mxu0 %v607
    %839 = vmatmul.f32.gmra.mxu0 %v502
    %v840 = vpop.f32.mrf.mxu0
    %v841 = vadd.f32 %v812, %v840
    %842 = vmatmul.f32.gmra.mxu0 %v504
    %v843 = vpop.f32.mrf.mxu0
    %v844 = vadd.f32 %v815, %v843
    %845 = vmatmul.f32.gmra.mxu0 %v506
    %v846 = vpop.f32.mrf.mxu0
    %v847 = vadd.f32 %v818, %v846
    %848 = vmatmul.f32.gmra.mxu0 %v508
    %v849 = vpop.f32.mrf.mxu0
    %v850 = vadd.f32 %v821, %v849
    %851 = vdwg.mxu0
    %852 = vmatpush.msra.mxu0 %v539
    %853 = vmatpush.msra.mxu0 %v537
    %854 = vmatpush.msra.mxu0 %v535
    %855 = vmatpush.msra.mxu0 %v533
    %856 = vmatpush.msra.mxu0 %v531
    %857 = vmatpush.msra.mxu0 %v529
    %858 = vmatpush.msra.mxu0 %v527
    %859 = vmatpush.msra.mxu0 %v525
    %860 = vmatpush.msra.mxu0 %v523
    %861 = vmatpush.msra.mxu0 %v521
    %862 = vmatpush.msra.mxu0 %v519
    %863 = vmatpush.msra.mxu0 %v517
    %864 = vmatpush.msra.mxu0 %v515
    %865 = vmatpush.msra.mxu0 %v513
    %866 = vmatpush.msra.mxu0 %v511
    %867 = vmatpush.msra.mxu0 %v509
    %868 = vmatmul.f32.gmra.mxu0 %v718
    %v869 = vpop.f32.mrf.mxu0
    %v870 = vadd.f32 %v783, %v869
    %871 = vmatmul.f32.gmra.mxu0 %v716
    %v872 = vpop.f32.mrf.mxu0
    %v873 = vadd.f32 %v786, %v872
    %874 = vmatmul.f32.gmra.mxu0 %v714
    %v875 = vpop.f32.mrf.mxu0
    %v876 = vadd.f32 %v789, %v875
    %877 = vmatmul.f32.gmra.mxu0 %v712
    %v878 = vpop.f32.mrf.mxu0
    %v879 = vadd.f32 %v792, %v878
    %880 = vdwg.mxu0
    %881 = vmatpush.msra.mxu0 %v571
    %882 = vmatpush.msra.mxu0 %v569
    %883 = vmatpush.msra.mxu0 %v567
    %884 = vmatpush.msra.mxu0 %v565
    %885 = vmatpush.msra.mxu0 %v563
    %886 = vmatpush.msra.mxu0 %v561
    %887 = vmatpush.msra.mxu0 %v559
    %888 = vmatpush.msra.mxu0 %v557
    %889 = vmatpush.msra.mxu0 %v555
    %890 = vmatpush.msra.mxu0 %v553
    %891 = vmatpush.msra.mxu0 %v551
    %892 = vmatpush.msra.mxu0 %v549
    %893 = vmatpush.msra.mxu0 %v547
    %894 = vmatpush.msra.mxu0 %v545
    %895 = vmatpush.msra.mxu0 %v543
    %896 = vmatpush.msra.mxu0 %v541
    %897 = vmatmul.f32.gmra.mxu0 %v719
    %v898 = vpop.f32.mrf.mxu0
    %v899 = vadd.f32 %v870, %v898
    %900 = vmatmul.f32.gmra.mxu0 %v717
    %v901 = vpop.f32.mrf.mxu0
    %v902 = vadd.f32 %v873, %v901
    %903 = vmatmul.f32.gmra.mxu0 %v715
    %v904 = vpop.f32.mrf.mxu0
    %v905 = vadd.f32 %v876, %v904
    %906 = vmatmul.f32.gmra.mxu0 %v713
    %v907 = vpop.f32.mrf.mxu0
    %v908 = vadd.f32 %v879, %v907
    %909 = vdwg.mxu0
    %910 = vmatpush.msra.mxu0 %v540
    %911 = vmatpush.msra.mxu0 %v538
    %912 = vmatpush.msra.mxu0 %v536
    %913 = vmatpush.msra.mxu0 %v534
    %914 = vmatpush.msra.mxu0 %v532
    %915 = vmatpush.msra.mxu0 %v530
    %916 = vmatpush.msra.mxu0 %v528
    %917 = vmatpush.msra.mxu0 %v526
    %918 = vmatpush.msra.mxu0 %v524
    %919 = vmatpush.msra.mxu0 %v522
    %920 = vmatpush.msra.mxu0 %v520
    %921 = vmatpush.msra.mxu0 %v518
    %922 = vmatpush.msra.mxu0 %v516
    %923 = vmatpush.msra.mxu0 %v514
    %924 = vmatpush.msra.mxu0 %v512
    %925 = vmatpush.msra.mxu0 %v510
    %926 = vmatmul.f32.gmra.mxu0 %v718
    %v927 = vpop.f32.mrf.mxu0
    %v928 = vadd.f32 %v841, %v927
    %929 = vmatmul.f32.gmra.mxu0 %v716
    %v930 = vpop.f32.mrf.mxu0
    %v931 = vadd.f32 %v844, %v930
    %932 = vmatmul.f32.gmra.mxu0 %v714
    %v933 = vpop.f32.mrf.mxu0
    %v934 = vadd.f32 %v847, %v933
    %935 = vmatmul.f32.gmra.mxu0 %v712
    %v936 = vpop.f32.mrf.mxu0
    %v937 = vadd.f32 %v850, %v936
    %938 = vdwg.mxu0
    %939 = vmatpush.msra.mxu0 %v572
    %940 = vmatpush.msra.mxu0 %v570
    %941 = vmatpush.msra.mxu0 %v568
    %942 = vmatpush.msra.mxu0 %v566
    %943 = vmatpush.msra.mxu0 %v564
    %944 = vmatpush.msra.mxu0 %v562
    %945 = vmatpush.msra.mxu0 %v560
    %946 = vmatpush.msra.mxu0 %v558
    %947 = vmatpush.msra.mxu0 %v556
    %948 = vmatpush.msra.mxu0 %v554
    %949 = vmatpush.msra.mxu0 %v552
    %950 = vmatpush.msra.mxu0 %v550
    %951 = vmatpush.msra.mxu0 %v548
    %952 = vmatpush.msra.mxu0 %v546
    %953 = vmatpush.msra.mxu0 %v544
    %954 = vmatpush.msra.mxu0 %v542
    %955 = vmatmul.f32.gmra.mxu0 %v719
    %v956 = vpop.f32.mrf.mxu0
    %v957 = vadd.f32 %v928, %v956
    %958 = vmatmul.f32.gmra.mxu0 %v717
    %v959 = vpop.f32.mrf.mxu0
    %v960 = vadd.f32 %v931, %v959
    %961 = vmatmul.f32.gmra.mxu0 %v715
    %v962 = vpop.f32.mrf.mxu0
    %v963 = vadd.f32 %v934, %v962
    %964 = vmatmul.f32.gmra.mxu0 %v713
    %v965 = vpop.f32.mrf.mxu0
    %v966 = vadd.f32 %v937, %v965
    %967 = vdwg.mxu0
    %968 = vmatpush.msra.mxu0 %v669
    %969 = vmatpush.msra.mxu0 %v667
    %970 = vmatpush.msra.mxu0 %v665
    %971 = vmatpush.msra.mxu0 %v663
    %972 = vmatpush.msra.mxu0 %v661
    %973 = vmatpush.msra.mxu0 %v659
    %974 = vmatpush.msra.mxu0 %v657
    %975 = vmatpush.msra.mxu0 %v655
    %976 = vmatpush.msra.mxu0 %v653
    %977 = vmatpush.msra.mxu0 %v651
    %978 = vmatpush.msra.mxu0 %v649
    %979 = vmatpush.msra.mxu0 %v647
    %980 = vmatpush.msra.mxu0 %v645
    %981 = vmatpush.msra.mxu0 %v643
    %982 = vmatpush.msra.mxu0 %v641
    %983 = vmatpush.msra.mxu0 %v639
    %984 = vmatmul.f32.gmra.mxu0 %v732
    %v985 = vpop.f32.mrf.mxu0
    %v986 = vadd.f32 0.0, %v985
    %987 = vmatmul.f32.gmra.mxu0 %v730
    %v988 = vpop.f32.mrf.mxu0
    %v989 = vadd.f32 0.0, %v988
    %990 = vmatmul.f32.gmra.mxu0 %v728
    %v991 = vpop.f32.mrf.mxu0
    %v992 = vadd.f32 0.0, %v991
    %993 = vmatmul.f32.gmra.mxu0 %v734
    %v994 = vpop.f32.mrf.mxu0
    %v995 = vadd.f32 0.0, %v994
    %996 = vdwg.mxu0
    %997 = vmatpush.msra.mxu0 %v701
    %998 = vmatpush.msra.mxu0 %v699
    %999 = vmatpush.msra.mxu0 %v697
    %1000 = vmatpush.msra.mxu0 %v695
    %1001 = vmatpush.msra.mxu0 %v693
    %1002 = vmatpush.msra.mxu0 %v691
    %1003 = vmatpush.msra.mxu0 %v689
    %1004 = vmatpush.msra.mxu0 %v687
    %1005 = vmatpush.msra.mxu0 %v685
    %1006 = vmatpush.msra.mxu0 %v683
    %1007 = vmatpush.msra.mxu0 %v681
    %1008 = vmatpush.msra.mxu0 %v679
    %1009 = vmatpush.msra.mxu0 %v677
    %1010 = vmatpush.msra.mxu0 %v675
    %1011 = vmatpush.msra.mxu0 %v673
    %1012 = vmatpush.msra.mxu0 %v671
    %1013 = vmatmul.f32.gmra.mxu0 %v733
    %v1014 = vpop.f32.mrf.mxu0
    %v1015 = vadd.f32 %v986, %v1014
    %1016 = vmatmul.f32.gmra.mxu0 %v731
    %v1017 = vpop.f32.mrf.mxu0
    %v1018 = vadd.f32 %v989, %v1017
    %1019 = vmatmul.f32.gmra.mxu0 %v729
    %v1020 = vpop.f32.mrf.mxu0
    %v1021 = vadd.f32 %v992, %v1020
    %1022 = vmatmul.f32.gmra.mxu0 %v735
    %v1023 = vpop.f32.mrf.mxu0
    %v1024 = vadd.f32 %v995, %v1023
    %1025 = vdwg.mxu0
    %1026 = vmatpush.msra.mxu0 %v670
    %1027 = vmatpush.msra.mxu0 %v668
    %1028 = vmatpush.msra.mxu0 %v666
    %1029 = vmatpush.msra.mxu0 %v664
    %1030 = vmatpush.msra.mxu0 %v662
    %1031 = vmatpush.msra.mxu0 %v660
    %1032 = vmatpush.msra.mxu0 %v658
    %1033 = vmatpush.msra.mxu0 %v656
    %1034 = vmatpush.msra.mxu0 %v654
    %1035 = vmatpush.msra.mxu0 %v652
    %1036 = vmatpush.msra.mxu0 %v650
    %1037 = vmatpush.msra.mxu0 %v648
    %1038 = vmatpush.msra.mxu0 %v646
    %1039 = vmatpush.msra.mxu0 %v644
    %1040 = vmatpush.msra.mxu0 %v642
    %1041 = vmatpush.msra.mxu0 %v640
    %1042 = vmatmul.f32.gmra.mxu0 %v732
    %v1043 = vpop.f32.mrf.mxu0
    %v1044 = vadd.f32 0.0, %v1043
    %1045 = vmatmul.f32.gmra.mxu0 %v730
    %v1046 = vpop.f32.mrf.mxu0
    %v1047 = vadd.f32 0.0, %v1046
    %1048 = vmatmul.f32.gmra.mxu0 %v728
    %v1049 = vpop.f32.mrf.mxu0
    %v1050 = vadd.f32 0.0, %v1049
    %1051 = vmatmul.f32.gmra.mxu0 %v734
    %v1052 = vpop.f32.mrf.mxu0
    %v1053 = vadd.f32 0.0, %v1052
    %1054 = vdwg.mxu0
    %1055 = vmatpush.msra.mxu0 %v702
    %1056 = vmatpush.msra.mxu0 %v700
    %1057 = vmatpush.msra.mxu0 %v698
    %1058 = vmatpush.msra.mxu0 %v696
    %1059 = vmatpush.msra.mxu0 %v694
    %1060 = vmatpush.msra.mxu0 %v692
    %1061 = vmatpush.msra.mxu0 %v690
    %1062 = vmatpush.msra.mxu0 %v688
    %1063 = vmatpush.msra.mxu0 %v686
    %1064 = vmatpush.msra.mxu0 %v684
    %1065 = vmatpush.msra.mxu0 %v682
    %1066 = vmatpush.msra.mxu0 %v680
    %1067 = vmatpush.msra.mxu0 %v678
    %1068 = vmatpush.msra.mxu0 %v676
    %1069 = vmatpush.msra.mxu0 %v674
    %1070 = vmatpush.msra.mxu0 %v672
    %1071 = vmatmul.f32.gmra.mxu0 %v733
    %v1072 = vpop.f32.mrf.mxu0
    %v1073 = vadd.f32 %v1044, %v1072
    %1074 = vmatmul.f32.gmra.mxu0 %v731
    %v1075 = vpop.f32.mrf.mxu0
    %v1076 = vadd.f32 %v1047, %v1075
    %1077 = vmatmul.f32.gmra.mxu0 %v729
    %v1078 = vpop.f32.mrf.mxu0
    %v1079 = vadd.f32 %v1050, %v1078
    %1080 = vmatmul.f32.gmra.mxu0 %v735
    %v1081 = vpop.f32.mrf.mxu0
    %v1082 = vadd.f32 %v1053, %v1081
    %1083 = vdwg.mxu0
    %v1084 = vadd.f32 %v899, %v1015
    %v1085 = vadd.f32 %v957, %v1073
    %v1086 = vadd.f32 %v902, %v1018
    %v1087 = vadd.f32 %v960, %v1076
    %v1088 = vadd.f32 %v905, %v1021
    %v1089 = vadd.f32 %v963, %v1079
    %v1090 = vadd.f32 %v908, %v1024
    %v1091 = vadd.f32 %v966, %v1082
    %v1093 = vperm.slane %v703, 0
    %v1094 = vperm.slane %v703, 1
    %v1097 = vadd.f32 %v1084, %v1093
    %v1098 = vadd.f32 %v1085, %v1094
    %v1099 = vadd.f32 %v1086, %v1093
    %v1100 = vadd.f32 %v1087, %v1094
    %v1101 = vadd.f32 %v1088, %v1093
    %v1102 = vadd.f32 %v1089, %v1094
    %v1103 = vadd.f32 %v1090, %v1093
    %v1104 = vadd.f32 %v1091, %v1094
    %v1105 = vmax.f32 %v1097, 0.0
    %v1106 = vmax.f32 %v1098, 0.0
    %v1107 = vmax.f32 %v1099, 0.0
    %v1108 = vmax.f32 %v1100, 0.0
    %v1109 = vmax.f32 %v1101, 0.0
    %v1110 = vmax.f32 %v1102, 0.0
    %v1111 = vmax.f32 %v1103, 0.0
    %v1112 = vmax.f32 %v1104, 0.0
    %v1113 = vmul.f32 %v1105, %v484
    %v1114 = vmul.f32 %v1106, %v484
    %v1115 = vmul.f32 %v1107, %v489
    %v1116 = vmul.f32 %v1108, %v489
    %v1117 = vmul.f32 %v1109, %v494
    %v1118 = vmul.f32 %v1110, %v494
    %v1119 = vmul.f32 %v1111, %v499
    %v1120 = vmul.f32 %v1112, %v499
    %s1121 = scalar_lea.vmem [#allocation7], 1536
    %v1122 = vld [vmem:[%s1121] sm:$0xff]
    %v1123 = vld [vmem:[%s1121 + $0x8] sm:$0xff]
    %v1124 = vld [vmem:[%s1121 + $0x10] sm:$0xff]
    %v1125 = vld [vmem:[%s1121 + $0x18] sm:$0xff]
    %v1126 = vld [vmem:[%s1121 + $0x20] sm:$0xff]
    %v1127 = vld [vmem:[%s1121 + $0x28] sm:$0xff]
    %v1128 = vld [vmem:[%s1121 + $0x30] sm:$0xff]
    %v1129 = vld [vmem:[%s1121 + $0x38] sm:$0xff]
    %v1130 = vld [vmem:[%s1121 + $0x40] sm:$0xff]
    %v1131 = vld [vmem:[%s1121 + $0x48] sm:$0xff]
    %v1132 = vld [vmem:[%s1121 + $0x50] sm:$0xff]
    %v1133 = vld [vmem:[%s1121 + $0x58] sm:$0xff]
    %v1134 = vld [vmem:[%s1121 + $0x60] sm:$0xff]
    %v1135 = vld [vmem:[%s1121 + $0x68] sm:$0xff]
    %v1136 = vld [vmem:[%s1121 + $0x70] sm:$0xff]
    %v1137 = vld [vmem:[%s1121 + $0x78] sm:$0xff]
    %v1138 = vld [vmem:[%s1121 + $0x80] sm:$0xff]
    %v1139 = vld [vmem:[%s1121 + $0x88] sm:$0xff]
    %v1140 = vld [vmem:[%s1121 + $0x90] sm:$0xff]
    %v1141 = vld [vmem:[%s1121 + $0x98] sm:$0xff]
    %v1142 = vld [vmem:[%s1121 + $0xa0] sm:$0xff]
    %v1143 = vld [vmem:[%s1121 + $0xa8] sm:$0xff]
    %v1144 = vld [vmem:[%s1121 + $0xb0] sm:$0xff]
    %v1145 = vld [vmem:[%s1121 + $0xb8] sm:$0xff]
    %v1146 = vld [vmem:[%s1121 + $0xc0] sm:$0xff]
    %v1147 = vld [vmem:[%s1121 + $0xc8] sm:$0xff]
    %v1148 = vld [vmem:[%s1121 + $0xd0] sm:$0xff]
    %v1149 = vld [vmem:[%s1121 + $0xd8] sm:$0xff]
    %v1150 = vld [vmem:[%s1121 + $0xe0] sm:$0xff]
    %v1151 = vld [vmem:[%s1121 + $0xe8] sm:$0xff]
    %v1152 = vld [vmem:[%s1121 + $0xf0] sm:$0xff]
    %v1153 = vld [vmem:[%s1121 + $0xf8] sm:$0xff]
    %v1154 = vld [vmem:[%s1121 + $0x100] sm:$0xff]
    %v1155 = vld [vmem:[%s1121 + $0x108] sm:$0xff]
    %v1156 = vld [vmem:[%s1121 + $0x110] sm:$0xff]
    %v1157 = vld [vmem:[%s1121 + $0x118] sm:$0xff]
    %v1158 = vld [vmem:[%s1121 + $0x120] sm:$0xff]
    %v1159 = vld [vmem:[%s1121 + $0x128] sm:$0xff]
    %v1160 = vld [vmem:[%s1121 + $0x130] sm:$0xff]
    %v1161 = vld [vmem:[%s1121 + $0x138] sm:$0xff]
    %v1162 = vld [vmem:[%s1121 + $0x140] sm:$0xff]
    %v1163 = vld [vmem:[%s1121 + $0x148] sm:$0xff]
    %v1164 = vld [vmem:[%s1121 + $0x150] sm:$0xff]
    %v1165 = vld [vmem:[%s1121 + $0x158] sm:$0xff]
    %v1166 = vld [vmem:[%s1121 + $0x160] sm:$0xff]
    %v1167 = vld [vmem:[%s1121 + $0x168] sm:$0xff]
    %v1168 = vld [vmem:[%s1121 + $0x170] sm:$0xff]
    %v1169 = vld [vmem:[%s1121 + $0x178] sm:$0xff]
    %v1170 = vld [vmem:[%s1121 + $0x180] sm:$0xff]
    %v1171 = vld [vmem:[%s1121 + $0x188] sm:$0xff]
    %v1172 = vld [vmem:[%s1121 + $0x190] sm:$0xff]
    %v1173 = vld [vmem:[%s1121 + $0x198] sm:$0xff]
    %v1174 = vld [vmem:[%s1121 + $0x1a0] sm:$0xff]
    %v1175 = vld [vmem:[%s1121 + $0x1a8] sm:$0xff]
    %v1176 = vld [vmem:[%s1121 + $0x1b0] sm:$0xff]
    %v1177 = vld [vmem:[%s1121 + $0x1b8] sm:$0xff]
    %v1178 = vld [vmem:[%s1121 + $0x1c0] sm:$0xff]
    %v1179 = vld [vmem:[%s1121 + $0x1c8] sm:$0xff]
    %v1180 = vld [vmem:[%s1121 + $0x1d0] sm:$0xff]
    %v1181 = vld [vmem:[%s1121 + $0x1d8] sm:$0xff]
    %v1182 = vld [vmem:[%s1121 + $0x1e0] sm:$0xff]
    %v1183 = vld [vmem:[%s1121 + $0x1e8] sm:$0xff]
    %v1184 = vld [vmem:[%s1121 + $0x1f0] sm:$0xff]
    %v1185 = vld [vmem:[%s1121 + $0x1f8] sm:$0xff]
    %s1186 = scalar_lea.vmem [#allocation7], 2048
    %v1187 = vld [vmem:[%s1186] sm:$0xff]
    %v1188 = vld [vmem:[%s1186 + $0x8] sm:$0xff]
    %v1189 = vld [vmem:[%s1186 + $0x10] sm:$0xff]
    %v1190 = vld [vmem:[%s1186 + $0x18] sm:$0xff]
    %v1191 = vld [vmem:[%s1186 + $0x20] sm:$0xff]
    %v1192 = vld [vmem:[%s1186 + $0x28] sm:$0xff]
    %v1193 = vld [vmem:[%s1186 + $0x30] sm:$0xff]
    %v1194 = vld [vmem:[%s1186 + $0x38] sm:$0xff]
    %v1195 = vld [vmem:[%s1186 + $0x40] sm:$0xff]
    %v1196 = vld [vmem:[%s1186 + $0x48] sm:$0xff]
    %v1197 = vld [vmem:[%s1186 + $0x50] sm:$0xff]
    %v1198 = vld [vmem:[%s1186 + $0x58] sm:$0xff]
    %v1199 = vld [vmem:[%s1186 + $0x60] sm:$0xff]
    %v1200 = vld [vmem:[%s1186 + $0x68] sm:$0xff]
    %v1201 = vld [vmem:[%s1186 + $0x70] sm:$0xff]
    %v1202 = vld [vmem:[%s1186 + $0x78] sm:$0xff]
    %v1203 = vld [vmem:[%s1186 + $0x80] sm:$0xff]
    %v1204 = vld [vmem:[%s1186 + $0x88] sm:$0xff]
    %v1205 = vld [vmem:[%s1186 + $0x90] sm:$0xff]
    %v1206 = vld [vmem:[%s1186 + $0x98] sm:$0xff]
    %v1207 = vld [vmem:[%s1186 + $0xa0] sm:$0xff]
    %v1208 = vld [vmem:[%s1186 + $0xa8] sm:$0xff]
    %v1209 = vld [vmem:[%s1186 + $0xb0] sm:$0xff]
    %v1210 = vld [vmem:[%s1186 + $0xb8] sm:$0xff]
    %v1211 = vld [vmem:[%s1186 + $0xc0] sm:$0xff]
    %v1212 = vld [vmem:[%s1186 + $0xc8] sm:$0xff]
    %v1213 = vld [vmem:[%s1186 + $0xd0] sm:$0xff]
    %v1214 = vld [vmem:[%s1186 + $0xd8] sm:$0xff]
    %v1215 = vld [vmem:[%s1186 + $0xe0] sm:$0xff]
    %v1216 = vld [vmem:[%s1186 + $0xe8] sm:$0xff]
    %v1217 = vld [vmem:[%s1186 + $0xf0] sm:$0xff]
    %v1218 = vld [vmem:[%s1186 + $0xf8] sm:$0xff]
    %v1219 = vld [vmem:[%s1186 + $0x100] sm:$0xff]
    %v1220 = vld [vmem:[%s1186 + $0x108] sm:$0xff]
    %v1221 = vld [vmem:[%s1186 + $0x110] sm:$0xff]
    %v1222 = vld [vmem:[%s1186 + $0x118] sm:$0xff]
    %v1223 = vld [vmem:[%s1186 + $0x120] sm:$0xff]
    %v1224 = vld [vmem:[%s1186 + $0x128] sm:$0xff]
    %v1225 = vld [vmem:[%s1186 + $0x130] sm:$0xff]
    %v1226 = vld [vmem:[%s1186 + $0x138] sm:$0xff]
    %v1227 = vld [vmem:[%s1186 + $0x140] sm:$0xff]
    %v1228 = vld [vmem:[%s1186 + $0x148] sm:$0xff]
    %v1229 = vld [vmem:[%s1186 + $0x150] sm:$0xff]
    %v1230 = vld [vmem:[%s1186 + $0x158] sm:$0xff]
    %v1231 = vld [vmem:[%s1186 + $0x160] sm:$0xff]
    %v1232 = vld [vmem:[%s1186 + $0x168] sm:$0xff]
    %v1233 = vld [vmem:[%s1186 + $0x170] sm:$0xff]
    %v1234 = vld [vmem:[%s1186 + $0x178] sm:$0xff]
    %v1235 = vld [vmem:[%s1186 + $0x180] sm:$0xff]
    %v1236 = vld [vmem:[%s1186 + $0x188] sm:$0xff]
    %v1237 = vld [vmem:[%s1186 + $0x190] sm:$0xff]
    %v1238 = vld [vmem:[%s1186 + $0x198] sm:$0xff]
    %v1239 = vld [vmem:[%s1186 + $0x1a0] sm:$0xff]
    %v1240 = vld [vmem:[%s1186 + $0x1a8] sm:$0xff]
    %v1241 = vld [vmem:[%s1186 + $0x1b0] sm:$0xff]
    %v1242 = vld [vmem:[%s1186 + $0x1b8] sm:$0xff]
    %v1243 = vld [vmem:[%s1186 + $0x1c0] sm:$0xff]
    %v1244 = vld [vmem:[%s1186 + $0x1c8] sm:$0xff]
    %v1245 = vld [vmem:[%s1186 + $0x1d0] sm:$0xff]
    %v1246 = vld [vmem:[%s1186 + $0x1d8] sm:$0xff]
    %v1247 = vld [vmem:[%s1186 + $0x1e0] sm:$0xff]
    %v1248 = vld [vmem:[%s1186 + $0x1e8] sm:$0xff]
    %v1249 = vld [vmem:[%s1186 + $0x1f0] sm:$0xff]
    %v1250 = vld [vmem:[%s1186 + $0x1f8] sm:$0xff]
    %s1251 = scalar_lea.vmem [#allocation7], 2560
    %v1252 = vld [vmem:[%s1251] sm:$0xff]
    %v1253 = vld [vmem:[%s1251 + $0x8] sm:$0xff]
    %v1254 = vld [vmem:[%s1251 + $0x10] sm:$0xff]
    %v1255 = vld [vmem:[%s1251 + $0x18] sm:$0xff]
    %v1256 = vld [vmem:[%s1251 + $0x20] sm:$0xff]
    %v1257 = vld [vmem:[%s1251 + $0x28] sm:$0xff]
    %v1258 = vld [vmem:[%s1251 + $0x30] sm:$0xff]
    %v1259 = vld [vmem:[%s1251 + $0x38] sm:$0xff]
    %v1260 = vld [vmem:[%s1251 + $0x40] sm:$0xff]
    %v1261 = vld [vmem:[%s1251 + $0x48] sm:$0xff]
    %v1262 = vld [vmem:[%s1251 + $0x50] sm:$0xff]
    %v1263 = vld [vmem:[%s1251 + $0x58] sm:$0xff]
    %v1264 = vld [vmem:[%s1251 + $0x60] sm:$0xff]
    %v1265 = vld [vmem:[%s1251 + $0x68] sm:$0xff]
    %v1266 = vld [vmem:[%s1251 + $0x70] sm:$0xff]
    %v1267 = vld [vmem:[%s1251 + $0x78] sm:$0xff]
    %v1268 = vld [vmem:[%s1251 + $0x80] sm:$0xff]
    %v1269 = vld [vmem:[%s1251 + $0x88] sm:$0xff]
    %v1270 = vld [vmem:[%s1251 + $0x90] sm:$0xff]
    %v1271 = vld [vmem:[%s1251 + $0x98] sm:$0xff]
    %v1272 = vld [vmem:[%s1251 + $0xa0] sm:$0xff]
    %v1273 = vld [vmem:[%s1251 + $0xa8] sm:$0xff]
    %v1274 = vld [vmem:[%s1251 + $0xb0] sm:$0xff]
    %v1275 = vld [vmem:[%s1251 + $0xb8] sm:$0xff]
    %v1276 = vld [vmem:[%s1251 + $0xc0] sm:$0xff]
    %v1277 = vld [vmem:[%s1251 + $0xc8] sm:$0xff]
    %v1278 = vld [vmem:[%s1251 + $0xd0] sm:$0xff]
    %v1279 = vld [vmem:[%s1251 + $0xd8] sm:$0xff]
    %v1280 = vld [vmem:[%s1251 + $0xe0] sm:$0xff]
    %v1281 = vld [vmem:[%s1251 + $0xe8] sm:$0xff]
    %v1282 = vld [vmem:[%s1251 + $0xf0] sm:$0xff]
    %v1283 = vld [vmem:[%s1251 + $0xf8] sm:$0xff]
    %v1284 = vld [vmem:[%s1251 + $0x100] sm:$0xff]
    %v1285 = vld [vmem:[%s1251 + $0x108] sm:$0xff]
    %v1286 = vld [vmem:[%s1251 + $0x110] sm:$0xff]
    %v1287 = vld [vmem:[%s1251 + $0x118] sm:$0xff]
    %v1288 = vld [vmem:[%s1251 + $0x120] sm:$0xff]
    %v1289 = vld [vmem:[%s1251 + $0x128] sm:$0xff]
    %v1290 = vld [vmem:[%s1251 + $0x130] sm:$0xff]
    %v1291 = vld [vmem:[%s1251 + $0x138] sm:$0xff]
    %v1292 = vld [vmem:[%s1251 + $0x140] sm:$0xff]
    %v1293 = vld [vmem:[%s1251 + $0x148] sm:$0xff]
    %v1294 = vld [vmem:[%s1251 + $0x150] sm:$0xff]
    %v1295 = vld [vmem:[%s1251 + $0x158] sm:$0xff]
    %v1296 = vld [vmem:[%s1251 + $0x160] sm:$0xff]
    %v1297 = vld [vmem:[%s1251 + $0x168] sm:$0xff]
    %v1298 = vld [vmem:[%s1251 + $0x170] sm:$0xff]
    %v1299 = vld [vmem:[%s1251 + $0x178] sm:$0xff]
    %v1300 = vld [vmem:[%s1251 + $0x180] sm:$0xff]
    %v1301 = vld [vmem:[%s1251 + $0x188] sm:$0xff]
    %v1302 = vld [vmem:[%s1251 + $0x190] sm:$0xff]
    %v1303 = vld [vmem:[%s1251 + $0x198] sm:$0xff]
    %v1304 = vld [vmem:[%s1251 + $0x1a0] sm:$0xff]
    %v1305 = vld [vmem:[%s1251 + $0x1a8] sm:$0xff]
    %v1306 = vld [vmem:[%s1251 + $0x1b0] sm:$0xff]
    %v1307 = vld [vmem:[%s1251 + $0x1b8] sm:$0xff]
    %v1308 = vld [vmem:[%s1251 + $0x1c0] sm:$0xff]
    %v1309 = vld [vmem:[%s1251 + $0x1c8] sm:$0xff]
    %v1310 = vld [vmem:[%s1251 + $0x1d0] sm:$0xff]
    %v1311 = vld [vmem:[%s1251 + $0x1d8] sm:$0xff]
    %v1312 = vld [vmem:[%s1251 + $0x1e0] sm:$0xff]
    %v1313 = vld [vmem:[%s1251 + $0x1e8] sm:$0xff]
    %v1314 = vld [vmem:[%s1251 + $0x1f0] sm:$0xff]
    %v1315 = vld [vmem:[%s1251 + $0x1f8] sm:$0xff]
    %s1316 = scalar_lea.vmem [#allocation8], 2
    %v1317 = vld [vmem:[%s1316] sm:$0x3]
    %v1318 = vrot.slane %v1113, 7
    %v1319 = vrot.slane %v1114, 7
    %v1320 = vrot.slane %v1115, 7
    %v1321 = vrot.slane %v1116, 7
    %v1322 = vrot.slane %v1117, 7
    %v1323 = vrot.slane %v1118, 7
    %v1324 = vrot.slane %v1119, 7
    %v1325 = vrot.slane %v1120, 7
    %v1326 = vsel %vm208, %v1322, %v1324
    %v1327 = vsel %vm208, %v1323, %v1325
    %v1328 = vsel %vm208, %v1320, %v1322
    %v1329 = vsel %vm208, %v1321, %v1323
    %v1330 = vsel %vm208, %v1318, %v1320
    %v1331 = vsel %vm208, %v1319, %v1321
    %v1332 = vsel %vm208, %v1324, %v1318
    %v1333 = vsel %vm208, %v1325, %v1319
    %v1334 = vrot.slane %v1113, 1
    %v1335 = vrot.slane %v1114, 1
    %v1336 = vrot.slane %v1115, 1
    %v1337 = vrot.slane %v1116, 1
    %v1338 = vrot.slane %v1117, 1
    %v1339 = vrot.slane %v1118, 1
    %v1340 = vrot.slane %v1119, 1
    %v1341 = vrot.slane %v1120, 1
    %v1342 = vsel %vm217, %v1338, %v1340
    %v1343 = vsel %vm217, %v1339, %v1341
    %v1344 = vsel %vm217, %v1336, %v1338
    %v1345 = vsel %vm217, %v1337, %v1339
    %v1346 = vsel %vm217, %v1334, %v1336
    %v1347 = vsel %vm217, %v1335, %v1337
    %v1348 = vsel %vm217, %v1340, %v1334
    %v1349 = vsel %vm217, %v1341, %v1335
    %1350 = vmatpush.msra.mxu0 %v1217
    %1351 = vmatpush.msra.mxu0 %v1215
    %1352 = vmatpush.msra.mxu0 %v1213
    %1353 = vmatpush.msra.mxu0 %v1211
    %1354 = vmatpush.msra.mxu0 %v1209
    %1355 = vmatpush.msra.mxu0 %v1207
    %1356 = vmatpush.msra.mxu0 %v1205
    %1357 = vmatpush.msra.mxu0 %v1203
    %1358 = vmatpush.msra.mxu0 %v1201
    %1359 = vmatpush.msra.mxu0 %v1199
    %1360 = vmatpush.msra.mxu0 %v1197
    %1361 = vmatpush.msra.mxu0 %v1195
    %1362 = vmatpush.msra.mxu0 %v1193
    %1363 = vmatpush.msra.mxu0 %v1191
    %1364 = vmatpush.msra.mxu0 %v1189
    %1365 = vmatpush.msra.mxu0 %v1187
    %1366 = vmatmul.f32.gmra.mxu0 %v1113
    %v1367 = vpop.f32.mrf.mxu0
    %v1368 = vadd.f32 0.0, %v1367
    %1369 = vmatmul.f32.gmra.mxu0 %v1115
    %v1370 = vpop.f32.mrf.mxu0
    %v1371 = vadd.f32 0.0, %v1370
    %1372 = vmatmul.f32.gmra.mxu0 %v1117
    %v1373 = vpop.f32.mrf.mxu0
    %v1374 = vadd.f32 0.0, %v1373
    %1375 = vmatmul.f32.gmra.mxu0 %v1119
    %v1376 = vpop.f32.mrf.mxu0
    %v1377 = vadd.f32 0.0, %v1376
    %1378 = vdwg.mxu0
    %1379 = vmatpush.msra.mxu0 %v1249
    %1380 = vmatpush.msra.mxu0 %v1247
    %1381 = vmatpush.msra.mxu0 %v1245
    %1382 = vmatpush.msra.mxu0 %v1243
    %1383 = vmatpush.msra.mxu0 %v1241
    %1384 = vmatpush.msra.mxu0 %v1239
    %1385 = vmatpush.msra.mxu0 %v1237
    %1386 = vmatpush.msra.mxu0 %v1235
    %1387 = vmatpush.msra.mxu0 %v1233
    %1388 = vmatpush.msra.mxu0 %v1231
    %1389 = vmatpush.msra.mxu0 %v1229
    %1390 = vmatpush.msra.mxu0 %v1227
    %1391 = vmatpush.msra.mxu0 %v1225
    %1392 = vmatpush.msra.mxu0 %v1223
    %1393 = vmatpush.msra.mxu0 %v1221
    %1394 = vmatpush.msra.mxu0 %v1219
    %1395 = vmatmul.f32.gmra.mxu0 %v1114
    %v1396 = vpop.f32.mrf.mxu0
    %v1397 = vadd.f32 %v1368, %v1396
    %1398 = vmatmul.f32.gmra.mxu0 %v1116
    %v1399 = vpop.f32.mrf.mxu0
    %v1400 = vadd.f32 %v1371, %v1399
    %1401 = vmatmul.f32.gmra.mxu0 %v1118
    %v1402 = vpop.f32.mrf.mxu0
    %v1403 = vadd.f32 %v1374, %v1402
    %1404 = vmatmul.f32.gmra.mxu0 %v1120
    %v1405 = vpop.f32.mrf.mxu0
    %v1406 = vadd.f32 %v1377, %v1405
    %1407 = vdwg.mxu0
    %1408 = vmatpush.msra.mxu0 %v1218
    %1409 = vmatpush.msra.mxu0 %v1216
    %1410 = vmatpush.msra.mxu0 %v1214
    %1411 = vmatpush.msra.mxu0 %v1212
    %1412 = vmatpush.msra.mxu0 %v1210
    %1413 = vmatpush.msra.mxu0 %v1208
    %1414 = vmatpush.msra.mxu0 %v1206
    %1415 = vmatpush.msra.mxu0 %v1204
    %1416 = vmatpush.msra.mxu0 %v1202
    %1417 = vmatpush.msra.mxu0 %v1200
    %1418 = vmatpush.msra.mxu0 %v1198
    %1419 = vmatpush.msra.mxu0 %v1196
    %1420 = vmatpush.msra.mxu0 %v1194
    %1421 = vmatpush.msra.mxu0 %v1192
    %1422 = vmatpush.msra.mxu0 %v1190
    %1423 = vmatpush.msra.mxu0 %v1188
    %1424 = vmatmul.f32.gmra.mxu0 %v1113
    %v1425 = vpop.f32.mrf.mxu0
    %v1426 = vadd.f32 0.0, %v1425
    %1427 = vmatmul.f32.gmra.mxu0 %v1115
    %v1428 = vpop.f32.mrf.mxu0
    %v1429 = vadd.f32 0.0, %v1428
    %1430 = vmatmul.f32.gmra.mxu0 %v1117
    %v1431 = vpop.f32.mrf.mxu0
    %v1432 = vadd.f32 0.0, %v1431
    %1433 = vmatmul.f32.gmra.mxu0 %v1119
    %v1434 = vpop.f32.mrf.mxu0
    %v1435 = vadd.f32 0.0, %v1434
    %1436 = vdwg.mxu0
    %1437 = vmatpush.msra.mxu0 %v1250
    %1438 = vmatpush.msra.mxu0 %v1248
    %1439 = vmatpush.msra.mxu0 %v1246
    %1440 = vmatpush.msra.mxu0 %v1244
    %1441 = vmatpush.msra.mxu0 %v1242
    %1442 = vmatpush.msra.mxu0 %v1240
    %1443 = vmatpush.msra.mxu0 %v1238
    %1444 = vmatpush.msra.mxu0 %v1236
    %1445 = vmatpush.msra.mxu0 %v1234
    %1446 = vmatpush.msra.mxu0 %v1232
    %1447 = vmatpush.msra.mxu0 %v1230
    %1448 = vmatpush.msra.mxu0 %v1228
    %1449 = vmatpush.msra.mxu0 %v1226
    %1450 = vmatpush.msra.mxu0 %v1224
    %1451 = vmatpush.msra.mxu0 %v1222
    %1452 = vmatpush.msra.mxu0 %v1220
    %1453 = vmatmul.f32.gmra.mxu0 %v1114
    %v1454 = vpop.f32.mrf.mxu0
    %v1455 = vadd.f32 %v1426, %v1454
    %1456 = vmatmul.f32.gmra.mxu0 %v1116
    %v1457 = vpop.f32.mrf.mxu0
    %v1458 = vadd.f32 %v1429, %v1457
    %1459 = vmatmul.f32.gmra.mxu0 %v1118
    %v1460 = vpop.f32.mrf.mxu0
    %v1461 = vadd.f32 %v1432, %v1460
    %1462 = vmatmul.f32.gmra.mxu0 %v1120
    %v1463 = vpop.f32.mrf.mxu0
    %v1464 = vadd.f32 %v1435, %v1463
    %1465 = vdwg.mxu0
    %1466 = vmatpush.msra.mxu0 %v1152
    %1467 = vmatpush.msra.mxu0 %v1150
    %1468 = vmatpush.msra.mxu0 %v1148
    %1469 = vmatpush.msra.mxu0 %v1146
    %1470 = vmatpush.msra.mxu0 %v1144
    %1471 = vmatpush.msra.mxu0 %v1142
    %1472 = vmatpush.msra.mxu0 %v1140
    %1473 = vmatpush.msra.mxu0 %v1138
    %1474 = vmatpush.msra.mxu0 %v1136
    %1475 = vmatpush.msra.mxu0 %v1134
    %1476 = vmatpush.msra.mxu0 %v1132
    %1477 = vmatpush.msra.mxu0 %v1130
    %1478 = vmatpush.msra.mxu0 %v1128
    %1479 = vmatpush.msra.mxu0 %v1126
    %1480 = vmatpush.msra.mxu0 %v1124
    %1481 = vmatpush.msra.mxu0 %v1122
    %1482 = vmatmul.f32.gmra.mxu0 %v1332
    %v1483 = vpop.f32.mrf.mxu0
    %v1484 = vadd.f32 %v1397, %v1483
    %1485 = vmatmul.f32.gmra.mxu0 %v1330
    %v1486 = vpop.f32.mrf.mxu0
    %v1487 = vadd.f32 %v1400, %v1486
    %1488 = vmatmul.f32.gmra.mxu0 %v1328
    %v1489 = vpop.f32.mrf.mxu0
    %v1490 = vadd.f32 %v1403, %v1489
    %1491 = vmatmul.f32.gmra.mxu0 %v1326
    %v1492 = vpop.f32.mrf.mxu0
    %v1493 = vadd.f32 %v1406, %v1492
    %1494 = vdwg.mxu0
    %1495 = vmatpush.msra.mxu0 %v1184
    %1496 = vmatpush.msra.mxu0 %v1182
    %1497 = vmatpush.msra.mxu0 %v1180
    %1498 = vmatpush.msra.mxu0 %v1178
    %1499 = vmatpush.msra.mxu0 %v1176
    %1500 = vmatpush.msra.mxu0 %v1174
    %1501 = vmatpush.msra.mxu0 %v1172
    %1502 = vmatpush.msra.mxu0 %v1170
    %1503 = vmatpush.msra.mxu0 %v1168
    %1504 = vmatpush.msra.mxu0 %v1166
    %1505 = vmatpush.msra.mxu0 %v1164
    %1506 = vmatpush.msra.mxu0 %v1162
    %1507 = vmatpush.msra.mxu0 %v1160
    %1508 = vmatpush.msra.mxu0 %v1158
    %1509 = vmatpush.msra.mxu0 %v1156
    %1510 = vmatpush.msra.mxu0 %v1154
    %1511 = vmatmul.f32.gmra.mxu0 %v1333
    %v1512 = vpop.f32.mrf.mxu0
    %v1513 = vadd.f32 %v1484, %v1512
    %1514 = vmatmul.f32.gmra.mxu0 %v1331
    %v1515 = vpop.f32.mrf.mxu0
    %v1516 = vadd.f32 %v1487, %v1515
    %1517 = vmatmul.f32.gmra.mxu0 %v1329
    %v1518 = vpop.f32.mrf.mxu0
    %v1519 = vadd.f32 %v1490, %v1518
    %1520 = vmatmul.f32.gmra.mxu0 %v1327
    %v1521 = vpop.f32.mrf.mxu0
    %v1522 = vadd.f32 %v1493, %v1521
    %1523 = vdwg.mxu0
    %1524 = vmatpush.msra.mxu0 %v1153
    %1525 = vmatpush.msra.mxu0 %v1151
    %1526 = vmatpush.msra.mxu0 %v1149
    %1527 = vmatpush.msra.mxu0 %v1147
    %1528 = vmatpush.msra.mxu0 %v1145
    %1529 = vmatpush.msra.mxu0 %v1143
    %1530 = vmatpush.msra.mxu0 %v1141
    %1531 = vmatpush.msra.mxu0 %v1139
    %1532 = vmatpush.msra.mxu0 %v1137
    %1533 = vmatpush.msra.mxu0 %v1135
    %1534 = vmatpush.msra.mxu0 %v1133
    %1535 = vmatpush.msra.mxu0 %v1131
    %1536 = vmatpush.msra.mxu0 %v1129
    %1537 = vmatpush.msra.mxu0 %v1127
    %1538 = vmatpush.msra.mxu0 %v1125
    %1539 = vmatpush.msra.mxu0 %v1123
    %1540 = vmatmul.f32.gmra.mxu0 %v1332
    %v1541 = vpop.f32.mrf.mxu0
    %v1542 = vadd.f32 %v1455, %v1541
    %1543 = vmatmul.f32.gmra.mxu0 %v1330
    %v1544 = vpop.f32.mrf.mxu0
    %v1545 = vadd.f32 %v1458, %v1544
    %1546 = vmatmul.f32.gmra.mxu0 %v1328
    %v1547 = vpop.f32.mrf.mxu0
    %v1548 = vadd.f32 %v1461, %v1547
    %1549 = vmatmul.f32.gmra.mxu0 %v1326
    %v1550 = vpop.f32.mrf.mxu0
    %v1551 = vadd.f32 %v1464, %v1550
    %1552 = vdwg.mxu0
    %1553 = vmatpush.msra.mxu0 %v1185
    %1554 = vmatpush.msra.mxu0 %v1183
    %1555 = vmatpush.msra.mxu0 %v1181
    %1556 = vmatpush.msra.mxu0 %v1179
    %1557 = vmatpush.msra.mxu0 %v1177
    %1558 = vmatpush.msra.mxu0 %v1175
    %1559 = vmatpush.msra.mxu0 %v1173
    %1560 = vmatpush.msra.mxu0 %v1171
    %1561 = vmatpush.msra.mxu0 %v1169
    %1562 = vmatpush.msra.mxu0 %v1167
    %1563 = vmatpush.msra.mxu0 %v1165
    %1564 = vmatpush.msra.mxu0 %v1163
    %1565 = vmatpush.msra.mxu0 %v1161
    %1566 = vmatpush.msra.mxu0 %v1159
    %1567 = vmatpush.msra.mxu0 %v1157
    %1568 = vmatpush.msra.mxu0 %v1155
    %1569 = vmatmul.f32.gmra.mxu0 %v1333
    %v1570 = vpop.f32.mrf.mxu0
    %v1571 = vadd.f32 %v1542, %v1570
    %1572 = vmatmul.f32.gmra.mxu0 %v1331
    %v1573 = vpop.f32.mrf.mxu0
    %v1574 = vadd.f32 %v1545, %v1573
    %1575 = vmatmul.f32.gmra.mxu0 %v1329
    %v1576 = vpop.f32.mrf.mxu0
    %v1577 = vadd.f32 %v1548, %v1576
    %1578 = vmatmul.f32.gmra.mxu0 %v1327
    %v1579 = vpop.f32.mrf.mxu0
    %v1580 = vadd.f32 %v1551, %v1579
    %1581 = vdwg.mxu0
    %1582 = vmatpush.msra.mxu0 %v1282
    %1583 = vmatpush.msra.mxu0 %v1280
    %1584 = vmatpush.msra.mxu0 %v1278
    %1585 = vmatpush.msra.mxu0 %v1276
    %1586 = vmatpush.msra.mxu0 %v1274
    %1587 = vmatpush.msra.mxu0 %v1272
    %1588 = vmatpush.msra.mxu0 %v1270
    %1589 = vmatpush.msra.mxu0 %v1268
    %1590 = vmatpush.msra.mxu0 %v1266
    %1591 = vmatpush.msra.mxu0 %v1264
    %1592 = vmatpush.msra.mxu0 %v1262
    %1593 = vmatpush.msra.mxu0 %v1260
    %1594 = vmatpush.msra.mxu0 %v1258
    %1595 = vmatpush.msra.mxu0 %v1256
    %1596 = vmatpush.msra.mxu0 %v1254
    %1597 = vmatpush.msra.mxu0 %v1252
    %1598 = vmatmul.f32.gmra.mxu0 %v1346
    %v1599 = vpop.f32.mrf.mxu0
    %v1600 = vadd.f32 0.0, %v1599
    %1601 = vmatmul.f32.gmra.mxu0 %v1344
    %v1602 = vpop.f32.mrf.mxu0
    %v1603 = vadd.f32 0.0, %v1602
    %1604 = vmatmul.f32.gmra.mxu0 %v1342
    %v1605 = vpop.f32.mrf.mxu0
    %v1606 = vadd.f32 0.0, %v1605
    %1607 = vmatmul.f32.gmra.mxu0 %v1348
    %v1608 = vpop.f32.mrf.mxu0
    %v1609 = vadd.f32 0.0, %v1608
    %1610 = vdwg.mxu0
    %1611 = vmatpush.msra.mxu0 %v1314
    %1612 = vmatpush.msra.mxu0 %v1312
    %1613 = vmatpush.msra.mxu0 %v1310
    %1614 = vmatpush.msra.mxu0 %v1308
    %1615 = vmatpush.msra.mxu0 %v1306
    %1616 = vmatpush.msra.mxu0 %v1304
    %1617 = vmatpush.msra.mxu0 %v1302
    %1618 = vmatpush.msra.mxu0 %v1300
    %1619 = vmatpush.msra.mxu0 %v1298
    %1620 = vmatpush.msra.mxu0 %v1296
    %1621 = vmatpush.msra.mxu0 %v1294
    %1622 = vmatpush.msra.mxu0 %v1292
    %1623 = vmatpush.msra.mxu0 %v1290
    %1624 = vmatpush.msra.mxu0 %v1288
    %1625 = vmatpush.msra.mxu0 %v1286
    %1626 = vmatpush.msra.mxu0 %v1284
    %1627 = vmatmul.f32.gmra.mxu0 %v1347
    %v1628 = vpop.f32.mrf.mxu0
    %v1629 = vadd.f32 %v1600, %v1628
    %1630 = vmatmul.f32.gmra.mxu0 %v1345
    %v1631 = vpop.f32.mrf.mxu0
    %v1632 = vadd.f32 %v1603, %v1631
    %1633 = vmatmul.f32.gmra.mxu0 %v1343
    %v1634 = vpop.f32.mrf.mxu0
    %v1635 = vadd.f32 %v1606, %v1634
    %1636 = vmatmul.f32.gmra.mxu0 %v1349
    %v1637 = vpop.f32.mrf.mxu0
    %v1638 = vadd.f32 %v1609, %v1637
    %1639 = vdwg.mxu0
    %1640 = vmatpush.msra.mxu0 %v1283
    %1641 = vmatpush.msra.mxu0 %v1281
    %1642 = vmatpush.msra.mxu0 %v1279
    %1643 = vmatpush.msra.mxu0 %v1277
    %1644 = vmatpush.msra.mxu0 %v1275
    %1645 = vmatpush.msra.mxu0 %v1273
    %1646 = vmatpush.msra.mxu0 %v1271
    %1647 = vmatpush.msra.mxu0 %v1269
    %1648 = vmatpush.msra.mxu0 %v1267
    %1649 = vmatpush.msra.mxu0 %v1265
    %1650 = vmatpush.msra.mxu0 %v1263
    %1651 = vmatpush.msra.mxu0 %v1261
    %1652 = vmatpush.msra.mxu0 %v1259
    %1653 = vmatpush.msra.mxu0 %v1257
    %1654 = vmatpush.msra.mxu0 %v1255
    %1655 = vmatpush.msra.mxu0 %v1253
    %1656 = vmatmul.f32.gmra.mxu0 %v1346
    %v1657 = vpop.f32.mrf.mxu0
    %v1658 = vadd.f32 0.0, %v1657
    %1659 = vmatmul.f32.gmra.mxu0 %v1344
    %v1660 = vpop.f32.mrf.mxu0
    %v1661 = vadd.f32 0.0, %v1660
    %1662 = vmatmul.f32.gmra.mxu0 %v1342
    %v1663 = vpop.f32.mrf.mxu0
    %v1664 = vadd.f32 0.0, %v1663
    %1665 = vmatmul.f32.gmra.mxu0 %v1348
    %v1666 = vpop.f32.mrf.mxu0
    %v1667 = vadd.f32 0.0, %v1666
    %1668 = vdwg.mxu0
    %1669 = vmatpush.msra.mxu0 %v1315
    %1670 = vmatpush.msra.mxu0 %v1313
    %1671 = vmatpush.msra.mxu0 %v1311
    %1672 = vmatpush.msra.mxu0 %v1309
    %1673 = vmatpush.msra.mxu0 %v1307
    %1674 = vmatpush.msra.mxu0 %v1305
    %1675 = vmatpush.msra.mxu0 %v1303
    %1676 = vmatpush.msra.mxu0 %v1301
    %1677 = vmatpush.msra.mxu0 %v1299
    %1678 = vmatpush.msra.mxu0 %v1297
    %1679 = vmatpush.msra.mxu0 %v1295
    %1680 = vmatpush.msra.mxu0 %v1293
    %1681 = vmatpush.msra.mxu0 %v1291
    %1682 = vmatpush.msra.mxu0 %v1289
    %1683 = vmatpush.msra.mxu0 %v1287
    %1684 = vmatpush.msra.mxu0 %v1285
    %1685 = vmatmul.f32.gmra.mxu0 %v1347
    %v1686 = vpop.f32.mrf.mxu0
    %v1687 = vadd.f32 %v1658, %v1686
    %1688 = vmatmul.f32.gmra.mxu0 %v1345
    %v1689 = vpop.f32.mrf.mxu0
    %v1690 = vadd.f32 %v1661, %v1689
    %1691 = vmatmul.f32.gmra.mxu0 %v1343
    %v1692 = vpop.f32.mrf.mxu0
    %v1693 = vadd.f32 %v1664, %v1692
    %1694 = vmatmul.f32.gmra.mxu0 %v1349
    %v1695 = vpop.f32.mrf.mxu0
    %v1696 = vadd.f32 %v1667, %v1695
    %1697 = vdwg.mxu0
    %v1698 = vadd.f32 %v1513, %v1629
    %v1699 = vadd.f32 %v1571, %v1687
    %v1700 = vadd.f32 %v1516, %v1632
    %v1701 = vadd.f32 %v1574, %v1690
    %v1702 = vadd.f32 %v1519, %v1635
    %v1703 = vadd.f32 %v1577, %v1693
    %v1704 = vadd.f32 %v1522, %v1638
    %v1705 = vadd.f32 %v1580, %v1696
    %v1707 = vperm.slane %v1317, 0
    %v1708 = vperm.slane %v1317, 1
    %v1711 = vadd.f32 %v1698, %v1707
    %v1712 = vadd.f32 %v1699, %v1708
    %v1713 = vadd.f32 %v1700, %v1707
    %v1714 = vadd.f32 %v1701, %v1708
    %v1715 = vadd.f32 %v1702, %v1707
    %v1716 = vadd.f32 %v1703, %v1708
    %v1717 = vadd.f32 %v1704, %v1707
    %v1718 = vadd.f32 %v1705, %v1708
    %v1719 = vmax.f32 %v1711, 0.0
    %v1720 = vmax.f32 %v1712, 0.0
    %v1721 = vmax.f32 %v1713, 0.0
    %v1722 = vmax.f32 %v1714, 0.0
    %v1723 = vmax.f32 %v1715, 0.0
    %v1724 = vmax.f32 %v1716, 0.0
    %v1725 = vmax.f32 %v1717, 0.0
    %v1726 = vmax.f32 %v1718, 0.0
    %v1727 = vmul.f32 %v1719, %v484
    %v1728 = vmul.f32 %v1720, %v484
    %v1729 = vmul.f32 %v1721, %v489
    %v1730 = vmul.f32 %v1722, %v489
    %v1731 = vmul.f32 %v1723, %v494
    %v1732 = vmul.f32 %v1724, %v494
    %v1733 = vmul.f32 %v1725, %v499
    %v1734 = vmul.f32 %v1726, %v499
    %s1735 = scalar_lea.vmem [#allocation7], 3072
    %v1736 = vld [vmem:[%s1735] sm:$0xff]
    %v1737 = vld [vmem:[%s1735 + $0x8] sm:$0xff]
    %v1738 = vld [vmem:[%s1735 + $0x10] sm:$0xff]
    %v1739 = vld [vmem:[%s1735 + $0x18] sm:$0xff]
    %v1740 = vld [vmem:[%s1735 + $0x20] sm:$0xff]
    %v1741 = vld [vmem:[%s1735 + $0x28] sm:$0xff]
    %v1742 = vld [vmem:[%s1735 + $0x30] sm:$0xff]
    %v1743 = vld [vmem:[%s1735 + $0x38] sm:$0xff]
    %v1744 = vld [vmem:[%s1735 + $0x40] sm:$0xff]
    %v1745 = vld [vmem:[%s1735 + $0x48] sm:$0xff]
    %v1746 = vld [vmem:[%s1735 + $0x50] sm:$0xff]
    %v1747 = vld [vmem:[%s1735 + $0x58] sm:$0xff]
    %v1748 = vld [vmem:[%s1735 + $0x60] sm:$0xff]
    %v1749 = vld [vmem:[%s1735 + $0x68] sm:$0xff]
    %v1750 = vld [vmem:[%s1735 + $0x70] sm:$0xff]
    %v1751 = vld [vmem:[%s1735 + $0x78] sm:$0xff]
    %v1752 = vld [vmem:[%s1735 + $0x80] sm:$0xff]
    %v1753 = vld [vmem:[%s1735 + $0x88] sm:$0xff]
    %v1754 = vld [vmem:[%s1735 + $0x90] sm:$0xff]
    %v1755 = vld [vmem:[%s1735 + $0x98] sm:$0xff]
    %v1756 = vld [vmem:[%s1735 + $0xa0] sm:$0xff]
    %v1757 = vld [vmem:[%s1735 + $0xa8] sm:$0xff]
    %v1758 = vld [vmem:[%s1735 + $0xb0] sm:$0xff]
    %v1759 = vld [vmem:[%s1735 + $0xb8] sm:$0xff]
    %v1760 = vld [vmem:[%s1735 + $0xc0] sm:$0xff]
    %v1761 = vld [vmem:[%s1735 + $0xc8] sm:$0xff]
    %v1762 = vld [vmem:[%s1735 + $0xd0] sm:$0xff]
    %v1763 = vld [vmem:[%s1735 + $0xd8] sm:$0xff]
    %v1764 = vld [vmem:[%s1735 + $0xe0] sm:$0xff]
    %v1765 = vld [vmem:[%s1735 + $0xe8] sm:$0xff]
    %v1766 = vld [vmem:[%s1735 + $0xf0] sm:$0xff]
    %v1767 = vld [vmem:[%s1735 + $0xf8] sm:$0xff]
    %v1768 = vld [vmem:[%s1735 + $0x100] sm:$0xff]
    %v1769 = vld [vmem:[%s1735 + $0x108] sm:$0xff]
    %v1770 = vld [vmem:[%s1735 + $0x110] sm:$0xff]
    %v1771 = vld [vmem:[%s1735 + $0x118] sm:$0xff]
    %v1772 = vld [vmem:[%s1735 + $0x120] sm:$0xff]
    %v1773 = vld [vmem:[%s1735 + $0x128] sm:$0xff]
    %v1774 = vld [vmem:[%s1735 + $0x130] sm:$0xff]
    %v1775 = vld [vmem:[%s1735 + $0x138] sm:$0xff]
    %v1776 = vld [vmem:[%s1735 + $0x140] sm:$0xff]
    %v1777 = vld [vmem:[%s1735 + $0x148] sm:$0xff]
    %v1778 = vld [vmem:[%s1735 + $0x150] sm:$0xff]
    %v1779 = vld [vmem:[%s1735 + $0x158] sm:$0xff]
    %v1780 = vld [vmem:[%s1735 + $0x160] sm:$0xff]
    %v1781 = vld [vmem:[%s1735 + $0x168] sm:$0xff]
    %v1782 = vld [vmem:[%s1735 + $0x170] sm:$0xff]
    %v1783 = vld [vmem:[%s1735 + $0x178] sm:$0xff]
    %v1784 = vld [vmem:[%s1735 + $0x180] sm:$0xff]
    %v1785 = vld [vmem:[%s1735 + $0x188] sm:$0xff]
    %v1786 = vld [vmem:[%s1735 + $0x190] sm:$0xff]
    %v1787 = vld [vmem:[%s1735 + $0x198] sm:$0xff]
    %v1788 = vld [vmem:[%s1735 + $0x1a0] sm:$0xff]
    %v1789 = vld [vmem:[%s1735 + $0x1a8] sm:$0xff]
    %v1790 = vld [vmem:[%s1735 + $0x1b0] sm:$0xff]
    %v1791 = vld [vmem:[%s1735 + $0x1b8] sm:$0xff]
    %v1792 = vld [vmem:[%s1735 + $0x1c0] sm:$0xff]
    %v1793 = vld [vmem:[%s1735 + $0x1c8] sm:$0xff]
    %v1794 = vld [vmem:[%s1735 + $0x1d0] sm:$0xff]
    %v1795 = vld [vmem:[%s1735 + $0x1d8] sm:$0xff]
    %v1796 = vld [vmem:[%s1735 + $0x1e0] sm:$0xff]
    %v1797 = vld [vmem:[%s1735 + $0x1e8] sm:$0xff]
    %v1798 = vld [vmem:[%s1735 + $0x1f0] sm:$0xff]
    %v1799 = vld [vmem:[%s1735 + $0x1f8] sm:$0xff]
    %s1800 = scalar_lea.vmem [#allocation7], 3584
    %v1801 = vld [vmem:[%s1800] sm:$0xff]
    %v1802 = vld [vmem:[%s1800 + $0x8] sm:$0xff]
    %v1803 = vld [vmem:[%s1800 + $0x10] sm:$0xff]
    %v1804 = vld [vmem:[%s1800 + $0x18] sm:$0xff]
    %v1805 = vld [vmem:[%s1800 + $0x20] sm:$0xff]
    %v1806 = vld [vmem:[%s1800 + $0x28] sm:$0xff]
    %v1807 = vld [vmem:[%s1800 + $0x30] sm:$0xff]
    %v1808 = vld [vmem:[%s1800 + $0x38] sm:$0xff]
    %v1809 = vld [vmem:[%s1800 + $0x40] sm:$0xff]
    %v1810 = vld [vmem:[%s1800 + $0x48] sm:$0xff]
    %v1811 = vld [vmem:[%s1800 + $0x50] sm:$0xff]
    %v1812 = vld [vmem:[%s1800 + $0x58] sm:$0xff]
    %v1813 = vld [vmem:[%s1800 + $0x60] sm:$0xff]
    %v1814 = vld [vmem:[%s1800 + $0x68] sm:$0xff]
    %v1815 = vld [vmem:[%s1800 + $0x70] sm:$0xff]
    %v1816 = vld [vmem:[%s1800 + $0x78] sm:$0xff]
    %v1817 = vld [vmem:[%s1800 + $0x80] sm:$0xff]
    %v1818 = vld [vmem:[%s1800 + $0x88] sm:$0xff]
    %v1819 = vld [vmem:[%s1800 + $0x90] sm:$0xff]
    %v1820 = vld [vmem:[%s1800 + $0x98] sm:$0xff]
    %v1821 = vld [vmem:[%s1800 + $0xa0] sm:$0xff]
    %v1822 = vld [vmem:[%s1800 + $0xa8] sm:$0xff]
    %v1823 = vld [vmem:[%s1800 + $0xb0] sm:$0xff]
    %v1824 = vld [vmem:[%s1800 + $0xb8] sm:$0xff]
    %v1825 = vld [vmem:[%s1800 + $0xc0] sm:$0xff]
    %v1826 = vld [vmem:[%s1800 + $0xc8] sm:$0xff]
    %v1827 = vld [vmem:[%s1800 + $0xd0] sm:$0xff]
    %v1828 = vld [vmem:[%s1800 + $0xd8] sm:$0xff]
    %v1829 = vld [vmem:[%s1800 + $0xe0] sm:$0xff]
    %v1830 = vld [vmem:[%s1800 + $0xe8] sm:$0xff]
    %v1831 = vld [vmem:[%s1800 + $0xf0] sm:$0xff]
    %v1832 = vld [vmem:[%s1800 + $0xf8] sm:$0xff]
    %v1833 = vld [vmem:[%s1800 + $0x100] sm:$0xff]
    %v1834 = vld [vmem:[%s1800 + $0x108] sm:$0xff]
    %v1835 = vld [vmem:[%s1800 + $0x110] sm:$0xff]
    %v1836 = vld [vmem:[%s1800 + $0x118] sm:$0xff]
    %v1837 = vld [vmem:[%s1800 + $0x120] sm:$0xff]
    %v1838 = vld [vmem:[%s1800 + $0x128] sm:$0xff]
    %v1839 = vld [vmem:[%s1800 + $0x130] sm:$0xff]
    %v1840 = vld [vmem:[%s1800 + $0x138] sm:$0xff]
    %v1841 = vld [vmem:[%s1800 + $0x140] sm:$0xff]
    %v1842 = vld [vmem:[%s1800 + $0x148] sm:$0xff]
    %v1843 = vld [vmem:[%s1800 + $0x150] sm:$0xff]
    %v1844 = vld [vmem:[%s1800 + $0x158] sm:$0xff]
    %v1845 = vld [vmem:[%s1800 + $0x160] sm:$0xff]
    %v1846 = vld [vmem:[%s1800 + $0x168] sm:$0xff]
    %v1847 = vld [vmem:[%s1800 + $0x170] sm:$0xff]
    %v1848 = vld [vmem:[%s1800 + $0x178] sm:$0xff]
    %v1849 = vld [vmem:[%s1800 + $0x180] sm:$0xff]
    %v1850 = vld [vmem:[%s1800 + $0x188] sm:$0xff]
    %v1851 = vld [vmem:[%s1800 + $0x190] sm:$0xff]
    %v1852 = vld [vmem:[%s1800 + $0x198] sm:$0xff]
    %v1853 = vld [vmem:[%s1800 + $0x1a0] sm:$0xff]
    %v1854 = vld [vmem:[%s1800 + $0x1a8] sm:$0xff]
    %v1855 = vld [vmem:[%s1800 + $0x1b0] sm:$0xff]
    %v1856 = vld [vmem:[%s1800 + $0x1b8] sm:$0xff]
    %v1857 = vld [vmem:[%s1800 + $0x1c0] sm:$0xff]
    %v1858 = vld [vmem:[%s1800 + $0x1c8] sm:$0xff]
    %v1859 = vld [vmem:[%s1800 + $0x1d0] sm:$0xff]
    %v1860 = vld [vmem:[%s1800 + $0x1d8] sm:$0xff]
    %v1861 = vld [vmem:[%s1800 + $0x1e0] sm:$0xff]
    %v1862 = vld [vmem:[%s1800 + $0x1e8] sm:$0xff]
    %v1863 = vld [vmem:[%s1800 + $0x1f0] sm:$0xff]
    %v1864 = vld [vmem:[%s1800 + $0x1f8] sm:$0xff]
    %s1865 = scalar_lea.vmem [#allocation7], 4096
    %v1866 = vld [vmem:[%s1865] sm:$0xff]
    %v1867 = vld [vmem:[%s1865 + $0x8] sm:$0xff]
    %v1868 = vld [vmem:[%s1865 + $0x10] sm:$0xff]
    %v1869 = vld [vmem:[%s1865 + $0x18] sm:$0xff]
    %v1870 = vld [vmem:[%s1865 + $0x20] sm:$0xff]
    %v1871 = vld [vmem:[%s1865 + $0x28] sm:$0xff]
    %v1872 = vld [vmem:[%s1865 + $0x30] sm:$0xff]
    %v1873 = vld [vmem:[%s1865 + $0x38] sm:$0xff]
    %v1874 = vld [vmem:[%s1865 + $0x40] sm:$0xff]
    %v1875 = vld [vmem:[%s1865 + $0x48] sm:$0xff]
    %v1876 = vld [vmem:[%s1865 + $0x50] sm:$0xff]
    %v1877 = vld [vmem:[%s1865 + $0x58] sm:$0xff]
    %v1878 = vld [vmem:[%s1865 + $0x60] sm:$0xff]
    %v1879 = vld [vmem:[%s1865 + $0x68] sm:$0xff]
    %v1880 = vld [vmem:[%s1865 + $0x70] sm:$0xff]
    %v1881 = vld [vmem:[%s1865 + $0x78] sm:$0xff]
    %v1882 = vld [vmem:[%s1865 + $0x80] sm:$0xff]
    %v1883 = vld [vmem:[%s1865 + $0x88] sm:$0xff]
    %v1884 = vld [vmem:[%s1865 + $0x90] sm:$0xff]
    %v1885 = vld [vmem:[%s1865 + $0x98] sm:$0xff]
    %v1886 = vld [vmem:[%s1865 + $0xa0] sm:$0xff]
    %v1887 = vld [vmem:[%s1865 + $0xa8] sm:$0xff]
    %v1888 = vld [vmem:[%s1865 + $0xb0] sm:$0xff]
    %v1889 = vld [vmem:[%s1865 + $0xb8] sm:$0xff]
    %v1890 = vld [vmem:[%s1865 + $0xc0] sm:$0xff]
    %v1891 = vld [vmem:[%s1865 + $0xc8] sm:$0xff]
    %v1892 = vld [vmem:[%s1865 + $0xd0] sm:$0xff]
    %v1893 = vld [vmem:[%s1865 + $0xd8] sm:$0xff]
    %v1894 = vld [vmem:[%s1865 + $0xe0] sm:$0xff]
    %v1895 = vld [vmem:[%s1865 + $0xe8] sm:$0xff]
    %v1896 = vld [vmem:[%s1865 + $0xf0] sm:$0xff]
    %v1897 = vld [vmem:[%s1865 + $0xf8] sm:$0xff]
    %v1898 = vld [vmem:[%s1865 + $0x100] sm:$0xff]
    %v1899 = vld [vmem:[%s1865 + $0x108] sm:$0xff]
    %v1900 = vld [vmem:[%s1865 + $0x110] sm:$0xff]
    %v1901 = vld [vmem:[%s1865 + $0x118] sm:$0xff]
    %v1902 = vld [vmem:[%s1865 + $0x120] sm:$0xff]
    %v1903 = vld [vmem:[%s1865 + $0x128] sm:$0xff]
    %v1904 = vld [vmem:[%s1865 + $0x130] sm:$0xff]
    %v1905 = vld [vmem:[%s1865 + $0x138] sm:$0xff]
    %v1906 = vld [vmem:[%s1865 + $0x140] sm:$0xff]
    %v1907 = vld [vmem:[%s1865 + $0x148] sm:$0xff]
    %v1908 = vld [vmem:[%s1865 + $0x150] sm:$0xff]
    %v1909 = vld [vmem:[%s1865 + $0x158] sm:$0xff]
    %v1910 = vld [vmem:[%s1865 + $0x160] sm:$0xff]
    %v1911 = vld [vmem:[%s1865 + $0x168] sm:$0xff]
    %v1912 = vld [vmem:[%s1865 + $0x170] sm:$0xff]
    %v1913 = vld [vmem:[%s1865 + $0x178] sm:$0xff]
    %v1914 = vld [vmem:[%s1865 + $0x180] sm:$0xff]
    %v1915 = vld [vmem:[%s1865 + $0x188] sm:$0xff]
    %v1916 = vld [vmem:[%s1865 + $0x190] sm:$0xff]
    %v1917 = vld [vmem:[%s1865 + $0x198] sm:$0xff]
    %v1918 = vld [vmem:[%s1865 + $0x1a0] sm:$0xff]
    %v1919 = vld [vmem:[%s1865 + $0x1a8] sm:$0xff]
    %v1920 = vld [vmem:[%s1865 + $0x1b0] sm:$0xff]
    %v1921 = vld [vmem:[%s1865 + $0x1b8] sm:$0xff]
    %v1922 = vld [vmem:[%s1865 + $0x1c0] sm:$0xff]
    %v1923 = vld [vmem:[%s1865 + $0x1c8] sm:$0xff]
    %v1924 = vld [vmem:[%s1865 + $0x1d0] sm:$0xff]
    %v1925 = vld [vmem:[%s1865 + $0x1d8] sm:$0xff]
    %v1926 = vld [vmem:[%s1865 + $0x1e0] sm:$0xff]
    %v1927 = vld [vmem:[%s1865 + $0x1e8] sm:$0xff]
    %v1928 = vld [vmem:[%s1865 + $0x1f0] sm:$0xff]
    %v1929 = vld [vmem:[%s1865 + $0x1f8] sm:$0xff]
    %s1930 = scalar_lea.vmem [#allocation8], 4
    %v1931 = vld [vmem:[%s1930] sm:$0x3]
    %v1932 = vrot.slane %v1727, 7
    %v1933 = vrot.slane %v1728, 7
    %v1934 = vrot.slane %v1729, 7
    %v1935 = vrot.slane %v1730, 7
    %v1936 = vrot.slane %v1731, 7
    %v1937 = vrot.slane %v1732, 7
    %v1938 = vrot.slane %v1733, 7
    %v1939 = vrot.slane %v1734, 7
    %v1940 = vsel %vm208, %v1936, %v1938
    %v1941 = vsel %vm208, %v1937, %v1939
    %v1942 = vsel %vm208, %v1934, %v1936
    %v1943 = vsel %vm208, %v1935, %v1937
    %v1944 = vsel %vm208, %v1932, %v1934
    %v1945 = vsel %vm208, %v1933, %v1935
    %v1946 = vsel %vm208, %v1938, %v1932
    %v1947 = vsel %vm208, %v1939, %v1933
    %v1948 = vrot.slane %v1727, 1
    %v1949 = vrot.slane %v1728, 1
    %v1950 = vrot.slane %v1729, 1
    %v1951 = vrot.slane %v1730, 1
    %v1952 = vrot.slane %v1731, 1
    %v1953 = vrot.slane %v1732, 1
    %v1954 = vrot.slane %v1733, 1
    %v1955 = vrot.slane %v1734, 1
    %v1956 = vsel %vm217, %v1952, %v1954
    %v1957 = vsel %vm217, %v1953, %v1955
    %v1958 = vsel %vm217, %v1950, %v1952
    %v1959 = vsel %vm217, %v1951, %v1953
    %v1960 = vsel %vm217, %v1948, %v1950
    %v1961 = vsel %vm217, %v1949, %v1951
    %v1962 = vsel %vm217, %v1954, %v1948
    %v1963 = vsel %vm217, %v1955, %v1949
    %1964 = vmatpush.msra.mxu0 %v1831
    %1965 = vmatpush.msra.mxu0 %v1829
    %1966 = vmatpush.msra.mxu0 %v1827
    %1967 = vmatpush.msra.mxu0 %v1825
    %1968 = vmatpush.msra.mxu0 %v1823
    %1969 = vmatpush.msra.mxu0 %v1821
    %1970 = vmatpush.msra.mxu0 %v1819
    %1971 = vmatpush.msra.mxu0 %v1817
    %1972 = vmatpush.msra.mxu0 %v1815
    %1973 = vmatpush.msra.mxu0 %v1813
    %1974 = vmatpush.msra.mxu0 %v1811
    %1975 = vmatpush.msra.mxu0 %v1809
    %1976 = vmatpush.msra.mxu0 %v1807
    %1977 = vmatpush.msra.mxu0 %v1805
    %1978 = vmatpush.msra.mxu0 %v1803
    %1979 = vmatpush.msra.mxu0 %v1801
    %1980 = vmatmul.f32.gmra.mxu0 %v1727
    %v1981 = vpop.f32.mrf.mxu0
    %v1982 = vadd.f32 0.0, %v1981
    %1983 = vmatmul.f32.gmra.mxu0 %v1729
    %v1984 = vpop.f32.mrf.mxu0
    %v1985 = vadd.f32 0.0, %v1984
    %1986 = vmatmul.f32.gmra.mxu0 %v1731
    %v1987 = vpop.f32.mrf.mxu0
    %v1988 = vadd.f32 0.0, %v1987
    %1989 = vmatmul.f32.gmra.mxu0 %v1733
    %v1990 = vpop.f32.mrf.mxu0
    %v1991 = vadd.f32 0.0, %v1990
    %1992 = vdwg.mxu0
    %1993 = vmatpush.msra.mxu0 %v1863
    %1994 = vmatpush.msra.mxu0 %v1861
    %1995 = vmatpush.msra.mxu0 %v1859
    %1996 = vmatpush.msra.mxu0 %v1857
    %1997 = vmatpush.msra.mxu0 %v1855
    %1998 = vmatpush.msra.mxu0 %v1853
    %1999 = vmatpush.msra.mxu0 %v1851
    %2000 = vmatpush.msra.mxu0 %v1849
    %2001 = vmatpush.msra.mxu0 %v1847
    %2002 = vmatpush.msra.mxu0 %v1845
    %2003 = vmatpush.msra.mxu0 %v1843
    %2004 = vmatpush.msra.mxu0 %v1841
    %2005 = vmatpush.msra.mxu0 %v1839
    %2006 = vmatpush.msra.mxu0 %v1837
    %2007 = vmatpush.msra.mxu0 %v1835
    %2008 = vmatpush.msra.mxu0 %v1833
    %2009 = vmatmul.f32.gmra.mxu0 %v1728
    %v2010 = vpop.f32.mrf.mxu0
    %v2011 = vadd.f32 %v1982, %v2010
    %2012 = vmatmul.f32.gmra.mxu0 %v1730
    %v2013 = vpop.f32.mrf.mxu0
    %v2014 = vadd.f32 %v1985, %v2013
    %2015 = vmatmul.f32.gmra.mxu0 %v1732
    %v2016 = vpop.f32.mrf.mxu0
    %v2017 = vadd.f32 %v1988, %v2016
    %2018 = vmatmul.f32.gmra.mxu0 %v1734
    %v2019 = vpop.f32.mrf.mxu0
    %v2020 = vadd.f32 %v1991, %v2019
    %2021 = vdwg.mxu0
    %2022 = vmatpush.msra.mxu0 %v1832
    %2023 = vmatpush.msra.mxu0 %v1830
    %2024 = vmatpush.msra.mxu0 %v1828
    %2025 = vmatpush.msra.mxu0 %v1826
    %2026 = vmatpush.msra.mxu0 %v1824
    %2027 = vmatpush.msra.mxu0 %v1822
    %2028 = vmatpush.msra.mxu0 %v1820
    %2029 = vmatpush.msra.mxu0 %v1818
    %2030 = vmatpush.msra.mxu0 %v1816
    %2031 = vmatpush.msra.mxu0 %v1814
    %2032 = vmatpush.msra.mxu0 %v1812
    %2033 = vmatpush.msra.mxu0 %v1810
    %2034 = vmatpush.msra.mxu0 %v1808
    %2035 = vmatpush.msra.mxu0 %v1806
    %2036 = vmatpush.msra.mxu0 %v1804
    %2037 = vmatpush.msra.mxu0 %v1802
    %2038 = vmatmul.f32.gmra.mxu0 %v1727
    %v2039 = vpop.f32.mrf.mxu0
    %v2040 = vadd.f32 0.0, %v2039
    %2041 = vmatmul.f32.gmra.mxu0 %v1729
    %v2042 = vpop.f32.mrf.mxu0
    %v2043 = vadd.f32 0.0, %v2042
    %2044 = vmatmul.f32.gmra.mxu0 %v1731
    %v2045 = vpop.f32.mrf.mxu0
    %v2046 = vadd.f32 0.0, %v2045
    %2047 = vmatmul.f32.gmra.mxu0 %v1733
    %v2048 = vpop.f32.mrf.mxu0
    %v2049 = vadd.f32 0.0, %v2048
    %2050 = vdwg.mxu0
    %2051 = vmatpush.msra.mxu0 %v1864
    %2052 = vmatpush.msra.mxu0 %v1862
    %2053 = vmatpush.msra.mxu0 %v1860
    %2054 = vmatpush.msra.mxu0 %v1858
    %2055 = vmatpush.msra.mxu0 %v1856
    %2056 = vmatpush.msra.mxu0 %v1854
    %2057 = vmatpush.msra.mxu0 %v1852
    %2058 = vmatpush.msra.mxu0 %v1850
    %2059 = vmatpush.msra.mxu0 %v1848
    %2060 = vmatpush.msra.mxu0 %v1846
    %2061 = vmatpush.msra.mxu0 %v1844
    %2062 = vmatpush.msra.mxu0 %v1842
    %2063 = vmatpush.msra.mxu0 %v1840
    %2064 = vmatpush.msra.mxu0 %v1838
    %2065 = vmatpush.msra.mxu0 %v1836
    %2066 = vmatpush.msra.mxu0 %v1834
    %2067 = vmatmul.f32.gmra.mxu0 %v1728
    %v2068 = vpop.f32.mrf.mxu0
    %v2069 = vadd.f32 %v2040, %v2068
    %2070 = vmatmul.f32.gmra.mxu0 %v1730
    %v2071 = vpop.f32.mrf.mxu0
    %v2072 = vadd.f32 %v2043, %v2071
    %2073 = vmatmul.f32.gmra.mxu0 %v1732
    %v2074 = vpop.f32.mrf.mxu0
    %v2075 = vadd.f32 %v2046, %v2074
    %2076 = vmatmul.f32.gmra.mxu0 %v1734
    %v2077 = vpop.f32.mrf.mxu0
    %v2078 = vadd.f32 %v2049, %v2077
    %2079 = vdwg.mxu0
    %2080 = vmatpush.msra.mxu0 %v1766
    %2081 = vmatpush.msra.mxu0 %v1764
    %2082 = vmatpush.msra.mxu0 %v1762
    %2083 = vmatpush.msra.mxu0 %v1760
    %2084 = vmatpush.msra.mxu0 %v1758
    %2085 = vmatpush.msra.mxu0 %v1756
    %2086 = vmatpush.msra.mxu0 %v1754
    %2087 = vmatpush.msra.mxu0 %v1752
    %2088 = vmatpush.msra.mxu0 %v1750
    %2089 = vmatpush.msra.mxu0 %v1748
    %2090 = vmatpush.msra.mxu0 %v1746
    %2091 = vmatpush.msra.mxu0 %v1744
    %2092 = vmatpush.msra.mxu0 %v1742
    %2093 = vmatpush.msra.mxu0 %v1740
    %2094 = vmatpush.msra.mxu0 %v1738
    %2095 = vmatpush.msra.mxu0 %v1736
    %2096 = vmatmul.f32.gmra.mxu0 %v1946
    %v2097 = vpop.f32.mrf.mxu0
    %v2098 = vadd.f32 %v2011, %v2097
    %2099 = vmatmul.f32.gmra.mxu0 %v1944
    %v2100 = vpop.f32.mrf.mxu0
    %v2101 = vadd.f32 %v2014, %v2100
    %2102 = vmatmul.f32.gmra.mxu0 %v1942
    %v2103 = vpop.f32.mrf.mxu0
    %v2104 = vadd.f32 %v2017, %v2103
    %2105 = vmatmul.f32.gmra.mxu0 %v1940
    %v2106 = vpop.f32.mrf.mxu0
    %v2107 = vadd.f32 %v2020, %v2106
    %2108 = vdwg.mxu0
    %2109 = vmatpush.msra.mxu0 %v1798
    %2110 = vmatpush.msra.mxu0 %v1796
    %2111 = vmatpush.msra.mxu0 %v1794
    %2112 = vmatpush.msra.mxu0 %v1792
    %2113 = vmatpush.msra.mxu0 %v1790
    %2114 = vmatpush.msra.mxu0 %v1788
    %2115 = vmatpush.msra.mxu0 %v1786
    %2116 = vmatpush.msra.mxu0 %v1784
    %2117 = vmatpush.msra.mxu0 %v1782
    %2118 = vmatpush.msra.mxu0 %v1780
    %2119 = vmatpush.msra.mxu0 %v1778
    %2120 = vmatpush.msra.mxu0 %v1776
    %2121 = vmatpush.msra.mxu0 %v1774
    %2122 = vmatpush.msra.mxu0 %v1772
    %2123 = vmatpush.msra.mxu0 %v1770
    %2124 = vmatpush.msra.mxu0 %v1768
    %2125 = vmatmul.f32.gmra.mxu0 %v1947
    %v2126 = vpop.f32.mrf.mxu0
    %v2127 = vadd.f32 %v2098, %v2126
    %2128 = vmatmul.f32.gmra.mxu0 %v1945
    %v2129 = vpop.f32.mrf.mxu0
    %v2130 = vadd.f32 %v2101, %v2129
    %2131 = vmatmul.f32.gmra.mxu0 %v1943
    %v2132 = vpop.f32.mrf.mxu0
    %v2133 = vadd.f32 %v2104, %v2132
    %2134 = vmatmul.f32.gmra.mxu0 %v1941
    %v2135 = vpop.f32.mrf.mxu0
    %v2136 = vadd.f32 %v2107, %v2135
    %2137 = vdwg.mxu0
    %2138 = vmatpush.msra.mxu0 %v1767
    %2139 = vmatpush.msra.mxu0 %v1765
    %2140 = vmatpush.msra.mxu0 %v1763
    %2141 = vmatpush.msra.mxu0 %v1761
    %2142 = vmatpush.msra.mxu0 %v1759
    %2143 = vmatpush.msra.mxu0 %v1757
    %2144 = vmatpush.msra.mxu0 %v1755
    %2145 = vmatpush.msra.mxu0 %v1753
    %2146 = vmatpush.msra.mxu0 %v1751
    %2147 = vmatpush.msra.mxu0 %v1749
    %2148 = vmatpush.msra.mxu0 %v1747
    %2149 = vmatpush.msra.mxu0 %v1745
    %2150 = vmatpush.msra.mxu0 %v1743
    %2151 = vmatpush.msra.mxu0 %v1741
    %2152 = vmatpush.msra.mxu0 %v1739
    %2153 = vmatpush.msra.mxu0 %v1737
    %2154 = vmatmul.f32.gmra.mxu0 %v1946
    %v2155 = vpop.f32.mrf.mxu0
    %v2156 = vadd.f32 %v2069, %v2155
    %2157 = vmatmul.f32.gmra.mxu0 %v1944
    %v2158 = vpop.f32.mrf.mxu0
    %v2159 = vadd.f32 %v2072, %v2158
    %2160 = vmatmul.f32.gmra.mxu0 %v1942
    %v2161 = vpop.f32.mrf.mxu0
    %v2162 = vadd.f32 %v2075, %v2161
    %2163 = vmatmul.f32.gmra.mxu0 %v1940
    %v2164 = vpop.f32.mrf.mxu0
    %v2165 = vadd.f32 %v2078, %v2164
    %2166 = vdwg.mxu0
    %2167 = vmatpush.msra.mxu0 %v1799
    %2168 = vmatpush.msra.mxu0 %v1797
    %2169 = vmatpush.msra.mxu0 %v1795
    %2170 = vmatpush.msra.mxu0 %v1793
    %2171 = vmatpush.msra.mxu0 %v1791
    %2172 = vmatpush.msra.mxu0 %v1789
    %2173 = vmatpush.msra.mxu0 %v1787
    %2174 = vmatpush.msra.mxu0 %v1785
    %2175 = vmatpush.msra.mxu0 %v1783
    %2176 = vmatpush.msra.mxu0 %v1781
    %2177 = vmatpush.msra.mxu0 %v1779
    %2178 = vmatpush.msra.mxu0 %v1777
    %2179 = vmatpush.msra.mxu0 %v1775
    %2180 = vmatpush.msra.mxu0 %v1773
    %2181 = vmatpush.msra.mxu0 %v1771
    %2182 = vmatpush.msra.mxu0 %v1769
    %2183 = vmatmul.f32.gmra.mxu0 %v1947
    %v2184 = vpop.f32.mrf.mxu0
    %v2185 = vadd.f32 %v2156, %v2184
    %2186 = vmatmul.f32.gmra.mxu0 %v1945
    %v2187 = vpop.f32.mrf.mxu0
    %v2188 = vadd.f32 %v2159, %v2187
    %2189 = vmatmul.f32.gmra.mxu0 %v1943
    %v2190 = vpop.f32.mrf.mxu0
    %v2191 = vadd.f32 %v2162, %v2190
    %2192 = vmatmul.f32.gmra.mxu0 %v1941
    %v2193 = vpop.f32.mrf.mxu0
    %v2194 = vadd.f32 %v2165, %v2193
    %2195 = vdwg.mxu0
    %2196 = vmatpush.msra.mxu0 %v1896
    %2197 = vmatpush.msra.mxu0 %v1894
    %2198 = vmatpush.msra.mxu0 %v1892
    %2199 = vmatpush.msra.mxu0 %v1890
    %2200 = vmatpush.msra.mxu0 %v1888
    %2201 = vmatpush.msra.mxu0 %v1886
    %2202 = vmatpush.msra.mxu0 %v1884
    %2203 = vmatpush.msra.mxu0 %v1882
    %2204 = vmatpush.msra.mxu0 %v1880
    %2205 = vmatpush.msra.mxu0 %v1878
    %2206 = vmatpush.msra.mxu0 %v1876
    %2207 = vmatpush.msra.mxu0 %v1874
    %2208 = vmatpush.msra.mxu0 %v1872
    %2209 = vmatpush.msra.mxu0 %v1870
    %2210 = vmatpush.msra.mxu0 %v1868
    %2211 = vmatpush.msra.mxu0 %v1866
    %2212 = vmatmul.f32.gmra.mxu0 %v1960
    %v2213 = vpop.f32.mrf.mxu0
    %v2214 = vadd.f32 0.0, %v2213
    %2215 = vmatmul.f32.gmra.mxu0 %v1958
    %v2216 = vpop.f32.mrf.mxu0
    %v2217 = vadd.f32 0.0, %v2216
    %2218 = vmatmul.f32.gmra.mxu0 %v1956
    %v2219 = vpop.f32.mrf.mxu0
    %v2220 = vadd.f32 0.0, %v2219
    %2221 = vmatmul.f32.gmra.mxu0 %v1962
    %v2222 = vpop.f32.mrf.mxu0
    %v2223 = vadd.f32 0.0, %v2222
    %2224 = vdwg.mxu0
    %2225 = vmatpush.msra.mxu0 %v1928
    %2226 = vmatpush.msra.mxu0 %v1926
    %2227 = vmatpush.msra.mxu0 %v1924
    %2228 = vmatpush.msra.mxu0 %v1922
    %2229 = vmatpush.msra.mxu0 %v1920
    %2230 = vmatpush.msra.mxu0 %v1918
    %2231 = vmatpush.msra.mxu0 %v1916
    %2232 = vmatpush.msra.mxu0 %v1914
    %2233 = vmatpush.msra.mxu0 %v1912
    %2234 = vmatpush.msra.mxu0 %v1910
    %2235 = vmatpush.msra.mxu0 %v1908
    %2236 = vmatpush.msra.mxu0 %v1906
    %2237 = vmatpush.msra.mxu0 %v1904
    %2238 = vmatpush.msra.mxu0 %v1902
    %2239 = vmatpush.msra.mxu0 %v1900
    %2240 = vmatpush.msra.mxu0 %v1898
    %2241 = vmatmul.f32.gmra.mxu0 %v1961
    %v2242 = vpop.f32.mrf.mxu0
    %v2243 = vadd.f32 %v2214, %v2242
    %2244 = vmatmul.f32.gmra.mxu0 %v1959
    %v2245 = vpop.f32.mrf.mxu0
    %v2246 = vadd.f32 %v2217, %v2245
    %2247 = vmatmul.f32.gmra.mxu0 %v1957
    %v2248 = vpop.f32.mrf.mxu0
    %v2249 = vadd.f32 %v2220, %v2248
    %2250 = vmatmul.f32.gmra.mxu0 %v1963
    %v2251 = vpop.f32.mrf.mxu0
    %v2252 = vadd.f32 %v2223, %v2251
    %2253 = vdwg.mxu0
    %2254 = vmatpush.msra.mxu0 %v1897
    %2255 = vmatpush.msra.mxu0 %v1895
    %2256 = vmatpush.msra.mxu0 %v1893
    %2257 = vmatpush.msra.mxu0 %v1891
    %2258 = vmatpush.msra.mxu0 %v1889
    %2259 = vmatpush.msra.mxu0 %v1887
    %2260 = vmatpush.msra.mxu0 %v1885
    %2261 = vmatpush.msra.mxu0 %v1883
    %2262 = vmatpush.msra.mxu0 %v1881
    %2263 = vmatpush.msra.mxu0 %v1879
    %2264 = vmatpush.msra.mxu0 %v1877
    %2265 = vmatpush.msra.mxu0 %v1875
    %2266 = vmatpush.msra.mxu0 %v1873
    %2267 = vmatpush.msra.mxu0 %v1871
    %2268 = vmatpush.msra.mxu0 %v1869
    %2269 = vmatpush.msra.mxu0 %v1867
    %2270 = vmatmul.f32.gmra.mxu0 %v1960
    %v2271 = vpop.f32.mrf.mxu0
    %v2272 = vadd.f32 0.0, %v2271
    %2273 = vmatmul.f32.gmra.mxu0 %v1958
    %v2274 = vpop.f32.mrf.mxu0
    %v2275 = vadd.f32 0.0, %v2274
    %2276 = vmatmul.f32.gmra.mxu0 %v1956
    %v2277 = vpop.f32.mrf.mxu0
    %v2278 = vadd.f32 0.0, %v2277
    %2279 = vmatmul.f32.gmra.mxu0 %v1962
    %v2280 = vpop.f32.mrf.mxu0
    %v2281 = vadd.f32 0.0, %v2280
    %2282 = vdwg.mxu0
    %2283 = vmatpush.msra.mxu0 %v1929
    %2284 = vmatpush.msra.mxu0 %v1927
    %2285 = vmatpush.msra.mxu0 %v1925
    %2286 = vmatpush.msra.mxu0 %v1923
    %2287 = vmatpush.msra.mxu0 %v1921
    %2288 = vmatpush.msra.mxu0 %v1919
    %2289 = vmatpush.msra.mxu0 %v1917
    %2290 = vmatpush.msra.mxu0 %v1915
    %2291 = vmatpush.msra.mxu0 %v1913
    %2292 = vmatpush.msra.mxu0 %v1911
    %2293 = vmatpush.msra.mxu0 %v1909
    %2294 = vmatpush.msra.mxu0 %v1907
    %2295 = vmatpush.msra.mxu0 %v1905
    %2296 = vmatpush.msra.mxu0 %v1903
    %2297 = vmatpush.msra.mxu0 %v1901
    %2298 = vmatpush.msra.mxu0 %v1899
    %2299 = vmatmul.f32.gmra.mxu0 %v1961
    %v2300 = vpop.f32.mrf.mxu0
    %v2301 = vadd.f32 %v2272, %v2300
    %2302 = vmatmul.f32.gmra.mxu0 %v1959
    %v2303 = vpop.f32.mrf.mxu0
    %v2304 = vadd.f32 %v2275, %v2303
    %2305 = vmatmul.f32.gmra.mxu0 %v1957
    %v2306 = vpop.f32.mrf.mxu0
    %v2307 = vadd.f32 %v2278, %v2306
    %2308 = vmatmul.f32.gmra.mxu0 %v1963
    %v2309 = vpop.f32.mrf.mxu0
    %v2310 = vadd.f32 %v2281, %v2309
    %2311 = vdwg.mxu0
    %v2312 = vadd.f32 %v2127, %v2243
    %v2313 = vadd.f32 %v2185, %v2301
    %v2314 = vadd.f32 %v2130, %v2246
    %v2315 = vadd.f32 %v2188, %v2304
    %v2316 = vadd.f32 %v2133, %v2249
    %v2317 = vadd.f32 %v2191, %v2307
    %v2318 = vadd.f32 %v2136, %v2252
    %v2319 = vadd.f32 %v2194, %v2310
    %v2321 = vperm.slane %v1931, 0
    %v2322 = vperm.slane %v1931, 1
    %v2325 = vadd.f32 %v2312, %v2321
    %v2326 = vadd.f32 %v2313, %v2322
    %v2327 = vadd.f32 %v2314, %v2321
    %v2328 = vadd.f32 %v2315, %v2322
    %v2329 = vadd.f32 %v2316, %v2321
    %v2330 = vadd.f32 %v2317, %v2322
    %v2331 = vadd.f32 %v2318, %v2321
    %v2332 = vadd.f32 %v2319, %v2322
    %v2333 = vmax.f32 %v2325, 0.0
    %v2334 = vmax.f32 %v2326, 0.0
    %v2335 = vmax.f32 %v2327, 0.0
    %v2336 = vmax.f32 %v2328, 0.0
    %v2337 = vmax.f32 %v2329, 0.0
    %v2338 = vmax.f32 %v2330, 0.0
    %v2339 = vmax.f32 %v2331, 0.0
    %v2340 = vmax.f32 %v2332, 0.0
    %v2341 = vmul.f32 %v2333, %v484
    %v2342 = vmul.f32 %v2334, %v484
    %v2343 = vmul.f32 %v2335, %v489
    %v2344 = vmul.f32 %v2336, %v489
    %v2345 = vmul.f32 %v2337, %v494
    %v2346 = vmul.f32 %v2338, %v494
    %v2347 = vmul.f32 %v2339, %v499
    %v2348 = vmul.f32 %v2340, %v499
    %s2349 = scalar_lea.vmem [#allocation7], 4608
    %v2350 = vld [vmem:[%s2349] sm:$0xff]
    %v2351 = vld [vmem:[%s2349 + $0x8] sm:$0xff]
    %v2352 = vld [vmem:[%s2349 + $0x10] sm:$0xff]
    %v2353 = vld [vmem:[%s2349 + $0x18] sm:$0xff]
    %v2354 = vld [vmem:[%s2349 + $0x20] sm:$0xff]
    %v2355 = vld [vmem:[%s2349 + $0x28] sm:$0xff]
    %v2356 = vld [vmem:[%s2349 + $0x30] sm:$0xff]
    %v2357 = vld [vmem:[%s2349 + $0x38] sm:$0xff]
    %v2358 = vld [vmem:[%s2349 + $0x40] sm:$0xff]
    %v2359 = vld [vmem:[%s2349 + $0x48] sm:$0xff]
    %v2360 = vld [vmem:[%s2349 + $0x50] sm:$0xff]
    %v2361 = vld [vmem:[%s2349 + $0x58] sm:$0xff]
    %v2362 = vld [vmem:[%s2349 + $0x60] sm:$0xff]
    %v2363 = vld [vmem:[%s2349 + $0x68] sm:$0xff]
    %v2364 = vld [vmem:[%s2349 + $0x70] sm:$0xff]
    %v2365 = vld [vmem:[%s2349 + $0x78] sm:$0xff]
    %v2366 = vld [vmem:[%s2349 + $0x80] sm:$0xff]
    %v2367 = vld [vmem:[%s2349 + $0x88] sm:$0xff]
    %v2368 = vld [vmem:[%s2349 + $0x90] sm:$0xff]
    %v2369 = vld [vmem:[%s2349 + $0x98] sm:$0xff]
    %v2370 = vld [vmem:[%s2349 + $0xa0] sm:$0xff]
    %v2371 = vld [vmem:[%s2349 + $0xa8] sm:$0xff]
    %v2372 = vld [vmem:[%s2349 + $0xb0] sm:$0xff]
    %v2373 = vld [vmem:[%s2349 + $0xb8] sm:$0xff]
    %v2374 = vld [vmem:[%s2349 + $0xc0] sm:$0xff]
    %v2375 = vld [vmem:[%s2349 + $0xc8] sm:$0xff]
    %v2376 = vld [vmem:[%s2349 + $0xd0] sm:$0xff]
    %v2377 = vld [vmem:[%s2349 + $0xd8] sm:$0xff]
    %v2378 = vld [vmem:[%s2349 + $0xe0] sm:$0xff]
    %v2379 = vld [vmem:[%s2349 + $0xe8] sm:$0xff]
    %v2380 = vld [vmem:[%s2349 + $0xf0] sm:$0xff]
    %v2381 = vld [vmem:[%s2349 + $0xf8] sm:$0xff]
    %v2382 = vld [vmem:[%s2349 + $0x100] sm:$0xff]
    %v2383 = vld [vmem:[%s2349 + $0x108] sm:$0xff]
    %v2384 = vld [vmem:[%s2349 + $0x110] sm:$0xff]
    %v2385 = vld [vmem:[%s2349 + $0x118] sm:$0xff]
    %v2386 = vld [vmem:[%s2349 + $0x120] sm:$0xff]
    %v2387 = vld [vmem:[%s2349 + $0x128] sm:$0xff]
    %v2388 = vld [vmem:[%s2349 + $0x130] sm:$0xff]
    %v2389 = vld [vmem:[%s2349 + $0x138] sm:$0xff]
    %v2390 = vld [vmem:[%s2349 + $0x140] sm:$0xff]
    %v2391 = vld [vmem:[%s2349 + $0x148] sm:$0xff]
    %v2392 = vld [vmem:[%s2349 + $0x150] sm:$0xff]
    %v2393 = vld [vmem:[%s2349 + $0x158] sm:$0xff]
    %v2394 = vld [vmem:[%s2349 + $0x160] sm:$0xff]
    %v2395 = vld [vmem:[%s2349 + $0x168] sm:$0xff]
    %v2396 = vld [vmem:[%s2349 + $0x170] sm:$0xff]
    %v2397 = vld [vmem:[%s2349 + $0x178] sm:$0xff]
    %v2398 = vld [vmem:[%s2349 + $0x180] sm:$0xff]
    %v2399 = vld [vmem:[%s2349 + $0x188] sm:$0xff]
    %v2400 = vld [vmem:[%s2349 + $0x190] sm:$0xff]
    %v2401 = vld [vmem:[%s2349 + $0x198] sm:$0xff]
    %v2402 = vld [vmem:[%s2349 + $0x1a0] sm:$0xff]
    %v2403 = vld [vmem:[%s2349 + $0x1a8] sm:$0xff]
    %v2404 = vld [vmem:[%s2349 + $0x1b0] sm:$0xff]
    %v2405 = vld [vmem:[%s2349 + $0x1b8] sm:$0xff]
    %v2406 = vld [vmem:[%s2349 + $0x1c0] sm:$0xff]
    %v2407 = vld [vmem:[%s2349 + $0x1c8] sm:$0xff]
    %v2408 = vld [vmem:[%s2349 + $0x1d0] sm:$0xff]
    %v2409 = vld [vmem:[%s2349 + $0x1d8] sm:$0xff]
    %v2410 = vld [vmem:[%s2349 + $0x1e0] sm:$0xff]
    %v2411 = vld [vmem:[%s2349 + $0x1e8] sm:$0xff]
    %v2412 = vld [vmem:[%s2349 + $0x1f0] sm:$0xff]
    %v2413 = vld [vmem:[%s2349 + $0x1f8] sm:$0xff]
    %s2414 = scalar_lea.vmem [#allocation7], 5120
    %v2415 = vld [vmem:[%s2414] sm:$0xff]
    %v2416 = vld [vmem:[%s2414 + $0x8] sm:$0xff]
    %v2417 = vld [vmem:[%s2414 + $0x10] sm:$0xff]
    %v2418 = vld [vmem:[%s2414 + $0x18] sm:$0xff]
    %v2419 = vld [vmem:[%s2414 + $0x20] sm:$0xff]
    %v2420 = vld [vmem:[%s2414 + $0x28] sm:$0xff]
    %v2421 = vld [vmem:[%s2414 + $0x30] sm:$0xff]
    %v2422 = vld [vmem:[%s2414 + $0x38] sm:$0xff]
    %v2423 = vld [vmem:[%s2414 + $0x40] sm:$0xff]
    %v2424 = vld [vmem:[%s2414 + $0x48] sm:$0xff]
    %v2425 = vld [vmem:[%s2414 + $0x50] sm:$0xff]
    %v2426 = vld [vmem:[%s2414 + $0x58] sm:$0xff]
    %v2427 = vld [vmem:[%s2414 + $0x60] sm:$0xff]
    %v2428 = vld [vmem:[%s2414 + $0x68] sm:$0xff]
    %v2429 = vld [vmem:[%s2414 + $0x70] sm:$0xff]
    %v2430 = vld [vmem:[%s2414 + $0x78] sm:$0xff]
    %v2431 = vld [vmem:[%s2414 + $0x80] sm:$0xff]
    %v2432 = vld [vmem:[%s2414 + $0x88] sm:$0xff]
    %v2433 = vld [vmem:[%s2414 + $0x90] sm:$0xff]
    %v2434 = vld [vmem:[%s2414 + $0x98] sm:$0xff]
    %v2435 = vld [vmem:[%s2414 + $0xa0] sm:$0xff]
    %v2436 = vld [vmem:[%s2414 + $0xa8] sm:$0xff]
    %v2437 = vld [vmem:[%s2414 + $0xb0] sm:$0xff]
    %v2438 = vld [vmem:[%s2414 + $0xb8] sm:$0xff]
    %v2439 = vld [vmem:[%s2414 + $0xc0] sm:$0xff]
    %v2440 = vld [vmem:[%s2414 + $0xc8] sm:$0xff]
    %v2441 = vld [vmem:[%s2414 + $0xd0] sm:$0xff]
    %v2442 = vld [vmem:[%s2414 + $0xd8] sm:$0xff]
    %v2443 = vld [vmem:[%s2414 + $0xe0] sm:$0xff]
    %v2444 = vld [vmem:[%s2414 + $0xe8] sm:$0xff]
    %v2445 = vld [vmem:[%s2414 + $0xf0] sm:$0xff]
    %v2446 = vld [vmem:[%s2414 + $0xf8] sm:$0xff]
    %v2447 = vld [vmem:[%s2414 + $0x100] sm:$0xff]
    %v2448 = vld [vmem:[%s2414 + $0x108] sm:$0xff]
    %v2449 = vld [vmem:[%s2414 + $0x110] sm:$0xff]
    %v2450 = vld [vmem:[%s2414 + $0x118] sm:$0xff]
    %v2451 = vld [vmem:[%s2414 + $0x120] sm:$0xff]
    %v2452 = vld [vmem:[%s2414 + $0x128] sm:$0xff]
    %v2453 = vld [vmem:[%s2414 + $0x130] sm:$0xff]
    %v2454 = vld [vmem:[%s2414 + $0x138] sm:$0xff]
    %v2455 = vld [vmem:[%s2414 + $0x140] sm:$0xff]
    %v2456 = vld [vmem:[%s2414 + $0x148] sm:$0xff]
    %v2457 = vld [vmem:[%s2414 + $0x150] sm:$0xff]
    %v2458 = vld [vmem:[%s2414 + $0x158] sm:$0xff]
    %v2459 = vld [vmem:[%s2414 + $0x160] sm:$0xff]
    %v2460 = vld [vmem:[%s2414 + $0x168] sm:$0xff]
    %v2461 = vld [vmem:[%s2414 + $0x170] sm:$0xff]
    %v2462 = vld [vmem:[%s2414 + $0x178] sm:$0xff]
    %v2463 = vld [vmem:[%s2414 + $0x180] sm:$0xff]
    %v2464 = vld [vmem:[%s2414 + $0x188] sm:$0xff]
    %v2465 = vld [vmem:[%s2414 + $0x190] sm:$0xff]
    %v2466 = vld [vmem:[%s2414 + $0x198] sm:$0xff]
    %v2467 = vld [vmem:[%s2414 + $0x1a0] sm:$0xff]
    %v2468 = vld [vmem:[%s2414 + $0x1a8] sm:$0xff]
    %v2469 = vld [vmem:[%s2414 + $0x1b0] sm:$0xff]
    %v2470 = vld [vmem:[%s2414 + $0x1b8] sm:$0xff]
    %v2471 = vld [vmem:[%s2414 + $0x1c0] sm:$0xff]
    %v2472 = vld [vmem:[%s2414 + $0x1c8] sm:$0xff]
    %v2473 = vld [vmem:[%s2414 + $0x1d0] sm:$0xff]
    %v2474 = vld [vmem:[%s2414 + $0x1d8] sm:$0xff]
    %v2475 = vld [vmem:[%s2414 + $0x1e0] sm:$0xff]
    %v2476 = vld [vmem:[%s2414 + $0x1e8] sm:$0xff]
    %v2477 = vld [vmem:[%s2414 + $0x1f0] sm:$0xff]
    %v2478 = vld [vmem:[%s2414 + $0x1f8] sm:$0xff]
    %s2479 = scalar_lea.vmem [#allocation7], 5632
    %v2480 = vld [vmem:[%s2479] sm:$0xff]
    %v2481 = vld [vmem:[%s2479 + $0x8] sm:$0xff]
    %v2482 = vld [vmem:[%s2479 + $0x10] sm:$0xff]
    %v2483 = vld [vmem:[%s2479 + $0x18] sm:$0xff]
    %v2484 = vld [vmem:[%s2479 + $0x20] sm:$0xff]
    %v2485 = vld [vmem:[%s2479 + $0x28] sm:$0xff]
    %v2486 = vld [vmem:[%s2479 + $0x30] sm:$0xff]
    %v2487 = vld [vmem:[%s2479 + $0x38] sm:$0xff]
    %v2488 = vld [vmem:[%s2479 + $0x40] sm:$0xff]
    %v2489 = vld [vmem:[%s2479 + $0x48] sm:$0xff]
    %v2490 = vld [vmem:[%s2479 + $0x50] sm:$0xff]
    %v2491 = vld [vmem:[%s2479 + $0x58] sm:$0xff]
    %v2492 = vld [vmem:[%s2479 + $0x60] sm:$0xff]
    %v2493 = vld [vmem:[%s2479 + $0x68] sm:$0xff]
    %v2494 = vld [vmem:[%s2479 + $0x70] sm:$0xff]
    %v2495 = vld [vmem:[%s2479 + $0x78] sm:$0xff]
    %v2496 = vld [vmem:[%s2479 + $0x80] sm:$0xff]
    %v2497 = vld [vmem:[%s2479 + $0x88] sm:$0xff]
    %v2498 = vld [vmem:[%s2479 + $0x90] sm:$0xff]
    %v2499 = vld [vmem:[%s2479 + $0x98] sm:$0xff]
    %v2500 = vld [vmem:[%s2479 + $0xa0] sm:$0xff]
    %v2501 = vld [vmem:[%s2479 + $0xa8] sm:$0xff]
    %v2502 = vld [vmem:[%s2479 + $0xb0] sm:$0xff]
    %v2503 = vld [vmem:[%s2479 + $0xb8] sm:$0xff]
    %v2504 = vld [vmem:[%s2479 + $0xc0] sm:$0xff]
    %v2505 = vld [vmem:[%s2479 + $0xc8] sm:$0xff]
    %v2506 = vld [vmem:[%s2479 + $0xd0] sm:$0xff]
    %v2507 = vld [vmem:[%s2479 + $0xd8] sm:$0xff]
    %v2508 = vld [vmem:[%s2479 + $0xe0] sm:$0xff]
    %v2509 = vld [vmem:[%s2479 + $0xe8] sm:$0xff]
    %v2510 = vld [vmem:[%s2479 + $0xf0] sm:$0xff]
    %v2511 = vld [vmem:[%s2479 + $0xf8] sm:$0xff]
    %v2512 = vld [vmem:[%s2479 + $0x100] sm:$0xff]
    %v2513 = vld [vmem:[%s2479 + $0x108] sm:$0xff]
    %v2514 = vld [vmem:[%s2479 + $0x110] sm:$0xff]
    %v2515 = vld [vmem:[%s2479 + $0x118] sm:$0xff]
    %v2516 = vld [vmem:[%s2479 + $0x120] sm:$0xff]
    %v2517 = vld [vmem:[%s2479 + $0x128] sm:$0xff]
    %v2518 = vld [vmem:[%s2479 + $0x130] sm:$0xff]
    %v2519 = vld [vmem:[%s2479 + $0x138] sm:$0xff]
    %v2520 = vld [vmem:[%s2479 + $0x140] sm:$0xff]
    %v2521 = vld [vmem:[%s2479 + $0x148] sm:$0xff]
    %v2522 = vld [vmem:[%s2479 + $0x150] sm:$0xff]
    %v2523 = vld [vmem:[%s2479 + $0x158] sm:$0xff]
    %v2524 = vld [vmem:[%s2479 + $0x160] sm:$0xff]
    %v2525 = vld [vmem:[%s2479 + $0x168] sm:$0xff]
    %v2526 = vld [vmem:[%s2479 + $0x170] sm:$0xff]
    %v2527 = vld [vmem:[%s2479 + $0x178] sm:$0xff]
    %v2528 = vld [vmem:[%s2479 + $0x180] sm:$0xff]
    %v2529 = vld [vmem:[%s2479 + $0x188] sm:$0xff]
    %v2530 = vld [vmem:[%s2479 + $0x190] sm:$0xff]
    %v2531 = vld [vmem:[%s2479 + $0x198] sm:$0xff]
    %v2532 = vld [vmem:[%s2479 + $0x1a0] sm:$0xff]
    %v2533 = vld [vmem:[%s2479 + $0x1a8] sm:$0xff]
    %v2534 = vld [vmem:[%s2479 + $0x1b0] sm:$0xff]
    %v2535 = vld [vmem:[%s2479 + $0x1b8] sm:$0xff]
    %v2536 = vld [vmem:[%s2479 + $0x1c0] sm:$0xff]
    %v2537 = vld [vmem:[%s2479 + $0x1c8] sm:$0xff]
    %v2538 = vld [vmem:[%s2479 + $0x1d0] sm:$0xff]
    %v2539 = vld [vmem:[%s2479 + $0x1d8] sm:$0xff]
    %v2540 = vld [vmem:[%s2479 + $0x1e0] sm:$0xff]
    %v2541 = vld [vmem:[%s2479 + $0x1e8] sm:$0xff]
    %v2542 = vld [vmem:[%s2479 + $0x1f0] sm:$0xff]
    %v2543 = vld [vmem:[%s2479 + $0x1f8] sm:$0xff]
    %s2544 = scalar_lea.vmem [#allocation8], 6
    %v2545 = vld [vmem:[%s2544] sm:$0x3]
    %v2546 = vrot.slane %v2341, 7
    %v2547 = vrot.slane %v2342, 7
    %v2548 = vrot.slane %v2343, 7
    %v2549 = vrot.slane %v2344, 7
    %v2550 = vrot.slane %v2345, 7
    %v2551 = vrot.slane %v2346, 7
    %v2552 = vrot.slane %v2347, 7
    %v2553 = vrot.slane %v2348, 7
    %v2554 = vsel %vm208, %v2550, %v2552
    %v2555 = vsel %vm208, %v2551, %v2553
    %v2556 = vsel %vm208, %v2548, %v2550
    %v2557 = vsel %vm208, %v2549, %v2551
    %v2558 = vsel %vm208, %v2546, %v2548
    %v2559 = vsel %vm208, %v2547, %v2549
    %v2560 = vsel %vm208, %v2552, %v2546
    %v2561 = vsel %vm208, %v2553, %v2547
    %v2562 = vrot.slane %v2341, 1
    %v2563 = vrot.slane %v2342, 1
    %v2564 = vrot.slane %v2343, 1
    %v2565 = vrot.slane %v2344, 1
    %v2566 = vrot.slane %v2345, 1
    %v2567 = vrot.slane %v2346, 1
    %v2568 = vrot.slane %v2347, 1
    %v2569 = vrot.slane %v2348, 1
    %v2570 = vsel %vm217, %v2566, %v2568
    %v2571 = vsel %vm217, %v2567, %v2569
    %v2572 = vsel %vm217, %v2564, %v2566
    %v2573 = vsel %vm217, %v2565, %v2567
    %v2574 = vsel %vm217, %v2562, %v2564
    %v2575 = vsel %vm217, %v2563, %v2565
    %v2576 = vsel %vm217, %v2568, %v2562
    %v2577 = vsel %vm217, %v2569, %v2563
    %2578 = vmatpush.msra.mxu0 %v2445
    %2579 = vmatpush.msra.mxu0 %v2443
    %2580 = vmatpush.msra.mxu0 %v2441
    %2581 = vmatpush.msra.mxu0 %v2439
    %2582 = vmatpush.msra.mxu0 %v2437
    %2583 = vmatpush.msra.mxu0 %v2435
    %2584 = vmatpush.msra.mxu0 %v2433
    %2585 = vmatpush.msra.mxu0 %v2431
    %2586 = vmatpush.msra.mxu0 %v2429
    %2587 = vmatpush.msra.mxu0 %v2427
    %2588 = vmatpush.msra.mxu0 %v2425
    %2589 = vmatpush.msra.mxu0 %v2423
    %2590 = vmatpush.msra.mxu0 %v2421
    %2591 = vmatpush.msra.mxu0 %v2419
    %2592 = vmatpush.msra.mxu0 %v2417
    %2593 = vmatpush.msra.mxu0 %v2415
    %2594 = vmatmul.f32.gmra.mxu0 %v2341
    %v2595 = vpop.f32.mrf.mxu0
    %v2596 = vadd.f32 0.0, %v2595
    %2597 = vmatmul.f32.gmra.mxu0 %v2343
    %v2598 = vpop.f32.mrf.mxu0
    %v2599 = vadd.f32 0.0, %v2598
    %2600 = vmatmul.f32.gmra.mxu0 %v2345
    %v2601 = vpop.f32.mrf.mxu0
    %v2602 = vadd.f32 0.0, %v2601
    %2603 = vmatmul.f32.gmra.mxu0 %v2347
    %v2604 = vpop.f32.mrf.mxu0
    %v2605 = vadd.f32 0.0, %v2604
    %2606 = vdwg.mxu0
    %2607 = vmatpush.msra.mxu0 %v2477
    %2608 = vmatpush.msra.mxu0 %v2475
    %2609 = vmatpush.msra.mxu0 %v2473
    %2610 = vmatpush.msra.mxu0 %v2471
    %2611 = vmatpush.msra.mxu0 %v2469
    %2612 = vmatpush.msra.mxu0 %v2467
    %2613 = vmatpush.msra.mxu0 %v2465
    %2614 = vmatpush.msra.mxu0 %v2463
    %2615 = vmatpush.msra.mxu0 %v2461
    %2616 = vmatpush.msra.mxu0 %v2459
    %2617 = vmatpush.msra.mxu0 %v2457
    %2618 = vmatpush.msra.mxu0 %v2455
    %2619 = vmatpush.msra.mxu0 %v2453
    %2620 = vmatpush.msra.mxu0 %v2451
    %2621 = vmatpush.msra.mxu0 %v2449
    %2622 = vmatpush.msra.mxu0 %v2447
    %2623 = vmatmul.f32.gmra.mxu0 %v2342
    %v2624 = vpop.f32.mrf.mxu0
    %v2625 = vadd.f32 %v2596, %v2624
    %2626 = vmatmul.f32.gmra.mxu0 %v2344
    %v2627 = vpop.f32.mrf.mxu0
    %v2628 = vadd.f32 %v2599, %v2627
    %2629 = vmatmul.f32.gmra.mxu0 %v2346
    %v2630 = vpop.f32.mrf.mxu0
    %v2631 = vadd.f32 %v2602, %v2630
    %2632 = vmatmul.f32.gmra.mxu0 %v2348
    %v2633 = vpop.f32.mrf.mxu0
    %v2634 = vadd.f32 %v2605, %v2633
    %2635 = vdwg.mxu0
    %2636 = vmatpush.msra.mxu0 %v2446
    %2637 = vmatpush.msra.mxu0 %v2444
    %2638 = vmatpush.msra.mxu0 %v2442
    %2639 = vmatpush.msra.mxu0 %v2440
    %2640 = vmatpush.msra.mxu0 %v2438
    %2641 = vmatpush.msra.mxu0 %v2436
    %2642 = vmatpush.msra.mxu0 %v2434
    %2643 = vmatpush.msra.mxu0 %v2432
    %2644 = vmatpush.msra.mxu0 %v2430
    %2645 = vmatpush.msra.mxu0 %v2428
    %2646 = vmatpush.msra.mxu0 %v2426
    %2647 = vmatpush.msra.mxu0 %v2424
    %2648 = vmatpush.msra.mxu0 %v2422
    %2649 = vmatpush.msra.mxu0 %v2420
    %2650 = vmatpush.msra.mxu0 %v2418
    %2651 = vmatpush.msra.mxu0 %v2416
    %2652 = vmatmul.f32.gmra.mxu0 %v2341
    %v2653 = vpop.f32.mrf.mxu0
    %v2654 = vadd.f32 0.0, %v2653
    %2655 = vmatmul.f32.gmra.mxu0 %v2343
    %v2656 = vpop.f32.mrf.mxu0
    %v2657 = vadd.f32 0.0, %v2656
    %2658 = vmatmul.f32.gmra.mxu0 %v2345
    %v2659 = vpop.f32.mrf.mxu0
    %v2660 = vadd.f32 0.0, %v2659
    %2661 = vmatmul.f32.gmra.mxu0 %v2347
    %v2662 = vpop.f32.mrf.mxu0
    %v2663 = vadd.f32 0.0, %v2662
    %2664 = vdwg.mxu0
    %2665 = vmatpush.msra.mxu0 %v2478
    %2666 = vmatpush.msra.mxu0 %v2476
    %2667 = vmatpush.msra.mxu0 %v2474
    %2668 = vmatpush.msra.mxu0 %v2472
    %2669 = vmatpush.msra.mxu0 %v2470
    %2670 = vmatpush.msra.mxu0 %v2468
    %2671 = vmatpush.msra.mxu0 %v2466
    %2672 = vmatpush.msra.mxu0 %v2464
    %2673 = vmatpush.msra.mxu0 %v2462
    %2674 = vmatpush.msra.mxu0 %v2460
    %2675 = vmatpush.msra.mxu0 %v2458
    %2676 = vmatpush.msra.mxu0 %v2456
    %2677 = vmatpush.msra.mxu0 %v2454
    %2678 = vmatpush.msra.mxu0 %v2452
    %2679 = vmatpush.msra.mxu0 %v2450
    %2680 = vmatpush.msra.mxu0 %v2448
    %2681 = vmatmul.f32.gmra.mxu0 %v2342
    %v2682 = vpop.f32.mrf.mxu0
    %v2683 = vadd.f32 %v2654, %v2682
    %2684 = vmatmul.f32.gmra.mxu0 %v2344
    %v2685 = vpop.f32.mrf.mxu0
    %v2686 = vadd.f32 %v2657, %v2685
    %2687 = vmatmul.f32.gmra.mxu0 %v2346
    %v2688 = vpop.f32.mrf.mxu0
    %v2689 = vadd.f32 %v2660, %v2688
    %2690 = vmatmul.f32.gmra.mxu0 %v2348
    %v2691 = vpop.f32.mrf.mxu0
    %v2692 = vadd.f32 %v2663, %v2691
    %2693 = vdwg.mxu0
    %2694 = vmatpush.msra.mxu0 %v2380
    %2695 = vmatpush.msra.mxu0 %v2378
    %2696 = vmatpush.msra.mxu0 %v2376
    %2697 = vmatpush.msra.mxu0 %v2374
    %2698 = vmatpush.msra.mxu0 %v2372
    %2699 = vmatpush.msra.mxu0 %v2370
    %2700 = vmatpush.msra.mxu0 %v2368
    %2701 = vmatpush.msra.mxu0 %v2366
    %2702 = vmatpush.msra.mxu0 %v2364
    %2703 = vmatpush.msra.mxu0 %v2362
    %2704 = vmatpush.msra.mxu0 %v2360
    %2705 = vmatpush.msra.mxu0 %v2358
    %2706 = vmatpush.msra.mxu0 %v2356
    %2707 = vmatpush.msra.mxu0 %v2354
    %2708 = vmatpush.msra.mxu0 %v2352
    %2709 = vmatpush.msra.mxu0 %v2350
    %2710 = vmatmul.f32.gmra.mxu0 %v2560
    %v2711 = vpop.f32.mrf.mxu0
    %v2712 = vadd.f32 %v2625, %v2711
    %2713 = vmatmul.f32.gmra.mxu0 %v2558
    %v2714 = vpop.f32.mrf.mxu0
    %v2715 = vadd.f32 %v2628, %v2714
    %2716 = vmatmul.f32.gmra.mxu0 %v2556
    %v2717 = vpop.f32.mrf.mxu0
    %v2718 = vadd.f32 %v2631, %v2717
    %2719 = vmatmul.f32.gmra.mxu0 %v2554
    %v2720 = vpop.f32.mrf.mxu0
    %v2721 = vadd.f32 %v2634, %v2720
    %2722 = vdwg.mxu0
    %2723 = vmatpush.msra.mxu0 %v2412
    %2724 = vmatpush.msra.mxu0 %v2410
    %2725 = vmatpush.msra.mxu0 %v2408
    %2726 = vmatpush.msra.mxu0 %v2406
    %2727 = vmatpush.msra.mxu0 %v2404
    %2728 = vmatpush.msra.mxu0 %v2402
    %2729 = vmatpush.msra.mxu0 %v2400
    %2730 = vmatpush.msra.mxu0 %v2398
    %2731 = vmatpush.msra.mxu0 %v2396
    %2732 = vmatpush.msra.mxu0 %v2394
    %2733 = vmatpush.msra.mxu0 %v2392
    %2734 = vmatpush.msra.mxu0 %v2390
    %2735 = vmatpush.msra.mxu0 %v2388
    %2736 = vmatpush.msra.mxu0 %v2386
    %2737 = vmatpush.msra.mxu0 %v2384
    %2738 = vmatpush.msra.mxu0 %v2382
    %2739 = vmatmul.f32.gmra.mxu0 %v2561
    %v2740 = vpop.f32.mrf.mxu0
    %v2741 = vadd.f32 %v2712, %v2740
    %2742 = vmatmul.f32.gmra.mxu0 %v2559
    %v2743 = vpop.f32.mrf.mxu0
    %v2744 = vadd.f32 %v2715, %v2743
    %2745 = vmatmul.f32.gmra.mxu0 %v2557
    %v2746 = vpop.f32.mrf.mxu0
    %v2747 = vadd.f32 %v2718, %v2746
    %2748 = vmatmul.f32.gmra.mxu0 %v2555
    %v2749 = vpop.f32.mrf.mxu0
    %v2750 = vadd.f32 %v2721, %v2749
    %2751 = vdwg.mxu0
    %2752 = vmatpush.msra.mxu0 %v2381
    %2753 = vmatpush.msra.mxu0 %v2379
    %2754 = vmatpush.msra.mxu0 %v2377
    %2755 = vmatpush.msra.mxu0 %v2375
    %2756 = vmatpush.msra.mxu0 %v2373
    %2757 = vmatpush.msra.mxu0 %v2371
    %2758 = vmatpush.msra.mxu0 %v2369
    %2759 = vmatpush.msra.mxu0 %v2367
    %2760 = vmatpush.msra.mxu0 %v2365
    %2761 = vmatpush.msra.mxu0 %v2363
    %2762 = vmatpush.msra.mxu0 %v2361
    %2763 = vmatpush.msra.mxu0 %v2359
    %2764 = vmatpush.msra.mxu0 %v2357
    %2765 = vmatpush.msra.mxu0 %v2355
    %2766 = vmatpush.msra.mxu0 %v2353
    %2767 = vmatpush.msra.mxu0 %v2351
    %2768 = vmatmul.f32.gmra.mxu0 %v2560
    %v2769 = vpop.f32.mrf.mxu0
    %v2770 = vadd.f32 %v2683, %v2769
    %2771 = vmatmul.f32.gmra.mxu0 %v2558
    %v2772 = vpop.f32.mrf.mxu0
    %v2773 = vadd.f32 %v2686, %v2772
    %2774 = vmatmul.f32.gmra.mxu0 %v2556
    %v2775 = vpop.f32.mrf.mxu0
    %v2776 = vadd.f32 %v2689, %v2775
    %2777 = vmatmul.f32.gmra.mxu0 %v2554
    %v2778 = vpop.f32.mrf.mxu0
    %v2779 = vadd.f32 %v2692, %v2778
    %2780 = vdwg.mxu0
    %2781 = vmatpush.msra.mxu0 %v2413
    %2782 = vmatpush.msra.mxu0 %v2411
    %2783 = vmatpush.msra.mxu0 %v2409
    %2784 = vmatpush.msra.mxu0 %v2407
    %2785 = vmatpush.msra.mxu0 %v2405
    %2786 = vmatpush.msra.mxu0 %v2403
    %2787 = vmatpush.msra.mxu0 %v2401
    %2788 = vmatpush.msra.mxu0 %v2399
    %2789 = vmatpush.msra.mxu0 %v2397
    %2790 = vmatpush.msra.mxu0 %v2395
    %2791 = vmatpush.msra.mxu0 %v2393
    %2792 = vmatpush.msra.mxu0 %v2391
    %2793 = vmatpush.msra.mxu0 %v2389
    %2794 = vmatpush.msra.mxu0 %v2387
    %2795 = vmatpush.msra.mxu0 %v2385
    %2796 = vmatpush.msra.mxu0 %v2383
    %2797 = vmatmul.f32.gmra.mxu0 %v2561
    %v2798 = vpop.f32.mrf.mxu0
    %v2799 = vadd.f32 %v2770, %v2798
    %2800 = vmatmul.f32.gmra.mxu0 %v2559
    %v2801 = vpop.f32.mrf.mxu0
    %v2802 = vadd.f32 %v2773, %v2801
    %2803 = vmatmul.f32.gmra.mxu0 %v2557
    %v2804 = vpop.f32.mrf.mxu0
    %v2805 = vadd.f32 %v2776, %v2804
    %2806 = vmatmul.f32.gmra.mxu0 %v2555
    %v2807 = vpop.f32.mrf.mxu0
    %v2808 = vadd.f32 %v2779, %v2807
    %2809 = vdwg.mxu0
    %2810 = vmatpush.msra.mxu0 %v2510
    %2811 = vmatpush.msra.mxu0 %v2508
    %2812 = vmatpush.msra.mxu0 %v2506
    %2813 = vmatpush.msra.mxu0 %v2504
    %2814 = vmatpush.msra.mxu0 %v2502
    %2815 = vmatpush.msra.mxu0 %v2500
    %2816 = vmatpush.msra.mxu0 %v2498
    %2817 = vmatpush.msra.mxu0 %v2496
    %2818 = vmatpush.msra.mxu0 %v2494
    %2819 = vmatpush.msra.mxu0 %v2492
    %2820 = vmatpush.msra.mxu0 %v2490
    %2821 = vmatpush.msra.mxu0 %v2488
    %2822 = vmatpush.msra.mxu0 %v2486
    %2823 = vmatpush.msra.mxu0 %v2484
    %2824 = vmatpush.msra.mxu0 %v2482
    %2825 = vmatpush.msra.mxu0 %v2480
    %2826 = vmatmul.f32.gmra.mxu0 %v2574
    %v2827 = vpop.f32.mrf.mxu0
    %v2828 = vadd.f32 0.0, %v2827
    %2829 = vmatmul.f32.gmra.mxu0 %v2572
    %v2830 = vpop.f32.mrf.mxu0
    %v2831 = vadd.f32 0.0, %v2830
    %2832 = vmatmul.f32.gmra.mxu0 %v2570
    %v2833 = vpop.f32.mrf.mxu0
    %v2834 = vadd.f32 0.0, %v2833
    %2835 = vmatmul.f32.gmra.mxu0 %v2576
    %v2836 = vpop.f32.mrf.mxu0
    %v2837 = vadd.f32 0.0, %v2836
    %2838 = vdwg.mxu0
    %2839 = vmatpush.msra.mxu0 %v2542
    %2840 = vmatpush.msra.mxu0 %v2540
    %2841 = vmatpush.msra.mxu0 %v2538
    %2842 = vmatpush.msra.mxu0 %v2536
    %2843 = vmatpush.msra.mxu0 %v2534
    %2844 = vmatpush.msra.mxu0 %v2532
    %2845 = vmatpush.msra.mxu0 %v2530
    %2846 = vmatpush.msra.mxu0 %v2528
    %2847 = vmatpush.msra.mxu0 %v2526
    %2848 = vmatpush.msra.mxu0 %v2524
    %2849 = vmatpush.msra.mxu0 %v2522
    %2850 = vmatpush.msra.mxu0 %v2520
    %2851 = vmatpush.msra.mxu0 %v2518
    %2852 = vmatpush.msra.mxu0 %v2516
    %2853 = vmatpush.msra.mxu0 %v2514
    %2854 = vmatpush.msra.mxu0 %v2512
    %2855 = vmatmul.f32.gmra.mxu0 %v2575
    %v2856 = vpop.f32.mrf.mxu0
    %v2857 = vadd.f32 %v2828, %v2856
    %2858 = vmatmul.f32.gmra.mxu0 %v2573
    %v2859 = vpop.f32.mrf.mxu0
    %v2860 = vadd.f32 %v2831, %v2859
    %2861 = vmatmul.f32.gmra.mxu0 %v2571
    %v2862 = vpop.f32.mrf.mxu0
    %v2863 = vadd.f32 %v2834, %v2862
    %2864 = vmatmul.f32.gmra.mxu0 %v2577
    %v2865 = vpop.f32.mrf.mxu0
    %v2866 = vadd.f32 %v2837, %v2865
    %2867 = vdwg.mxu0
    %2868 = vmatpush.msra.mxu0 %v2511
    %2869 = vmatpush.msra.mxu0 %v2509
    %2870 = vmatpush.msra.mxu0 %v2507
    %2871 = vmatpush.msra.mxu0 %v2505
    %2872 = vmatpush.msra.mxu0 %v2503
    %2873 = vmatpush.msra.mxu0 %v2501
    %2874 = vmatpush.msra.mxu0 %v2499
    %2875 = vmatpush.msra.mxu0 %v2497
    %2876 = vmatpush.msra.mxu0 %v2495
    %2877 = vmatpush.msra.mxu0 %v2493
    %2878 = vmatpush.msra.mxu0 %v2491
    %2879 = vmatpush.msra.mxu0 %v2489
    %2880 = vmatpush.msra.mxu0 %v2487
    %2881 = vmatpush.msra.mxu0 %v2485
    %2882 = vmatpush.msra.mxu0 %v2483
    %2883 = vmatpush.msra.mxu0 %v2481
    %2884 = vmatmul.f32.gmra.mxu0 %v2574
    %v2885 = vpop.f32.mrf.mxu0
    %v2886 = vadd.f32 0.0, %v2885
    %2887 = vmatmul.f32.gmra.mxu0 %v2572
    %v2888 = vpop.f32.mrf.mxu0
    %v2889 = vadd.f32 0.0, %v2888
    %2890 = vmatmul.f32.gmra.mxu0 %v2570
    %v2891 = vpop.f32.mrf.mxu0
    %v2892 = vadd.f32 0.0, %v2891
    %2893 = vmatmul.f32.gmra.mxu0 %v2576
    %v2894 = vpop.f32.mrf.mxu0
    %v2895 = vadd.f32 0.0, %v2894
    %2896 = vdwg.mxu0
    %2897 = vmatpush.msra.mxu0 %v2543
    %2898 = vmatpush.msra.mxu0 %v2541
    %2899 = vmatpush.msra.mxu0 %v2539
    %2900 = vmatpush.msra.mxu0 %v2537
    %2901 = vmatpush.msra.mxu0 %v2535
    %2902 = vmatpush.msra.mxu0 %v2533
    %2903 = vmatpush.msra.mxu0 %v2531
    %2904 = vmatpush.msra.mxu0 %v2529
    %2905 = vmatpush.msra.mxu0 %v2527
    %2906 = vmatpush.msra.mxu0 %v2525
    %2907 = vmatpush.msra.mxu0 %v2523
    %2908 = vmatpush.msra.mxu0 %v2521
    %2909 = vmatpush.msra.mxu0 %v2519
    %2910 = vmatpush.msra.mxu0 %v2517
    %2911 = vmatpush.msra.mxu0 %v2515
    %2912 = vmatpush.msra.mxu0 %v2513
    %2913 = vmatmul.f32.gmra.mxu0 %v2575
    %v2914 = vpop.f32.mrf.mxu0
    %v2915 = vadd.f32 %v2886, %v2914
    %2916 = vmatmul.f32.gmra.mxu0 %v2573
    %v2917 = vpop.f32.mrf.mxu0
    %v2918 = vadd.f32 %v2889, %v2917
    %2919 = vmatmul.f32.gmra.mxu0 %v2571
    %v2920 = vpop.f32.mrf.mxu0
    %v2921 = vadd.f32 %v2892, %v2920
    %2922 = vmatmul.f32.gmra.mxu0 %v2577
    %v2923 = vpop.f32.mrf.mxu0
    %v2924 = vadd.f32 %v2895, %v2923
    %2925 = vdwg.mxu0
    %v2926 = vadd.f32 %v2741, %v2857
    %v2927 = vadd.f32 %v2799, %v2915
    %v2928 = vadd.f32 %v2744, %v2860
    %v2929 = vadd.f32 %v2802, %v2918
    %v2930 = vadd.f32 %v2747, %v2863
    %v2931 = vadd.f32 %v2805, %v2921
    %v2932 = vadd.f32 %v2750, %v2866
    %v2933 = vadd.f32 %v2808, %v2924
    %v2935 = vperm.slane %v2545, 0
    %v2936 = vperm.slane %v2545, 1
    %v2939 = vadd.f32 %v2926, %v2935
    %v2940 = vadd.f32 %v2927, %v2936
    %v2941 = vadd.f32 %v2928, %v2935
    %v2942 = vadd.f32 %v2929, %v2936
    %v2943 = vadd.f32 %v2930, %v2935
    %v2944 = vadd.f32 %v2931, %v2936
    %v2945 = vadd.f32 %v2932, %v2935
    %v2946 = vadd.f32 %v2933, %v2936
    %v2947 = vmax.f32 %v2939, 0.0
    %v2948 = vmax.f32 %v2940, 0.0
    %v2949 = vmax.f32 %v2941, 0.0
    %v2950 = vmax.f32 %v2942, 0.0
    %v2951 = vmax.f32 %v2943, 0.0
    %v2952 = vmax.f32 %v2944, 0.0
    %v2953 = vmax.f32 %v2945, 0.0
    %v2954 = vmax.f32 %v2946, 0.0
    %v2955 = vmul.f32 %v2947, %v484
    %v2956 = vmul.f32 %v2948, %v484
    %v2957 = vmul.f32 %v2949, %v489
    %v2958 = vmul.f32 %v2950, %v489
    %v2959 = vmul.f32 %v2951, %v494
    %v2960 = vmul.f32 %v2952, %v494
    %v2961 = vmul.f32 %v2953, %v499
    %v2962 = vmul.f32 %v2954, %v499
    %s2963 = scalar_lea.vmem [#allocation7], 6144
    %v2964 = vld [vmem:[%s2963] sm:$0xff]
    %v2965 = vld [vmem:[%s2963 + $0x8] sm:$0xff]
    %v2966 = vld [vmem:[%s2963 + $0x10] sm:$0xff]
    %v2967 = vld [vmem:[%s2963 + $0x18] sm:$0xff]
    %v2968 = vld [vmem:[%s2963 + $0x20] sm:$0xff]
    %v2969 = vld [vmem:[%s2963 + $0x28] sm:$0xff]
    %v2970 = vld [vmem:[%s2963 + $0x30] sm:$0xff]
    %v2971 = vld [vmem:[%s2963 + $0x38] sm:$0xff]
    %v2972 = vld [vmem:[%s2963 + $0x40] sm:$0xff]
    %v2973 = vld [vmem:[%s2963 + $0x48] sm:$0xff]
    %v2974 = vld [vmem:[%s2963 + $0x50] sm:$0xff]
    %v2975 = vld [vmem:[%s2963 + $0x58] sm:$0xff]
    %v2976 = vld [vmem:[%s2963 + $0x60] sm:$0xff]
    %v2977 = vld [vmem:[%s2963 + $0x68] sm:$0xff]
    %v2978 = vld [vmem:[%s2963 + $0x70] sm:$0xff]
    %v2979 = vld [vmem:[%s2963 + $0x78] sm:$0xff]
    %v2980 = vld [vmem:[%s2963 + $0x80] sm:$0xff]
    %v2981 = vld [vmem:[%s2963 + $0x88] sm:$0xff]
    %v2982 = vld [vmem:[%s2963 + $0x90] sm:$0xff]
    %v2983 = vld [vmem:[%s2963 + $0x98] sm:$0xff]
    %v2984 = vld [vmem:[%s2963 + $0xa0] sm:$0xff]
    %v2985 = vld [vmem:[%s2963 + $0xa8] sm:$0xff]
    %v2986 = vld [vmem:[%s2963 + $0xb0] sm:$0xff]
    %v2987 = vld [vmem:[%s2963 + $0xb8] sm:$0xff]
    %v2988 = vld [vmem:[%s2963 + $0xc0] sm:$0xff]
    %v2989 = vld [vmem:[%s2963 + $0xc8] sm:$0xff]
    %v2990 = vld [vmem:[%s2963 + $0xd0] sm:$0xff]
    %v2991 = vld [vmem:[%s2963 + $0xd8] sm:$0xff]
    %v2992 = vld [vmem:[%s2963 + $0xe0] sm:$0xff]
    %v2993 = vld [vmem:[%s2963 + $0xe8] sm:$0xff]
    %v2994 = vld [vmem:[%s2963 + $0xf0] sm:$0xff]
    %v2995 = vld [vmem:[%s2963 + $0xf8] sm:$0xff]
    %v2996 = vld [vmem:[%s2963 + $0x100] sm:$0xff]
    %v2997 = vld [vmem:[%s2963 + $0x108] sm:$0xff]
    %v2998 = vld [vmem:[%s2963 + $0x110] sm:$0xff]
    %v2999 = vld [vmem:[%s2963 + $0x118] sm:$0xff]
    %v3000 = vld [vmem:[%s2963 + $0x120] sm:$0xff]
    %v3001 = vld [vmem:[%s2963 + $0x128] sm:$0xff]
    %v3002 = vld [vmem:[%s2963 + $0x130] sm:$0xff]
    %v3003 = vld [vmem:[%s2963 + $0x138] sm:$0xff]
    %v3004 = vld [vmem:[%s2963 + $0x140] sm:$0xff]
    %v3005 = vld [vmem:[%s2963 + $0x148] sm:$0xff]
    %v3006 = vld [vmem:[%s2963 + $0x150] sm:$0xff]
    %v3007 = vld [vmem:[%s2963 + $0x158] sm:$0xff]
    %v3008 = vld [vmem:[%s2963 + $0x160] sm:$0xff]
    %v3009 = vld [vmem:[%s2963 + $0x168] sm:$0xff]
    %v3010 = vld [vmem:[%s2963 + $0x170] sm:$0xff]
    %v3011 = vld [vmem:[%s2963 + $0x178] sm:$0xff]
    %v3012 = vld [vmem:[%s2963 + $0x180] sm:$0xff]
    %v3013 = vld [vmem:[%s2963 + $0x188] sm:$0xff]
    %v3014 = vld [vmem:[%s2963 + $0x190] sm:$0xff]
    %v3015 = vld [vmem:[%s2963 + $0x198] sm:$0xff]
    %v3016 = vld [vmem:[%s2963 + $0x1a0] sm:$0xff]
    %v3017 = vld [vmem:[%s2963 + $0x1a8] sm:$0xff]
    %v3018 = vld [vmem:[%s2963 + $0x1b0] sm:$0xff]
    %v3019 = vld [vmem:[%s2963 + $0x1b8] sm:$0xff]
    %v3020 = vld [vmem:[%s2963 + $0x1c0] sm:$0xff]
    %v3021 = vld [vmem:[%s2963 + $0x1c8] sm:$0xff]
    %v3022 = vld [vmem:[%s2963 + $0x1d0] sm:$0xff]
    %v3023 = vld [vmem:[%s2963 + $0x1d8] sm:$0xff]
    %v3024 = vld [vmem:[%s2963 + $0x1e0] sm:$0xff]
    %v3025 = vld [vmem:[%s2963 + $0x1e8] sm:$0xff]
    %v3026 = vld [vmem:[%s2963 + $0x1f0] sm:$0xff]
    %v3027 = vld [vmem:[%s2963 + $0x1f8] sm:$0xff]
    %s3028 = scalar_lea.vmem [#allocation7], 6656
    %v3029 = vld [vmem:[%s3028] sm:$0xff]
    %v3030 = vld [vmem:[%s3028 + $0x8] sm:$0xff]
    %v3031 = vld [vmem:[%s3028 + $0x10] sm:$0xff]
    %v3032 = vld [vmem:[%s3028 + $0x18] sm:$0xff]
    %v3033 = vld [vmem:[%s3028 + $0x20] sm:$0xff]
    %v3034 = vld [vmem:[%s3028 + $0x28] sm:$0xff]
    %v3035 = vld [vmem:[%s3028 + $0x30] sm:$0xff]
    %v3036 = vld [vmem:[%s3028 + $0x38] sm:$0xff]
    %v3037 = vld [vmem:[%s3028 + $0x40] sm:$0xff]
    %v3038 = vld [vmem:[%s3028 + $0x48] sm:$0xff]
    %v3039 = vld [vmem:[%s3028 + $0x50] sm:$0xff]
    %v3040 = vld [vmem:[%s3028 + $0x58] sm:$0xff]
    %v3041 = vld [vmem:[%s3028 + $0x60] sm:$0xff]
    %v3042 = vld [vmem:[%s3028 + $0x68] sm:$0xff]
    %v3043 = vld [vmem:[%s3028 + $0x70] sm:$0xff]
    %v3044 = vld [vmem:[%s3028 + $0x78] sm:$0xff]
    %v3045 = vld [vmem:[%s3028 + $0x80] sm:$0xff]
    %v3046 = vld [vmem:[%s3028 + $0x88] sm:$0xff]
    %v3047 = vld [vmem:[%s3028 + $0x90] sm:$0xff]
    %v3048 = vld [vmem:[%s3028 + $0x98] sm:$0xff]
    %v3049 = vld [vmem:[%s3028 + $0xa0] sm:$0xff]
    %v3050 = vld [vmem:[%s3028 + $0xa8] sm:$0xff]
    %v3051 = vld [vmem:[%s3028 + $0xb0] sm:$0xff]
    %v3052 = vld [vmem:[%s3028 + $0xb8] sm:$0xff]
    %v3053 = vld [vmem:[%s3028 + $0xc0] sm:$0xff]
    %v3054 = vld [vmem:[%s3028 + $0xc8] sm:$0xff]
    %v3055 = vld [vmem:[%s3028 + $0xd0] sm:$0xff]
    %v3056 = vld [vmem:[%s3028 + $0xd8] sm:$0xff]
    %v3057 = vld [vmem:[%s3028 + $0xe0] sm:$0xff]
    %v3058 = vld [vmem:[%s3028 + $0xe8] sm:$0xff]
    %v3059 = vld [vmem:[%s3028 + $0xf0] sm:$0xff]
    %v3060 = vld [vmem:[%s3028 + $0xf8] sm:$0xff]
    %v3061 = vld [vmem:[%s3028 + $0x100] sm:$0xff]
    %v3062 = vld [vmem:[%s3028 + $0x108] sm:$0xff]
    %v3063 = vld [vmem:[%s3028 + $0x110] sm:$0xff]
    %v3064 = vld [vmem:[%s3028 + $0x118] sm:$0xff]
    %v3065 = vld [vmem:[%s3028 + $0x120] sm:$0xff]
    %v3066 = vld [vmem:[%s3028 + $0x128] sm:$0xff]
    %v3067 = vld [vmem:[%s3028 + $0x130] sm:$0xff]
    %v3068 = vld [vmem:[%s3028 + $0x138] sm:$0xff]
    %v3069 = vld [vmem:[%s3028 + $0x140] sm:$0xff]
    %v3070 = vld [vmem:[%s3028 + $0x148] sm:$0xff]
    %v3071 = vld [vmem:[%s3028 + $0x150] sm:$0xff]
    %v3072 = vld [vmem:[%s3028 + $0x158] sm:$0xff]
    %v3073 = vld [vmem:[%s3028 + $0x160] sm:$0xff]
    %v3074 = vld [vmem:[%s3028 + $0x168] sm:$0xff]
    %v3075 = vld [vmem:[%s3028 + $0x170] sm:$0xff]
    %v3076 = vld [vmem:[%s3028 + $0x178] sm:$0xff]
    %v3077 = vld [vmem:[%s3028 + $0x180] sm:$0xff]
    %v3078 = vld [vmem:[%s3028 + $0x188] sm:$0xff]
    %v3079 = vld [vmem:[%s3028 + $0x190] sm:$0xff]
    %v3080 = vld [vmem:[%s3028 + $0x198] sm:$0xff]
    %v3081 = vld [vmem:[%s3028 + $0x1a0] sm:$0xff]
    %v3082 = vld [vmem:[%s3028 + $0x1a8] sm:$0xff]
    %v3083 = vld [vmem:[%s3028 + $0x1b0] sm:$0xff]
    %v3084 = vld [vmem:[%s3028 + $0x1b8] sm:$0xff]
    %v3085 = vld [vmem:[%s3028 + $0x1c0] sm:$0xff]
    %v3086 = vld [vmem:[%s3028 + $0x1c8] sm:$0xff]
    %v3087 = vld [vmem:[%s3028 + $0x1d0] sm:$0xff]
    %v3088 = vld [vmem:[%s3028 + $0x1d8] sm:$0xff]
    %v3089 = vld [vmem:[%s3028 + $0x1e0] sm:$0xff]
    %v3090 = vld [vmem:[%s3028 + $0x1e8] sm:$0xff]
    %v3091 = vld [vmem:[%s3028 + $0x1f0] sm:$0xff]
    %v3092 = vld [vmem:[%s3028 + $0x1f8] sm:$0xff]
    %s3093 = scalar_lea.vmem [#allocation7], 7168
    %v3094 = vld [vmem:[%s3093] sm:$0xff]
    %v3095 = vld [vmem:[%s3093 + $0x8] sm:$0xff]
    %v3096 = vld [vmem:[%s3093 + $0x10] sm:$0xff]
    %v3097 = vld [vmem:[%s3093 + $0x18] sm:$0xff]
    %v3098 = vld [vmem:[%s3093 + $0x20] sm:$0xff]
    %v3099 = vld [vmem:[%s3093 + $0x28] sm:$0xff]
    %v3100 = vld [vmem:[%s3093 + $0x30] sm:$0xff]
    %v3101 = vld [vmem:[%s3093 + $0x38] sm:$0xff]
    %v3102 = vld [vmem:[%s3093 + $0x40] sm:$0xff]
    %v3103 = vld [vmem:[%s3093 + $0x48] sm:$0xff]
    %v3104 = vld [vmem:[%s3093 + $0x50] sm:$0xff]
    %v3105 = vld [vmem:[%s3093 + $0x58] sm:$0xff]
    %v3106 = vld [vmem:[%s3093 + $0x60] sm:$0xff]
    %v3107 = vld [vmem:[%s3093 + $0x68] sm:$0xff]
    %v3108 = vld [vmem:[%s3093 + $0x70] sm:$0xff]
    %v3109 = vld [vmem:[%s3093 + $0x78] sm:$0xff]
    %v3110 = vld [vmem:[%s3093 + $0x80] sm:$0xff]
    %v3111 = vld [vmem:[%s3093 + $0x88] sm:$0xff]
    %v3112 = vld [vmem:[%s3093 + $0x90] sm:$0xff]
    %v3113 = vld [vmem:[%s3093 + $0x98] sm:$0xff]
    %v3114 = vld [vmem:[%s3093 + $0xa0] sm:$0xff]
    %v3115 = vld [vmem:[%s3093 + $0xa8] sm:$0xff]
    %v3116 = vld [vmem:[%s3093 + $0xb0] sm:$0xff]
    %v3117 = vld [vmem:[%s3093 + $0xb8] sm:$0xff]
    %v3118 = vld [vmem:[%s3093 + $0xc0] sm:$0xff]
    %v3119 = vld [vmem:[%s3093 + $0xc8] sm:$0xff]
    %v3120 = vld [vmem:[%s3093 + $0xd0] sm:$0xff]
    %v3121 = vld [vmem:[%s3093 + $0xd8] sm:$0xff]
    %v3122 = vld [vmem:[%s3093 + $0xe0] sm:$0xff]
    %v3123 = vld [vmem:[%s3093 + $0xe8] sm:$0xff]
    %v3124 = vld [vmem:[%s3093 + $0xf0] sm:$0xff]
    %v3125 = vld [vmem:[%s3093 + $0xf8] sm:$0xff]
    %v3126 = vld [vmem:[%s3093 + $0x100] sm:$0xff]
    %v3127 = vld [vmem:[%s3093 + $0x108] sm:$0xff]
    %v3128 = vld [vmem:[%s3093 + $0x110] sm:$0xff]
    %v3129 = vld [vmem:[%s3093 + $0x118] sm:$0xff]
    %v3130 = vld [vmem:[%s3093 + $0x120] sm:$0xff]
    %v3131 = vld [vmem:[%s3093 + $0x128] sm:$0xff]
    %v3132 = vld [vmem:[%s3093 + $0x130] sm:$0xff]
    %v3133 = vld [vmem:[%s3093 + $0x138] sm:$0xff]
    %v3134 = vld [vmem:[%s3093 + $0x140] sm:$0xff]
    %v3135 = vld [vmem:[%s3093 + $0x148] sm:$0xff]
    %v3136 = vld [vmem:[%s3093 + $0x150] sm:$0xff]
    %v3137 = vld [vmem:[%s3093 + $0x158] sm:$0xff]
    %v3138 = vld [vmem:[%s3093 + $0x160] sm:$0xff]
    %v3139 = vld [vmem:[%s3093 + $0x168] sm:$0xff]
    %v3140 = vld [vmem:[%s3093 + $0x170] sm:$0xff]
    %v3141 = vld [vmem:[%s3093 + $0x178] sm:$0xff]
    %v3142 = vld [vmem:[%s3093 + $0x180] sm:$0xff]
    %v3143 = vld [vmem:[%s3093 + $0x188] sm:$0xff]
    %v3144 = vld [vmem:[%s3093 + $0x190] sm:$0xff]
    %v3145 = vld [vmem:[%s3093 + $0x198] sm:$0xff]
    %v3146 = vld [vmem:[%s3093 + $0x1a0] sm:$0xff]
    %v3147 = vld [vmem:[%s3093 + $0x1a8] sm:$0xff]
    %v3148 = vld [vmem:[%s3093 + $0x1b0] sm:$0xff]
    %v3149 = vld [vmem:[%s3093 + $0x1b8] sm:$0xff]
    %v3150 = vld [vmem:[%s3093 + $0x1c0] sm:$0xff]
    %v3151 = vld [vmem:[%s3093 + $0x1c8] sm:$0xff]
    %v3152 = vld [vmem:[%s3093 + $0x1d0] sm:$0xff]
    %v3153 = vld [vmem:[%s3093 + $0x1d8] sm:$0xff]
    %v3154 = vld [vmem:[%s3093 + $0x1e0] sm:$0xff]
    %v3155 = vld [vmem:[%s3093 + $0x1e8] sm:$0xff]
    %v3156 = vld [vmem:[%s3093 + $0x1f0] sm:$0xff]
    %v3157 = vld [vmem:[%s3093 + $0x1f8] sm:$0xff]
    %s3158 = scalar_lea.vmem [#allocation8], 8
    %v3159 = vld [vmem:[%s3158] sm:$0x3]
    %v3160 = vrot.slane %v2955, 7
    %v3161 = vrot.slane %v2956, 7
    %v3162 = vrot.slane %v2957, 7
    %v3163 = vrot.slane %v2958, 7
    %v3164 = vrot.slane %v2959, 7
    %v3165 = vrot.slane %v2960, 7
    %v3166 = vrot.slane %v2961, 7
    %v3167 = vrot.slane %v2962, 7
    %v3168 = vsel %vm208, %v3164, %v3166
    %v3169 = vsel %vm208, %v3165, %v3167
    %v3170 = vsel %vm208, %v3162, %v3164
    %v3171 = vsel %vm208, %v3163, %v3165
    %v3172 = vsel %vm208, %v3160, %v3162
    %v3173 = vsel %vm208, %v3161, %v3163
    %v3174 = vsel %vm208, %v3166, %v3160
    %v3175 = vsel %vm208, %v3167, %v3161
    %v3176 = vrot.slane %v2955, 1
    %v3177 = vrot.slane %v2956, 1
    %v3178 = vrot.slane %v2957, 1
    %v3179 = vrot.slane %v2958, 1
    %v3180 = vrot.slane %v2959, 1
    %v3181 = vrot.slane %v2960, 1
    %v3182 = vrot.slane %v2961, 1
    %v3183 = vrot.slane %v2962, 1
    %v3184 = vsel %vm217, %v3180, %v3182
    %v3185 = vsel %vm217, %v3181, %v3183
    %v3186 = vsel %vm217, %v3178, %v3180
    %v3187 = vsel %vm217, %v3179, %v3181
    %v3188 = vsel %vm217, %v3176, %v3178
    %v3189 = vsel %vm217, %v3177, %v3179
    %v3190 = vsel %vm217, %v3182, %v3176
    %v3191 = vsel %vm217, %v3183, %v3177
    %3192 = vmatpush.msra.mxu0 %v3059
    %3193 = vmatpush.msra.mxu0 %v3057
    %3194 = vmatpush.msra.mxu0 %v3055
    %3195 = vmatpush.msra.mxu0 %v3053
    %3196 = vmatpush.msra.mxu0 %v3051
    %3197 = vmatpush.msra.mxu0 %v3049
    %3198 = vmatpush.msra.mxu0 %v3047
    %3199 = vmatpush.msra.mxu0 %v3045
    %3200 = vmatpush.msra.mxu0 %v3043
    %3201 = vmatpush.msra.mxu0 %v3041
    %3202 = vmatpush.msra.mxu0 %v3039
    %3203 = vmatpush.msra.mxu0 %v3037
    %3204 = vmatpush.msra.mxu0 %v3035
    %3205 = vmatpush.msra.mxu0 %v3033
    %3206 = vmatpush.msra.mxu0 %v3031
    %3207 = vmatpush.msra.mxu0 %v3029
    %3208 = vmatmul.f32.gmra.mxu0 %v2955
    %v3209 = vpop.f32.mrf.mxu0
    %v3210 = vadd.f32 0.0, %v3209
    %3211 = vmatmul.f32.gmra.mxu0 %v2957
    %v3212 = vpop.f32.mrf.mxu0
    %v3213 = vadd.f32 0.0, %v3212
    %3214 = vmatmul.f32.gmra.mxu0 %v2959
    %v3215 = vpop.f32.mrf.mxu0
    %v3216 = vadd.f32 0.0, %v3215
    %3217 = vmatmul.f32.gmra.mxu0 %v2961
    %v3218 = vpop.f32.mrf.mxu0
    %v3219 = vadd.f32 0.0, %v3218
    %3220 = vdwg.mxu0
    %3221 = vmatpush.msra.mxu0 %v3091
    %3222 = vmatpush.msra.mxu0 %v3089
    %3223 = vmatpush.msra.mxu0 %v3087
    %3224 = vmatpush.msra.mxu0 %v3085
    %3225 = vmatpush.msra.mxu0 %v3083
    %3226 = vmatpush.msra.mxu0 %v3081
    %3227 = vmatpush.msra.mxu0 %v3079
    %3228 = vmatpush.msra.mxu0 %v3077
    %3229 = vmatpush.msra.mxu0 %v3075
    %3230 = vmatpush.msra.mxu0 %v3073
    %3231 = vmatpush.msra.mxu0 %v3071
    %3232 = vmatpush.msra.mxu0 %v3069
    %3233 = vmatpush.msra.mxu0 %v3067
    %3234 = vmatpush.msra.mxu0 %v3065
    %3235 = vmatpush.msra.mxu0 %v3063
    %3236 = vmatpush.msra.mxu0 %v3061
    %3237 = vmatmul.f32.gmra.mxu0 %v2956
    %v3238 = vpop.f32.mrf.mxu0
    %v3239 = vadd.f32 %v3210, %v3238
    %3240 = vmatmul.f32.gmra.mxu0 %v2958
    %v3241 = vpop.f32.mrf.mxu0
    %v3242 = vadd.f32 %v3213, %v3241
    %3243 = vmatmul.f32.gmra.mxu0 %v2960
    %v3244 = vpop.f32.mrf.mxu0
    %v3245 = vadd.f32 %v3216, %v3244
    %3246 = vmatmul.f32.gmra.mxu0 %v2962
    %v3247 = vpop.f32.mrf.mxu0
    %v3248 = vadd.f32 %v3219, %v3247
    %3249 = vdwg.mxu0
    %3250 = vmatpush.msra.mxu0 %v3060
    %3251 = vmatpush.msra.mxu0 %v3058
    %3252 = vmatpush.msra.mxu0 %v3056
    %3253 = vmatpush.msra.mxu0 %v3054
    %3254 = vmatpush.msra.mxu0 %v3052
    %3255 = vmatpush.msra.mxu0 %v3050
    %3256 = vmatpush.msra.mxu0 %v3048
    %3257 = vmatpush.msra.mxu0 %v3046
    %3258 = vmatpush.msra.mxu0 %v3044
    %3259 = vmatpush.msra.mxu0 %v3042
    %3260 = vmatpush.msra.mxu0 %v3040
    %3261 = vmatpush.msra.mxu0 %v3038
    %3262 = vmatpush.msra.mxu0 %v3036
    %3263 = vmatpush.msra.mxu0 %v3034
    %3264 = vmatpush.msra.mxu0 %v3032
    %3265 = vmatpush.msra.mxu0 %v3030
    %3266 = vmatmul.f32.gmra.mxu0 %v2955
    %v3267 = vpop.f32.mrf.mxu0
    %v3268 = vadd.f32 0.0, %v3267
    %3269 = vmatmul.f32.gmra.mxu0 %v2957
    %v3270 = vpop.f32.mrf.mxu0
    %v3271 = vadd.f32 0.0, %v3270
    %3272 = vmatmul.f32.gmra.mxu0 %v2959
    %v3273 = vpop.f32.mrf.mxu0
    %v3274 = vadd.f32 0.0, %v3273
    %3275 = vmatmul.f32.gmra.mxu0 %v2961
    %v3276 = vpop.f32.mrf.mxu0
    %v3277 = vadd.f32 0.0, %v3276
    %3278 = vdwg.mxu0
    %3279 = vmatpush.msra.mxu0 %v3092
    %3280 = vmatpush.msra.mxu0 %v3090
    %3281 = vmatpush.msra.mxu0 %v3088
    %3282 = vmatpush.msra.mxu0 %v3086
    %3283 = vmatpush.msra.mxu0 %v3084
    %3284 = vmatpush.msra.mxu0 %v3082
    %3285 = vmatpush.msra.mxu0 %v3080
    %3286 = vmatpush.msra.mxu0 %v3078
    %3287 = vmatpush.msra.mxu0 %v3076
    %3288 = vmatpush.msra.mxu0 %v3074
    %3289 = vmatpush.msra.mxu0 %v3072
    %3290 = vmatpush.msra.mxu0 %v3070
    %3291 = vmatpush.msra.mxu0 %v3068
    %3292 = vmatpush.msra.mxu0 %v3066
    %3293 = vmatpush.msra.mxu0 %v3064
    %3294 = vmatpush.msra.mxu0 %v3062
    %3295 = vmatmul.f32.gmra.mxu0 %v2956
    %v3296 = vpop.f32.mrf.mxu0
    %v3297 = vadd.f32 %v3268, %v3296
    %3298 = vmatmul.f32.gmra.mxu0 %v2958
    %v3299 = vpop.f32.mrf.mxu0
    %v3300 = vadd.f32 %v3271, %v3299
    %3301 = vmatmul.f32.gmra.mxu0 %v2960
    %v3302 = vpop.f32.mrf.mxu0
    %v3303 = vadd.f32 %v3274, %v3302
    %3304 = vmatmul.f32.gmra.mxu0 %v2962
    %v3305 = vpop.f32.mrf.mxu0
    %v3306 = vadd.f32 %v3277, %v3305
    %3307 = vdwg.mxu0
    %3308 = vmatpush.msra.mxu0 %v2994
    %3309 = vmatpush.msra.mxu0 %v2992
    %3310 = vmatpush.msra.mxu0 %v2990
    %3311 = vmatpush.msra.mxu0 %v2988
    %3312 = vmatpush.msra.mxu0 %v2986
    %3313 = vmatpush.msra.mxu0 %v2984
    %3314 = vmatpush.msra.mxu0 %v2982
    %3315 = vmatpush.msra.mxu0 %v2980
    %3316 = vmatpush.msra.mxu0 %v2978
    %3317 = vmatpush.msra.mxu0 %v2976
    %3318 = vmatpush.msra.mxu0 %v2974
    %3319 = vmatpush.msra.mxu0 %v2972
    %3320 = vmatpush.msra.mxu0 %v2970
    %3321 = vmatpush.msra.mxu0 %v2968
    %3322 = vmatpush.msra.mxu0 %v2966
    %3323 = vmatpush.msra.mxu0 %v2964
    %3324 = vmatmul.f32.gmra.mxu0 %v3174
    %v3325 = vpop.f32.mrf.mxu0
    %v3326 = vadd.f32 %v3239, %v3325
    %3327 = vmatmul.f32.gmra.mxu0 %v3172
    %v3328 = vpop.f32.mrf.mxu0
    %v3329 = vadd.f32 %v3242, %v3328
    %3330 = vmatmul.f32.gmra.mxu0 %v3170
    %v3331 = vpop.f32.mrf.mxu0
    %v3332 = vadd.f32 %v3245, %v3331
    %3333 = vmatmul.f32.gmra.mxu0 %v3168
    %v3334 = vpop.f32.mrf.mxu0
    %v3335 = vadd.f32 %v3248, %v3334
    %3336 = vdwg.mxu0
    %3337 = vmatpush.msra.mxu0 %v3026
    %3338 = vmatpush.msra.mxu0 %v3024
    %3339 = vmatpush.msra.mxu0 %v3022
    %3340 = vmatpush.msra.mxu0 %v3020
    %3341 = vmatpush.msra.mxu0 %v3018
    %3342 = vmatpush.msra.mxu0 %v3016
    %3343 = vmatpush.msra.mxu0 %v3014
    %3344 = vmatpush.msra.mxu0 %v3012
    %3345 = vmatpush.msra.mxu0 %v3010
    %3346 = vmatpush.msra.mxu0 %v3008
    %3347 = vmatpush.msra.mxu0 %v3006
    %3348 = vmatpush.msra.mxu0 %v3004
    %3349 = vmatpush.msra.mxu0 %v3002
    %3350 = vmatpush.msra.mxu0 %v3000
    %3351 = vmatpush.msra.mxu0 %v2998
    %3352 = vmatpush.msra.mxu0 %v2996
    %3353 = vmatmul.f32.gmra.mxu0 %v3175
    %v3354 = vpop.f32.mrf.mxu0
    %v3355 = vadd.f32 %v3326, %v3354
    %3356 = vmatmul.f32.gmra.mxu0 %v3173
    %v3357 = vpop.f32.mrf.mxu0
    %v3358 = vadd.f32 %v3329, %v3357
    %3359 = vmatmul.f32.gmra.mxu0 %v3171
    %v3360 = vpop.f32.mrf.mxu0
    %v3361 = vadd.f32 %v3332, %v3360
    %3362 = vmatmul.f32.gmra.mxu0 %v3169
    %v3363 = vpop.f32.mrf.mxu0
    %v3364 = vadd.f32 %v3335, %v3363
    %3365 = vdwg.mxu0
    %3366 = vmatpush.msra.mxu0 %v2995
    %3367 = vmatpush.msra.mxu0 %v2993
    %3368 = vmatpush.msra.mxu0 %v2991
    %3369 = vmatpush.msra.mxu0 %v2989
    %3370 = vmatpush.msra.mxu0 %v2987
    %3371 = vmatpush.msra.mxu0 %v2985
    %3372 = vmatpush.msra.mxu0 %v2983
    %3373 = vmatpush.msra.mxu0 %v2981
    %3374 = vmatpush.msra.mxu0 %v2979
    %3375 = vmatpush.msra.mxu0 %v2977
    %3376 = vmatpush.msra.mxu0 %v2975
    %3377 = vmatpush.msra.mxu0 %v2973
    %3378 = vmatpush.msra.mxu0 %v2971
    %3379 = vmatpush.msra.mxu0 %v2969
    %3380 = vmatpush.msra.mxu0 %v2967
    %3381 = vmatpush.msra.mxu0 %v2965
    %3382 = vmatmul.f32.gmra.mxu0 %v3174
    %v3383 = vpop.f32.mrf.mxu0
    %v3384 = vadd.f32 %v3297, %v3383
    %3385 = vmatmul.f32.gmra.mxu0 %v3172
    %v3386 = vpop.f32.mrf.mxu0
    %v3387 = vadd.f32 %v3300, %v3386
    %3388 = vmatmul.f32.gmra.mxu0 %v3170
    %v3389 = vpop.f32.mrf.mxu0
    %v3390 = vadd.f32 %v3303, %v3389
    %3391 = vmatmul.f32.gmra.mxu0 %v3168
    %v3392 = vpop.f32.mrf.mxu0
    %v3393 = vadd.f32 %v3306, %v3392
    %3394 = vdwg.mxu0
    %3395 = vmatpush.msra.mxu0 %v3027
    %3396 = vmatpush.msra.mxu0 %v3025
    %3397 = vmatpush.msra.mxu0 %v3023
    %3398 = vmatpush.msra.mxu0 %v3021
    %3399 = vmatpush.msra.mxu0 %v3019
    %3400 = vmatpush.msra.mxu0 %v3017
    %3401 = vmatpush.msra.mxu0 %v3015
    %3402 = vmatpush.msra.mxu0 %v3013
    %3403 = vmatpush.msra.mxu0 %v3011
    %3404 = vmatpush.msra.mxu0 %v3009
    %3405 = vmatpush.msra.mxu0 %v3007
    %3406 = vmatpush.msra.mxu0 %v3005
    %3407 = vmatpush.msra.mxu0 %v3003
    %3408 = vmatpush.msra.mxu0 %v3001
    %3409 = vmatpush.msra.mxu0 %v2999
    %3410 = vmatpush.msra.mxu0 %v2997
    %3411 = vmatmul.f32.gmra.mxu0 %v3175
    %v3412 = vpop.f32.mrf.mxu0
    %v3413 = vadd.f32 %v3384, %v3412
    %3414 = vmatmul.f32.gmra.mxu0 %v3173
    %v3415 = vpop.f32.mrf.mxu0
    %v3416 = vadd.f32 %v3387, %v3415
    %3417 = vmatmul.f32.gmra.mxu0 %v3171
    %v3418 = vpop.f32.mrf.mxu0
    %v3419 = vadd.f32 %v3390, %v3418
    %3420 = vmatmul.f32.gmra.mxu0 %v3169
    %v3421 = vpop.f32.mrf.mxu0
    %v3422 = vadd.f32 %v3393, %v3421
    %3423 = vdwg.mxu0
    %3424 = vmatpush.msra.mxu0 %v3124
    %3425 = vmatpush.msra.mxu0 %v3122
    %3426 = vmatpush.msra.mxu0 %v3120
    %3427 = vmatpush.msra.mxu0 %v3118
    %3428 = vmatpush.msra.mxu0 %v3116
    %3429 = vmatpush.msra.mxu0 %v3114
    %3430 = vmatpush.msra.mxu0 %v3112
    %3431 = vmatpush.msra.mxu0 %v3110
    %3432 = vmatpush.msra.mxu0 %v3108
    %3433 = vmatpush.msra.mxu0 %v3106
    %3434 = vmatpush.msra.mxu0 %v3104
    %3435 = vmatpush.msra.mxu0 %v3102
    %3436 = vmatpush.msra.mxu0 %v3100
    %3437 = vmatpush.msra.mxu0 %v3098
    %3438 = vmatpush.msra.mxu0 %v3096
    %3439 = vmatpush.msra.mxu0 %v3094
    %3440 = vmatmul.f32.gmra.mxu0 %v3188
    %v3441 = vpop.f32.mrf.mxu0
    %v3442 = vadd.f32 0.0, %v3441
    %3443 = vmatmul.f32.gmra.mxu0 %v3186
    %v3444 = vpop.f32.mrf.mxu0
    %v3445 = vadd.f32 0.0, %v3444
    %3446 = vmatmul.f32.gmra.mxu0 %v3184
    %v3447 = vpop.f32.mrf.mxu0
    %v3448 = vadd.f32 0.0, %v3447
    %3449 = vmatmul.f32.gmra.mxu0 %v3190
    %v3450 = vpop.f32.mrf.mxu0
    %v3451 = vadd.f32 0.0, %v3450
    %3452 = vdwg.mxu0
    %3453 = vmatpush.msra.mxu0 %v3156
    %3454 = vmatpush.msra.mxu0 %v3154
    %3455 = vmatpush.msra.mxu0 %v3152
    %3456 = vmatpush.msra.mxu0 %v3150
    %3457 = vmatpush.msra.mxu0 %v3148
    %3458 = vmatpush.msra.mxu0 %v3146
    %3459 = vmatpush.msra.mxu0 %v3144
    %3460 = vmatpush.msra.mxu0 %v3142
    %3461 = vmatpush.msra.mxu0 %v3140
    %3462 = vmatpush.msra.mxu0 %v3138
    %3463 = vmatpush.msra.mxu0 %v3136
    %3464 = vmatpush.msra.mxu0 %v3134
    %3465 = vmatpush.msra.mxu0 %v3132
    %3466 = vmatpush.msra.mxu0 %v3130
    %3467 = vmatpush.msra.mxu0 %v3128
    %3468 = vmatpush.msra.mxu0 %v3126
    %3469 = vmatmul.f32.gmra.mxu0 %v3189
    %v3470 = vpop.f32.mrf.mxu0
    %v3471 = vadd.f32 %v3442, %v3470
    %3472 = vmatmul.f32.gmra.mxu0 %v3187
    %v3473 = vpop.f32.mrf.mxu0
    %v3474 = vadd.f32 %v3445, %v3473
    %3475 = vmatmul.f32.gmra.mxu0 %v3185
    %v3476 = vpop.f32.mrf.mxu0
    %v3477 = vadd.f32 %v3448, %v3476
    %3478 = vmatmul.f32.gmra.mxu0 %v3191
    %v3479 = vpop.f32.mrf.mxu0
    %v3480 = vadd.f32 %v3451, %v3479
    %3481 = vdwg.mxu0
    %3482 = vmatpush.msra.mxu0 %v3125
    %3483 = vmatpush.msra.mxu0 %v3123
    %3484 = vmatpush.msra.mxu0 %v3121
    %3485 = vmatpush.msra.mxu0 %v3119
    %3486 = vmatpush.msra.mxu0 %v3117
    %3487 = vmatpush.msra.mxu0 %v3115
    %3488 = vmatpush.msra.mxu0 %v3113
    %3489 = vmatpush.msra.mxu0 %v3111
    %3490 = vmatpush.msra.mxu0 %v3109
    %3491 = vmatpush.msra.mxu0 %v3107
    %3492 = vmatpush.msra.mxu0 %v3105
    %3493 = vmatpush.msra.mxu0 %v3103
    %3494 = vmatpush.msra.mxu0 %v3101
    %3495 = vmatpush.msra.mxu0 %v3099
    %3496 = vmatpush.msra.mxu0 %v3097
    %3497 = vmatpush.msra.mxu0 %v3095
    %3498 = vmatmul.f32.gmra.mxu0 %v3188
    %v3499 = vpop.f32.mrf.mxu0
    %v3500 = vadd.f32 0.0, %v3499
    %3501 = vmatmul.f32.gmra.mxu0 %v3186
    %v3502 = vpop.f32.mrf.mxu0
    %v3503 = vadd.f32 0.0, %v3502
    %3504 = vmatmul.f32.gmra.mxu0 %v3184
    %v3505 = vpop.f32.mrf.mxu0
    %v3506 = vadd.f32 0.0, %v3505
    %3507 = vmatmul.f32.gmra.mxu0 %v3190
    %v3508 = vpop.f32.mrf.mxu0
    %v3509 = vadd.f32 0.0, %v3508
    %3510 = vdwg.mxu0
    %3511 = vmatpush.msra.mxu0 %v3157
    %3512 = vmatpush.msra.mxu0 %v3155
    %3513 = vmatpush.msra.mxu0 %v3153
    %3514 = vmatpush.msra.mxu0 %v3151
    %3515 = vmatpush.msra.mxu0 %v3149
    %3516 = vmatpush.msra.mxu0 %v3147
    %3517 = vmatpush.msra.mxu0 %v3145
    %3518 = vmatpush.msra.mxu0 %v3143
    %3519 = vmatpush.msra.mxu0 %v3141
    %3520 = vmatpush.msra.mxu0 %v3139
    %3521 = vmatpush.msra.mxu0 %v3137
    %3522 = vmatpush.msra.mxu0 %v3135
    %3523 = vmatpush.msra.mxu0 %v3133
    %3524 = vmatpush.msra.mxu0 %v3131
    %3525 = vmatpush.msra.mxu0 %v3129
    %3526 = vmatpush.msra.mxu0 %v3127
    %3527 = vmatmul.f32.gmra.mxu0 %v3189
    %v3528 = vpop.f32.mrf.mxu0
    %v3529 = vadd.f32 %v3500, %v3528
    %3530 = vmatmul.f32.gmra.mxu0 %v3187
    %v3531 = vpop.f32.mrf.mxu0
    %v3532 = vadd.f32 %v3503, %v3531
    %3533 = vmatmul.f32.gmra.mxu0 %v3185
    %v3534 = vpop.f32.mrf.mxu0
    %v3535 = vadd.f32 %v3506, %v3534
    %3536 = vmatmul.f32.gmra.mxu0 %v3191
    %v3537 = vpop.f32.mrf.mxu0
    %v3538 = vadd.f32 %v3509, %v3537
    %3539 = vdwg.mxu0
    %v3540 = vadd.f32 %v3355, %v3471
    %v3541 = vadd.f32 %v3413, %v3529
    %v3542 = vadd.f32 %v3358, %v3474
    %v3543 = vadd.f32 %v3416, %v3532
    %v3544 = vadd.f32 %v3361, %v3477
    %v3545 = vadd.f32 %v3419, %v3535
    %v3546 = vadd.f32 %v3364, %v3480
    %v3547 = vadd.f32 %v3422, %v3538
    %v3549 = vperm.slane %v3159, 0
    %v3550 = vperm.slane %v3159, 1
    %v3553 = vadd.f32 %v3540, %v3549
    %v3554 = vadd.f32 %v3541, %v3550
    %v3555 = vadd.f32 %v3542, %v3549
    %v3556 = vadd.f32 %v3543, %v3550
    %v3557 = vadd.f32 %v3544, %v3549
    %v3558 = vadd.f32 %v3545, %v3550
    %v3559 = vadd.f32 %v3546, %v3549
    %v3560 = vadd.f32 %v3547, %v3550
    %v3561 = vmax.f32 %v3553, 0.0
    %v3562 = vmax.f32 %v3554, 0.0
    %v3563 = vmax.f32 %v3555, 0.0
    %v3564 = vmax.f32 %v3556, 0.0
    %v3565 = vmax.f32 %v3557, 0.0
    %v3566 = vmax.f32 %v3558, 0.0
    %v3567 = vmax.f32 %v3559, 0.0
    %v3568 = vmax.f32 %v3560, 0.0
    %v3569 = vmul.f32 %v3561, %v484
    %v3570 = vmul.f32 %v3562, %v484
    %v3571 = vmul.f32 %v3563, %v489
    %v3572 = vmul.f32 %v3564, %v489
    %v3573 = vmul.f32 %v3565, %v494
    %v3574 = vmul.f32 %v3566, %v494
    %v3575 = vmul.f32 %v3567, %v499
    %v3576 = vmul.f32 %v3568, %v499
    %s3577 = scalar_lea.vmem [#allocation7], 7680
    %v3578 = vld [vmem:[%s3577] sm:$0xff]
    %v3579 = vld [vmem:[%s3577 + $0x8] sm:$0xff]
    %v3580 = vld [vmem:[%s3577 + $0x10] sm:$0xff]
    %v3581 = vld [vmem:[%s3577 + $0x18] sm:$0xff]
    %v3582 = vld [vmem:[%s3577 + $0x20] sm:$0xff]
    %v3583 = vld [vmem:[%s3577 + $0x28] sm:$0xff]
    %v3584 = vld [vmem:[%s3577 + $0x30] sm:$0xff]
    %v3585 = vld [vmem:[%s3577 + $0x38] sm:$0xff]
    %v3586 = vld [vmem:[%s3577 + $0x40] sm:$0xff]
    %v3587 = vld [vmem:[%s3577 + $0x48] sm:$0xff]
    %v3588 = vld [vmem:[%s3577 + $0x50] sm:$0xff]
    %v3589 = vld [vmem:[%s3577 + $0x58] sm:$0xff]
    %v3590 = vld [vmem:[%s3577 + $0x60] sm:$0xff]
    %v3591 = vld [vmem:[%s3577 + $0x68] sm:$0xff]
    %v3592 = vld [vmem:[%s3577 + $0x70] sm:$0xff]
    %v3593 = vld [vmem:[%s3577 + $0x78] sm:$0xff]
    %v3594 = vld [vmem:[%s3577 + $0x80] sm:$0xff]
    %v3595 = vld [vmem:[%s3577 + $0x88] sm:$0xff]
    %v3596 = vld [vmem:[%s3577 + $0x90] sm:$0xff]
    %v3597 = vld [vmem:[%s3577 + $0x98] sm:$0xff]
    %v3598 = vld [vmem:[%s3577 + $0xa0] sm:$0xff]
    %v3599 = vld [vmem:[%s3577 + $0xa8] sm:$0xff]
    %v3600 = vld [vmem:[%s3577 + $0xb0] sm:$0xff]
    %v3601 = vld [vmem:[%s3577 + $0xb8] sm:$0xff]
    %v3602 = vld [vmem:[%s3577 + $0xc0] sm:$0xff]
    %v3603 = vld [vmem:[%s3577 + $0xc8] sm:$0xff]
    %v3604 = vld [vmem:[%s3577 + $0xd0] sm:$0xff]
    %v3605 = vld [vmem:[%s3577 + $0xd8] sm:$0xff]
    %v3606 = vld [vmem:[%s3577 + $0xe0] sm:$0xff]
    %v3607 = vld [vmem:[%s3577 + $0xe8] sm:$0xff]
    %v3608 = vld [vmem:[%s3577 + $0xf0] sm:$0xff]
    %v3609 = vld [vmem:[%s3577 + $0xf8] sm:$0xff]
    %v3610 = vld [vmem:[%s3577 + $0x100] sm:$0xff]
    %v3611 = vld [vmem:[%s3577 + $0x108] sm:$0xff]
    %v3612 = vld [vmem:[%s3577 + $0x110] sm:$0xff]
    %v3613 = vld [vmem:[%s3577 + $0x118] sm:$0xff]
    %v3614 = vld [vmem:[%s3577 + $0x120] sm:$0xff]
    %v3615 = vld [vmem:[%s3577 + $0x128] sm:$0xff]
    %v3616 = vld [vmem:[%s3577 + $0x130] sm:$0xff]
    %v3617 = vld [vmem:[%s3577 + $0x138] sm:$0xff]
    %v3618 = vld [vmem:[%s3577 + $0x140] sm:$0xff]
    %v3619 = vld [vmem:[%s3577 + $0x148] sm:$0xff]
    %v3620 = vld [vmem:[%s3577 + $0x150] sm:$0xff]
    %v3621 = vld [vmem:[%s3577 + $0x158] sm:$0xff]
    %v3622 = vld [vmem:[%s3577 + $0x160] sm:$0xff]
    %v3623 = vld [vmem:[%s3577 + $0x168] sm:$0xff]
    %v3624 = vld [vmem:[%s3577 + $0x170] sm:$0xff]
    %v3625 = vld [vmem:[%s3577 + $0x178] sm:$0xff]
    %v3626 = vld [vmem:[%s3577 + $0x180] sm:$0xff]
    %v3627 = vld [vmem:[%s3577 + $0x188] sm:$0xff]
    %v3628 = vld [vmem:[%s3577 + $0x190] sm:$0xff]
    %v3629 = vld [vmem:[%s3577 + $0x198] sm:$0xff]
    %v3630 = vld [vmem:[%s3577 + $0x1a0] sm:$0xff]
    %v3631 = vld [vmem:[%s3577 + $0x1a8] sm:$0xff]
    %v3632 = vld [vmem:[%s3577 + $0x1b0] sm:$0xff]
    %v3633 = vld [vmem:[%s3577 + $0x1b8] sm:$0xff]
    %v3634 = vld [vmem:[%s3577 + $0x1c0] sm:$0xff]
    %v3635 = vld [vmem:[%s3577 + $0x1c8] sm:$0xff]
    %v3636 = vld [vmem:[%s3577 + $0x1d0] sm:$0xff]
    %v3637 = vld [vmem:[%s3577 + $0x1d8] sm:$0xff]
    %v3638 = vld [vmem:[%s3577 + $0x1e0] sm:$0xff]
    %v3639 = vld [vmem:[%s3577 + $0x1e8] sm:$0xff]
    %v3640 = vld [vmem:[%s3577 + $0x1f0] sm:$0xff]
    %v3641 = vld [vmem:[%s3577 + $0x1f8] sm:$0xff]
    %s3642 = scalar_lea.vmem [#allocation7], 8192
    %v3643 = vld [vmem:[%s3642] sm:$0xff]
    %v3644 = vld [vmem:[%s3642 + $0x8] sm:$0xff]
    %v3645 = vld [vmem:[%s3642 + $0x10] sm:$0xff]
    %v3646 = vld [vmem:[%s3642 + $0x18] sm:$0xff]
    %v3647 = vld [vmem:[%s3642 + $0x20] sm:$0xff]
    %v3648 = vld [vmem:[%s3642 + $0x28] sm:$0xff]
    %v3649 = vld [vmem:[%s3642 + $0x30] sm:$0xff]
    %v3650 = vld [vmem:[%s3642 + $0x38] sm:$0xff]
    %v3651 = vld [vmem:[%s3642 + $0x40] sm:$0xff]
    %v3652 = vld [vmem:[%s3642 + $0x48] sm:$0xff]
    %v3653 = vld [vmem:[%s3642 + $0x50] sm:$0xff]
    %v3654 = vld [vmem:[%s3642 + $0x58] sm:$0xff]
    %v3655 = vld [vmem:[%s3642 + $0x60] sm:$0xff]
    %v3656 = vld [vmem:[%s3642 + $0x68] sm:$0xff]
    %v3657 = vld [vmem:[%s3642 + $0x70] sm:$0xff]
    %v3658 = vld [vmem:[%s3642 + $0x78] sm:$0xff]
    %v3659 = vld [vmem:[%s3642 + $0x80] sm:$0xff]
    %v3660 = vld [vmem:[%s3642 + $0x88] sm:$0xff]
    %v3661 = vld [vmem:[%s3642 + $0x90] sm:$0xff]
    %v3662 = vld [vmem:[%s3642 + $0x98] sm:$0xff]
    %v3663 = vld [vmem:[%s3642 + $0xa0] sm:$0xff]
    %v3664 = vld [vmem:[%s3642 + $0xa8] sm:$0xff]
    %v3665 = vld [vmem:[%s3642 + $0xb0] sm:$0xff]
    %v3666 = vld [vmem:[%s3642 + $0xb8] sm:$0xff]
    %v3667 = vld [vmem:[%s3642 + $0xc0] sm:$0xff]
    %v3668 = vld [vmem:[%s3642 + $0xc8] sm:$0xff]
    %v3669 = vld [vmem:[%s3642 + $0xd0] sm:$0xff]
    %v3670 = vld [vmem:[%s3642 + $0xd8] sm:$0xff]
    %v3671 = vld [vmem:[%s3642 + $0xe0] sm:$0xff]
    %v3672 = vld [vmem:[%s3642 + $0xe8] sm:$0xff]
    %v3673 = vld [vmem:[%s3642 + $0xf0] sm:$0xff]
    %v3674 = vld [vmem:[%s3642 + $0xf8] sm:$0xff]
    %v3675 = vld [vmem:[%s3642 + $0x100] sm:$0xff]
    %v3676 = vld [vmem:[%s3642 + $0x108] sm:$0xff]
    %v3677 = vld [vmem:[%s3642 + $0x110] sm:$0xff]
    %v3678 = vld [vmem:[%s3642 + $0x118] sm:$0xff]
    %v3679 = vld [vmem:[%s3642 + $0x120] sm:$0xff]
    %v3680 = vld [vmem:[%s3642 + $0x128] sm:$0xff]
    %v3681 = vld [vmem:[%s3642 + $0x130] sm:$0xff]
    %v3682 = vld [vmem:[%s3642 + $0x138] sm:$0xff]
    %v3683 = vld [vmem:[%s3642 + $0x140] sm:$0xff]
    %v3684 = vld [vmem:[%s3642 + $0x148] sm:$0xff]
    %v3685 = vld [vmem:[%s3642 + $0x150] sm:$0xff]
    %v3686 = vld [vmem:[%s3642 + $0x158] sm:$0xff]
    %v3687 = vld [vmem:[%s3642 + $0x160] sm:$0xff]
    %v3688 = vld [vmem:[%s3642 + $0x168] sm:$0xff]
    %v3689 = vld [vmem:[%s3642 + $0x170] sm:$0xff]
    %v3690 = vld [vmem:[%s3642 + $0x178] sm:$0xff]
    %v3691 = vld [vmem:[%s3642 + $0x180] sm:$0xff]
    %v3692 = vld [vmem:[%s3642 + $0x188] sm:$0xff]
    %v3693 = vld [vmem:[%s3642 + $0x190] sm:$0xff]
    %v3694 = vld [vmem:[%s3642 + $0x198] sm:$0xff]
    %v3695 = vld [vmem:[%s3642 + $0x1a0] sm:$0xff]
    %v3696 = vld [vmem:[%s3642 + $0x1a8] sm:$0xff]
    %v3697 = vld [vmem:[%s3642 + $0x1b0] sm:$0xff]
    %v3698 = vld [vmem:[%s3642 + $0x1b8] sm:$0xff]
    %v3699 = vld [vmem:[%s3642 + $0x1c0] sm:$0xff]
    %v3700 = vld [vmem:[%s3642 + $0x1c8] sm:$0xff]
    %v3701 = vld [vmem:[%s3642 + $0x1d0] sm:$0xff]
    %v3702 = vld [vmem:[%s3642 + $0x1d8] sm:$0xff]
    %v3703 = vld [vmem:[%s3642 + $0x1e0] sm:$0xff]
    %v3704 = vld [vmem:[%s3642 + $0x1e8] sm:$0xff]
    %v3705 = vld [vmem:[%s3642 + $0x1f0] sm:$0xff]
    %v3706 = vld [vmem:[%s3642 + $0x1f8] sm:$0xff]
    %s3707 = scalar_lea.vmem [#allocation7], 8704
    %v3708 = vld [vmem:[%s3707] sm:$0xff]
    %v3709 = vld [vmem:[%s3707 + $0x8] sm:$0xff]
    %v3710 = vld [vmem:[%s3707 + $0x10] sm:$0xff]
    %v3711 = vld [vmem:[%s3707 + $0x18] sm:$0xff]
    %v3712 = vld [vmem:[%s3707 + $0x20] sm:$0xff]
    %v3713 = vld [vmem:[%s3707 + $0x28] sm:$0xff]
    %v3714 = vld [vmem:[%s3707 + $0x30] sm:$0xff]
    %v3715 = vld [vmem:[%s3707 + $0x38] sm:$0xff]
    %v3716 = vld [vmem:[%s3707 + $0x40] sm:$0xff]
    %v3717 = vld [vmem:[%s3707 + $0x48] sm:$0xff]
    %v3718 = vld [vmem:[%s3707 + $0x50] sm:$0xff]
    %v3719 = vld [vmem:[%s3707 + $0x58] sm:$0xff]
    %v3720 = vld [vmem:[%s3707 + $0x60] sm:$0xff]
    %v3721 = vld [vmem:[%s3707 + $0x68] sm:$0xff]
    %v3722 = vld [vmem:[%s3707 + $0x70] sm:$0xff]
    %v3723 = vld [vmem:[%s3707 + $0x78] sm:$0xff]
    %v3724 = vld [vmem:[%s3707 + $0x80] sm:$0xff]
    %v3725 = vld [vmem:[%s3707 + $0x88] sm:$0xff]
    %v3726 = vld [vmem:[%s3707 + $0x90] sm:$0xff]
    %v3727 = vld [vmem:[%s3707 + $0x98] sm:$0xff]
    %v3728 = vld [vmem:[%s3707 + $0xa0] sm:$0xff]
    %v3729 = vld [vmem:[%s3707 + $0xa8] sm:$0xff]
    %v3730 = vld [vmem:[%s3707 + $0xb0] sm:$0xff]
    %v3731 = vld [vmem:[%s3707 + $0xb8] sm:$0xff]
    %v3732 = vld [vmem:[%s3707 + $0xc0] sm:$0xff]
    %v3733 = vld [vmem:[%s3707 + $0xc8] sm:$0xff]
    %v3734 = vld [vmem:[%s3707 + $0xd0] sm:$0xff]
    %v3735 = vld [vmem:[%s3707 + $0xd8] sm:$0xff]
    %v3736 = vld [vmem:[%s3707 + $0xe0] sm:$0xff]
    %v3737 = vld [vmem:[%s3707 + $0xe8] sm:$0xff]
    %v3738 = vld [vmem:[%s3707 + $0xf0] sm:$0xff]
    %v3739 = vld [vmem:[%s3707 + $0xf8] sm:$0xff]
    %v3740 = vld [vmem:[%s3707 + $0x100] sm:$0xff]
    %v3741 = vld [vmem:[%s3707 + $0x108] sm:$0xff]
    %v3742 = vld [vmem:[%s3707 + $0x110] sm:$0xff]
    %v3743 = vld [vmem:[%s3707 + $0x118] sm:$0xff]
    %v3744 = vld [vmem:[%s3707 + $0x120] sm:$0xff]
    %v3745 = vld [vmem:[%s3707 + $0x128] sm:$0xff]
    %v3746 = vld [vmem:[%s3707 + $0x130] sm:$0xff]
    %v3747 = vld [vmem:[%s3707 + $0x138] sm:$0xff]
    %v3748 = vld [vmem:[%s3707 + $0x140] sm:$0xff]
    %v3749 = vld [vmem:[%s3707 + $0x148] sm:$0xff]
    %v3750 = vld [vmem:[%s3707 + $0x150] sm:$0xff]
    %v3751 = vld [vmem:[%s3707 + $0x158] sm:$0xff]
    %v3752 = vld [vmem:[%s3707 + $0x160] sm:$0xff]
    %v3753 = vld [vmem:[%s3707 + $0x168] sm:$0xff]
    %v3754 = vld [vmem:[%s3707 + $0x170] sm:$0xff]
    %v3755 = vld [vmem:[%s3707 + $0x178] sm:$0xff]
    %v3756 = vld [vmem:[%s3707 + $0x180] sm:$0xff]
    %v3757 = vld [vmem:[%s3707 + $0x188] sm:$0xff]
    %v3758 = vld [vmem:[%s3707 + $0x190] sm:$0xff]
    %v3759 = vld [vmem:[%s3707 + $0x198] sm:$0xff]
    %v3760 = vld [vmem:[%s3707 + $0x1a0] sm:$0xff]
    %v3761 = vld [vmem:[%s3707 + $0x1a8] sm:$0xff]
    %v3762 = vld [vmem:[%s3707 + $0x1b0] sm:$0xff]
    %v3763 = vld [vmem:[%s3707 + $0x1b8] sm:$0xff]
    %v3764 = vld [vmem:[%s3707 + $0x1c0] sm:$0xff]
    %v3765 = vld [vmem:[%s3707 + $0x1c8] sm:$0xff]
    %v3766 = vld [vmem:[%s3707 + $0x1d0] sm:$0xff]
    %v3767 = vld [vmem:[%s3707 + $0x1d8] sm:$0xff]
    %v3768 = vld [vmem:[%s3707 + $0x1e0] sm:$0xff]
    %v3769 = vld [vmem:[%s3707 + $0x1e8] sm:$0xff]
    %v3770 = vld [vmem:[%s3707 + $0x1f0] sm:$0xff]
    %v3771 = vld [vmem:[%s3707 + $0x1f8] sm:$0xff]
    %s3772 = scalar_lea.vmem [#allocation8], 10
    %v3773 = vld [vmem:[%s3772] sm:$0x3]
    %v3774 = vrot.slane %v3569, 7
    %v3775 = vrot.slane %v3570, 7
    %v3776 = vrot.slane %v3571, 7
    %v3777 = vrot.slane %v3572, 7
    %v3778 = vrot.slane %v3573, 7
    %v3779 = vrot.slane %v3574, 7
    %v3780 = vrot.slane %v3575, 7
    %v3781 = vrot.slane %v3576, 7
    %v3782 = vsel %vm208, %v3778, %v3780
    %v3783 = vsel %vm208, %v3779, %v3781
    %v3784 = vsel %vm208, %v3776, %v3778
    %v3785 = vsel %vm208, %v3777, %v3779
    %v3786 = vsel %vm208, %v3774, %v3776
    %v3787 = vsel %vm208, %v3775, %v3777
    %v3788 = vsel %vm208, %v3780, %v3774
    %v3789 = vsel %vm208, %v3781, %v3775
    %v3790 = vrot.slane %v3569, 1
    %v3791 = vrot.slane %v3570, 1
    %v3792 = vrot.slane %v3571, 1
    %v3793 = vrot.slane %v3572, 1
    %v3794 = vrot.slane %v3573, 1
    %v3795 = vrot.slane %v3574, 1
    %v3796 = vrot.slane %v3575, 1
    %v3797 = vrot.slane %v3576, 1
    %v3798 = vsel %vm217, %v3794, %v3796
    %v3799 = vsel %vm217, %v3795, %v3797
    %v3800 = vsel %vm217, %v3792, %v3794
    %v3801 = vsel %vm217, %v3793, %v3795
    %v3802 = vsel %vm217, %v3790, %v3792
    %v3803 = vsel %vm217, %v3791, %v3793
    %v3804 = vsel %vm217, %v3796, %v3790
    %v3805 = vsel %vm217, %v3797, %v3791
    %3806 = vmatpush.msra.mxu0 %v3673
    %3807 = vmatpush.msra.mxu0 %v3671
    %3808 = vmatpush.msra.mxu0 %v3669
    %3809 = vmatpush.msra.mxu0 %v3667
    %3810 = vmatpush.msra.mxu0 %v3665
    %3811 = vmatpush.msra.mxu0 %v3663
    %3812 = vmatpush.msra.mxu0 %v3661
    %3813 = vmatpush.msra.mxu0 %v3659
    %3814 = vmatpush.msra.mxu0 %v3657
    %3815 = vmatpush.msra.mxu0 %v3655
    %3816 = vmatpush.msra.mxu0 %v3653
    %3817 = vmatpush.msra.mxu0 %v3651
    %3818 = vmatpush.msra.mxu0 %v3649
    %3819 = vmatpush.msra.mxu0 %v3647
    %3820 = vmatpush.msra.mxu0 %v3645
    %3821 = vmatpush.msra.mxu0 %v3643
    %3822 = vmatmul.f32.gmra.mxu0 %v3569
    %v3823 = vpop.f32.mrf.mxu0
    %v3824 = vadd.f32 0.0, %v3823
    %3825 = vmatmul.f32.gmra.mxu0 %v3571
    %v3826 = vpop.f32.mrf.mxu0
    %v3827 = vadd.f32 0.0, %v3826
    %3828 = vmatmul.f32.gmra.mxu0 %v3573
    %v3829 = vpop.f32.mrf.mxu0
    %v3830 = vadd.f32 0.0, %v3829
    %3831 = vmatmul.f32.gmra.mxu0 %v3575
    %v3832 = vpop.f32.mrf.mxu0
    %v3833 = vadd.f32 0.0, %v3832
    %3834 = vdwg.mxu0
    %3835 = vmatpush.msra.mxu0 %v3705
    %3836 = vmatpush.msra.mxu0 %v3703
    %3837 = vmatpush.msra.mxu0 %v3701
    %3838 = vmatpush.msra.mxu0 %v3699
    %3839 = vmatpush.msra.mxu0 %v3697
    %3840 = vmatpush.msra.mxu0 %v3695
    %3841 = vmatpush.msra.mxu0 %v3693
    %3842 = vmatpush.msra.mxu0 %v3691
    %3843 = vmatpush.msra.mxu0 %v3689
    %3844 = vmatpush.msra.mxu0 %v3687
    %3845 = vmatpush.msra.mxu0 %v3685
    %3846 = vmatpush.msra.mxu0 %v3683
    %3847 = vmatpush.msra.mxu0 %v3681
    %3848 = vmatpush.msra.mxu0 %v3679
    %3849 = vmatpush.msra.mxu0 %v3677
    %3850 = vmatpush.msra.mxu0 %v3675
    %3851 = vmatmul.f32.gmra.mxu0 %v3570
    %v3852 = vpop.f32.mrf.mxu0
    %v3853 = vadd.f32 %v3824, %v3852
    %3854 = vmatmul.f32.gmra.mxu0 %v3572
    %v3855 = vpop.f32.mrf.mxu0
    %v3856 = vadd.f32 %v3827, %v3855
    %3857 = vmatmul.f32.gmra.mxu0 %v3574
    %v3858 = vpop.f32.mrf.mxu0
    %v3859 = vadd.f32 %v3830, %v3858
    %3860 = vmatmul.f32.gmra.mxu0 %v3576
    %v3861 = vpop.f32.mrf.mxu0
    %v3862 = vadd.f32 %v3833, %v3861
    %3863 = vdwg.mxu0
    %3864 = vmatpush.msra.mxu0 %v3674
    %3865 = vmatpush.msra.mxu0 %v3672
    %3866 = vmatpush.msra.mxu0 %v3670
    %3867 = vmatpush.msra.mxu0 %v3668
    %3868 = vmatpush.msra.mxu0 %v3666
    %3869 = vmatpush.msra.mxu0 %v3664
    %3870 = vmatpush.msra.mxu0 %v3662
    %3871 = vmatpush.msra.mxu0 %v3660
    %3872 = vmatpush.msra.mxu0 %v3658
    %3873 = vmatpush.msra.mxu0 %v3656
    %3874 = vmatpush.msra.mxu0 %v3654
    %3875 = vmatpush.msra.mxu0 %v3652
    %3876 = vmatpush.msra.mxu0 %v3650
    %3877 = vmatpush.msra.mxu0 %v3648
    %3878 = vmatpush.msra.mxu0 %v3646
    %3879 = vmatpush.msra.mxu0 %v3644
    %3880 = vmatmul.f32.gmra.mxu0 %v3569
    %v3881 = vpop.f32.mrf.mxu0
    %v3882 = vadd.f32 0.0, %v3881
    %3883 = vmatmul.f32.gmra.mxu0 %v3571
    %v3884 = vpop.f32.mrf.mxu0
    %v3885 = vadd.f32 0.0, %v3884
    %3886 = vmatmul.f32.gmra.mxu0 %v3573
    %v3887 = vpop.f32.mrf.mxu0
    %v3888 = vadd.f32 0.0, %v3887
    %3889 = vmatmul.f32.gmra.mxu0 %v3575
    %v3890 = vpop.f32.mrf.mxu0
    %v3891 = vadd.f32 0.0, %v3890
    %3892 = vdwg.mxu0
    %3893 = vmatpush.msra.mxu0 %v3706
    %3894 = vmatpush.msra.mxu0 %v3704
    %3895 = vmatpush.msra.mxu0 %v3702
    %3896 = vmatpush.msra.mxu0 %v3700
    %3897 = vmatpush.msra.mxu0 %v3698
    %3898 = vmatpush.msra.mxu0 %v3696
    %3899 = vmatpush.msra.mxu0 %v3694
    %3900 = vmatpush.msra.mxu0 %v3692
    %3901 = vmatpush.msra.mxu0 %v3690
    %3902 = vmatpush.msra.mxu0 %v3688
    %3903 = vmatpush.msra.mxu0 %v3686
    %3904 = vmatpush.msra.mxu0 %v3684
    %3905 = vmatpush.msra.mxu0 %v3682
    %3906 = vmatpush.msra.mxu0 %v3680
    %3907 = vmatpush.msra.mxu0 %v3678
    %3908 = vmatpush.msra.mxu0 %v3676
    %3909 = vmatmul.f32.gmra.mxu0 %v3570
    %v3910 = vpop.f32.mrf.mxu0
    %v3911 = vadd.f32 %v3882, %v3910
    %3912 = vmatmul.f32.gmra.mxu0 %v3572
    %v3913 = vpop.f32.mrf.mxu0
    %v3914 = vadd.f32 %v3885, %v3913
    %3915 = vmatmul.f32.gmra.mxu0 %v3574
    %v3916 = vpop.f32.mrf.mxu0
    %v3917 = vadd.f32 %v3888, %v3916
    %3918 = vmatmul.f32.gmra.mxu0 %v3576
    %v3919 = vpop.f32.mrf.mxu0
    %v3920 = vadd.f32 %v3891, %v3919
    %3921 = vdwg.mxu0
    %3922 = vmatpush.msra.mxu0 %v3608
    %3923 = vmatpush.msra.mxu0 %v3606
    %3924 = vmatpush.msra.mxu0 %v3604
    %3925 = vmatpush.msra.mxu0 %v3602
    %3926 = vmatpush.msra.mxu0 %v3600
    %3927 = vmatpush.msra.mxu0 %v3598
    %3928 = vmatpush.msra.mxu0 %v3596
    %3929 = vmatpush.msra.mxu0 %v3594
    %3930 = vmatpush.msra.mxu0 %v3592
    %3931 = vmatpush.msra.mxu0 %v3590
    %3932 = vmatpush.msra.mxu0 %v3588
    %3933 = vmatpush.msra.mxu0 %v3586
    %3934 = vmatpush.msra.mxu0 %v3584
    %3935 = vmatpush.msra.mxu0 %v3582
    %3936 = vmatpush.msra.mxu0 %v3580
    %3937 = vmatpush.msra.mxu0 %v3578
    %3938 = vmatmul.f32.gmra.mxu0 %v3788
    %v3939 = vpop.f32.mrf.mxu0
    %v3940 = vadd.f32 %v3853, %v3939
    %3941 = vmatmul.f32.gmra.mxu0 %v3786
    %v3942 = vpop.f32.mrf.mxu0
    %v3943 = vadd.f32 %v3856, %v3942
    %3944 = vmatmul.f32.gmra.mxu0 %v3784
    %v3945 = vpop.f32.mrf.mxu0
    %v3946 = vadd.f32 %v3859, %v3945
    %3947 = vmatmul.f32.gmra.mxu0 %v3782
    %v3948 = vpop.f32.mrf.mxu0
    %v3949 = vadd.f32 %v3862, %v3948
    %3950 = vdwg.mxu0
    %3951 = vmatpush.msra.mxu0 %v3640
    %3952 = vmatpush.msra.mxu0 %v3638
    %3953 = vmatpush.msra.mxu0 %v3636
    %3954 = vmatpush.msra.mxu0 %v3634
    %3955 = vmatpush.msra.mxu0 %v3632
    %3956 = vmatpush.msra.mxu0 %v3630
    %3957 = vmatpush.msra.mxu0 %v3628
    %3958 = vmatpush.msra.mxu0 %v3626
    %3959 = vmatpush.msra.mxu0 %v3624
    %3960 = vmatpush.msra.mxu0 %v3622
    %3961 = vmatpush.msra.mxu0 %v3620
    %3962 = vmatpush.msra.mxu0 %v3618
    %3963 = vmatpush.msra.mxu0 %v3616
    %3964 = vmatpush.msra.mxu0 %v3614
    %3965 = vmatpush.msra.mxu0 %v3612
    %3966 = vmatpush.msra.mxu0 %v3610
    %3967 = vmatmul.f32.gmra.mxu0 %v3789
    %v3968 = vpop.f32.mrf.mxu0
    %v3969 = vadd.f32 %v3940, %v3968
    %3970 = vmatmul.f32.gmra.mxu0 %v3787
    %v3971 = vpop.f32.mrf.mxu0
    %v3972 = vadd.f32 %v3943, %v3971
    %3973 = vmatmul.f32.gmra.mxu0 %v3785
    %v3974 = vpop.f32.mrf.mxu0
    %v3975 = vadd.f32 %v3946, %v3974
    %3976 = vmatmul.f32.gmra.mxu0 %v3783
    %v3977 = vpop.f32.mrf.mxu0
    %v3978 = vadd.f32 %v3949, %v3977
    %3979 = vdwg.mxu0
    %3980 = vmatpush.msra.mxu0 %v3609
    %3981 = vmatpush.msra.mxu0 %v3607
    %3982 = vmatpush.msra.mxu0 %v3605
    %3983 = vmatpush.msra.mxu0 %v3603
    %3984 = vmatpush.msra.mxu0 %v3601
    %3985 = vmatpush.msra.mxu0 %v3599
    %3986 = vmatpush.msra.mxu0 %v3597
    %3987 = vmatpush.msra.mxu0 %v3595
    %3988 = vmatpush.msra.mxu0 %v3593
    %3989 = vmatpush.msra.mxu0 %v3591
    %3990 = vmatpush.msra.mxu0 %v3589
    %3991 = vmatpush.msra.mxu0 %v3587
    %3992 = vmatpush.msra.mxu0 %v3585
    %3993 = vmatpush.msra.mxu0 %v3583
    %3994 = vmatpush.msra.mxu0 %v3581
    %3995 = vmatpush.msra.mxu0 %v3579
    %3996 = vmatmul.f32.gmra.mxu0 %v3788
    %v3997 = vpop.f32.mrf.mxu0
    %v3998 = vadd.f32 %v3911, %v3997
    %3999 = vmatmul.f32.gmra.mxu0 %v3786
    %v4000 = vpop.f32.mrf.mxu0
    %v4001 = vadd.f32 %v3914, %v4000
    %4002 = vmatmul.f32.gmra.mxu0 %v3784
    %v4003 = vpop.f32.mrf.mxu0
    %v4004 = vadd.f32 %v3917, %v4003
    %4005 = vmatmul.f32.gmra.mxu0 %v3782
    %v4006 = vpop.f32.mrf.mxu0
    %v4007 = vadd.f32 %v3920, %v4006
    %4008 = vdwg.mxu0
    %4009 = vmatpush.msra.mxu0 %v3641
    %4010 = vmatpush.msra.mxu0 %v3639
    %4011 = vmatpush.msra.mxu0 %v3637
    %4012 = vmatpush.msra.mxu0 %v3635
    %4013 = vmatpush.msra.mxu0 %v3633
    %4014 = vmatpush.msra.mxu0 %v3631
    %4015 = vmatpush.msra.mxu0 %v3629
    %4016 = vmatpush.msra.mxu0 %v3627
    %4017 = vmatpush.msra.mxu0 %v3625
    %4018 = vmatpush.msra.mxu0 %v3623
    %4019 = vmatpush.msra.mxu0 %v3621
    %4020 = vmatpush.msra.mxu0 %v3619
    %4021 = vmatpush.msra.mxu0 %v3617
    %4022 = vmatpush.msra.mxu0 %v3615
    %4023 = vmatpush.msra.mxu0 %v3613
    %4024 = vmatpush.msra.mxu0 %v3611
    %4025 = vmatmul.f32.gmra.mxu0 %v3789
    %v4026 = vpop.f32.mrf.mxu0
    %v4027 = vadd.f32 %v3998, %v4026
    %4028 = vmatmul.f32.gmra.mxu0 %v3787
    %v4029 = vpop.f32.mrf.mxu0
    %v4030 = vadd.f32 %v4001, %v4029
    %4031 = vmatmul.f32.gmra.mxu0 %v3785
    %v4032 = vpop.f32.mrf.mxu0
    %v4033 = vadd.f32 %v4004, %v4032
    %4034 = vmatmul.f32.gmra.mxu0 %v3783
    %v4035 = vpop.f32.mrf.mxu0
    %v4036 = vadd.f32 %v4007, %v4035
    %4037 = vdwg.mxu0
    %4038 = vmatpush.msra.mxu0 %v3738
    %4039 = vmatpush.msra.mxu0 %v3736
    %4040 = vmatpush.msra.mxu0 %v3734
    %4041 = vmatpush.msra.mxu0 %v3732
    %4042 = vmatpush.msra.mxu0 %v3730
    %4043 = vmatpush.msra.mxu0 %v3728
    %4044 = vmatpush.msra.mxu0 %v3726
    %4045 = vmatpush.msra.mxu0 %v3724
    %4046 = vmatpush.msra.mxu0 %v3722
    %4047 = vmatpush.msra.mxu0 %v3720
    %4048 = vmatpush.msra.mxu0 %v3718
    %4049 = vmatpush.msra.mxu0 %v3716
    %4050 = vmatpush.msra.mxu0 %v3714
    %4051 = vmatpush.msra.mxu0 %v3712
    %4052 = vmatpush.msra.mxu0 %v3710
    %4053 = vmatpush.msra.mxu0 %v3708
    %4054 = vmatmul.f32.gmra.mxu0 %v3802
    %v4055 = vpop.f32.mrf.mxu0
    %v4056 = vadd.f32 0.0, %v4055
    %4057 = vmatmul.f32.gmra.mxu0 %v3800
    %v4058 = vpop.f32.mrf.mxu0
    %v4059 = vadd.f32 0.0, %v4058
    %4060 = vmatmul.f32.gmra.mxu0 %v3798
    %v4061 = vpop.f32.mrf.mxu0
    %v4062 = vadd.f32 0.0, %v4061
    %4063 = vmatmul.f32.gmra.mxu0 %v3804
    %v4064 = vpop.f32.mrf.mxu0
    %v4065 = vadd.f32 0.0, %v4064
    %4066 = vdwg.mxu0
    %4067 = vmatpush.msra.mxu0 %v3770
    %4068 = vmatpush.msra.mxu0 %v3768
    %4069 = vmatpush.msra.mxu0 %v3766
    %4070 = vmatpush.msra.mxu0 %v3764
    %4071 = vmatpush.msra.mxu0 %v3762
    %4072 = vmatpush.msra.mxu0 %v3760
    %4073 = vmatpush.msra.mxu0 %v3758
    %4074 = vmatpush.msra.mxu0 %v3756
    %4075 = vmatpush.msra.mxu0 %v3754
    %4076 = vmatpush.msra.mxu0 %v3752
    %4077 = vmatpush.msra.mxu0 %v3750
    %4078 = vmatpush.msra.mxu0 %v3748
    %4079 = vmatpush.msra.mxu0 %v3746
    %4080 = vmatpush.msra.mxu0 %v3744
    %4081 = vmatpush.msra.mxu0 %v3742
    %4082 = vmatpush.msra.mxu0 %v3740
    %4083 = vmatmul.f32.gmra.mxu0 %v3803
    %v4084 = vpop.f32.mrf.mxu0
    %v4085 = vadd.f32 %v4056, %v4084
    %4086 = vmatmul.f32.gmra.mxu0 %v3801
    %v4087 = vpop.f32.mrf.mxu0
    %v4088 = vadd.f32 %v4059, %v4087
    %4089 = vmatmul.f32.gmra.mxu0 %v3799
    %v4090 = vpop.f32.mrf.mxu0
    %v4091 = vadd.f32 %v4062, %v4090
    %4092 = vmatmul.f32.gmra.mxu0 %v3805
    %v4093 = vpop.f32.mrf.mxu0
    %v4094 = vadd.f32 %v4065, %v4093
    %4095 = vdwg.mxu0
    %4096 = vmatpush.msra.mxu0 %v3739
    %4097 = vmatpush.msra.mxu0 %v3737
    %4098 = vmatpush.msra.mxu0 %v3735
    %4099 = vmatpush.msra.mxu0 %v3733
    %4100 = vmatpush.msra.mxu0 %v3731
    %4101 = vmatpush.msra.mxu0 %v3729
    %4102 = vmatpush.msra.mxu0 %v3727
    %4103 = vmatpush.msra.mxu0 %v3725
    %4104 = vmatpush.msra.mxu0 %v3723
    %4105 = vmatpush.msra.mxu0 %v3721
    %4106 = vmatpush.msra.mxu0 %v3719
    %4107 = vmatpush.msra.mxu0 %v3717
    %4108 = vmatpush.msra.mxu0 %v3715
    %4109 = vmatpush.msra.mxu0 %v3713
    %4110 = vmatpush.msra.mxu0 %v3711
    %4111 = vmatpush.msra.mxu0 %v3709
    %4112 = vmatmul.f32.gmra.mxu0 %v3802
    %v4113 = vpop.f32.mrf.mxu0
    %v4114 = vadd.f32 0.0, %v4113
    %4115 = vmatmul.f32.gmra.mxu0 %v3800
    %v4116 = vpop.f32.mrf.mxu0
    %v4117 = vadd.f32 0.0, %v4116
    %4118 = vmatmul.f32.gmra.mxu0 %v3798
    %v4119 = vpop.f32.mrf.mxu0
    %v4120 = vadd.f32 0.0, %v4119
    %4121 = vmatmul.f32.gmra.mxu0 %v3804
    %v4122 = vpop.f32.mrf.mxu0
    %v4123 = vadd.f32 0.0, %v4122
    %4124 = vdwg.mxu0
    %4125 = vmatpush.msra.mxu0 %v3771
    %4126 = vmatpush.msra.mxu0 %v3769
    %4127 = vmatpush.msra.mxu0 %v3767
    %4128 = vmatpush.msra.mxu0 %v3765
    %4129 = vmatpush.msra.mxu0 %v3763
    %4130 = vmatpush.msra.mxu0 %v3761
    %4131 = vmatpush.msra.mxu0 %v3759
    %4132 = vmatpush.msra.mxu0 %v3757
    %4133 = vmatpush.msra.mxu0 %v3755
    %4134 = vmatpush.msra.mxu0 %v3753
    %4135 = vmatpush.msra.mxu0 %v3751
    %4136 = vmatpush.msra.mxu0 %v3749
    %4137 = vmatpush.msra.mxu0 %v3747
    %4138 = vmatpush.msra.mxu0 %v3745
    %4139 = vmatpush.msra.mxu0 %v3743
    %4140 = vmatpush.msra.mxu0 %v3741
    %4141 = vmatmul.f32.gmra.mxu0 %v3803
    %v4142 = vpop.f32.mrf.mxu0
    %v4143 = vadd.f32 %v4114, %v4142
    %4144 = vmatmul.f32.gmra.mxu0 %v3801
    %v4145 = vpop.f32.mrf.mxu0
    %v4146 = vadd.f32 %v4117, %v4145
    %4147 = vmatmul.f32.gmra.mxu0 %v3799
    %v4148 = vpop.f32.mrf.mxu0
    %v4149 = vadd.f32 %v4120, %v4148
    %4150 = vmatmul.f32.gmra.mxu0 %v3805
    %v4151 = vpop.f32.mrf.mxu0
    %v4152 = vadd.f32 %v4123, %v4151
    %4153 = vdwg.mxu0
    %v4154 = vadd.f32 %v3969, %v4085
    %v4155 = vadd.f32 %v4027, %v4143
    %v4156 = vadd.f32 %v3972, %v4088
    %v4157 = vadd.f32 %v4030, %v4146
    %v4158 = vadd.f32 %v3975, %v4091
    %v4159 = vadd.f32 %v4033, %v4149
    %v4160 = vadd.f32 %v3978, %v4094
    %v4161 = vadd.f32 %v4036, %v4152
    %v4163 = vperm.slane %v3773, 0
    %v4164 = vperm.slane %v3773, 1
    %v4167 = vadd.f32 %v4154, %v4163
    %v4168 = vadd.f32 %v4155, %v4164
    %v4169 = vadd.f32 %v4156, %v4163
    %v4170 = vadd.f32 %v4157, %v4164
    %v4171 = vadd.f32 %v4158, %v4163
    %v4172 = vadd.f32 %v4159, %v4164
    %v4173 = vadd.f32 %v4160, %v4163
    %v4174 = vadd.f32 %v4161, %v4164
    %v4175 = vmax.f32 %v4167, 0.0
    %v4176 = vmax.f32 %v4168, 0.0
    %v4177 = vmax.f32 %v4169, 0.0
    %v4178 = vmax.f32 %v4170, 0.0
    %v4179 = vmax.f32 %v4171, 0.0
    %v4180 = vmax.f32 %v4172, 0.0
    %v4181 = vmax.f32 %v4173, 0.0
    %v4182 = vmax.f32 %v4174, 0.0
    %v4183 = vmul.f32 %v4175, %v484
    %v4184 = vmul.f32 %v4176, %v484
    %v4185 = vmul.f32 %v4177, %v489
    %v4186 = vmul.f32 %v4178, %v489
    %v4187 = vmul.f32 %v4179, %v494
    %v4188 = vmul.f32 %v4180, %v494
    %v4189 = vmul.f32 %v4181, %v499
    %v4190 = vmul.f32 %v4182, %v499
    %s4191 = scalar_lea.vmem [#allocation7], 9216
    %v4192 = vld [vmem:[%s4191] sm:$0xff]
    %v4193 = vld [vmem:[%s4191 + $0x8] sm:$0xff]
    %v4194 = vld [vmem:[%s4191 + $0x10] sm:$0xff]
    %v4195 = vld [vmem:[%s4191 + $0x18] sm:$0xff]
    %v4196 = vld [vmem:[%s4191 + $0x20] sm:$0xff]
    %v4197 = vld [vmem:[%s4191 + $0x28] sm:$0xff]
    %v4198 = vld [vmem:[%s4191 + $0x30] sm:$0xff]
    %v4199 = vld [vmem:[%s4191 + $0x38] sm:$0xff]
    %v4200 = vld [vmem:[%s4191 + $0x40] sm:$0xff]
    %v4201 = vld [vmem:[%s4191 + $0x48] sm:$0xff]
    %v4202 = vld [vmem:[%s4191 + $0x50] sm:$0xff]
    %v4203 = vld [vmem:[%s4191 + $0x58] sm:$0xff]
    %v4204 = vld [vmem:[%s4191 + $0x60] sm:$0xff]
    %v4205 = vld [vmem:[%s4191 + $0x68] sm:$0xff]
    %v4206 = vld [vmem:[%s4191 + $0x70] sm:$0xff]
    %v4207 = vld [vmem:[%s4191 + $0x78] sm:$0xff]
    %v4208 = vld [vmem:[%s4191 + $0x80] sm:$0xff]
    %v4209 = vld [vmem:[%s4191 + $0x88] sm:$0xff]
    %v4210 = vld [vmem:[%s4191 + $0x90] sm:$0xff]
    %v4211 = vld [vmem:[%s4191 + $0x98] sm:$0xff]
    %v4212 = vld [vmem:[%s4191 + $0xa0] sm:$0xff]
    %v4213 = vld [vmem:[%s4191 + $0xa8] sm:$0xff]
    %v4214 = vld [vmem:[%s4191 + $0xb0] sm:$0xff]
    %v4215 = vld [vmem:[%s4191 + $0xb8] sm:$0xff]
    %v4216 = vld [vmem:[%s4191 + $0xc0] sm:$0xff]
    %v4217 = vld [vmem:[%s4191 + $0xc8] sm:$0xff]
    %v4218 = vld [vmem:[%s4191 + $0xd0] sm:$0xff]
    %v4219 = vld [vmem:[%s4191 + $0xd8] sm:$0xff]
    %v4220 = vld [vmem:[%s4191 + $0xe0] sm:$0xff]
    %v4221 = vld [vmem:[%s4191 + $0xe8] sm:$0xff]
    %v4222 = vld [vmem:[%s4191 + $0xf0] sm:$0xff]
    %v4223 = vld [vmem:[%s4191 + $0xf8] sm:$0xff]
    %v4224 = vld [vmem:[%s4191 + $0x100] sm:$0xff]
    %v4225 = vld [vmem:[%s4191 + $0x108] sm:$0xff]
    %v4226 = vld [vmem:[%s4191 + $0x110] sm:$0xff]
    %v4227 = vld [vmem:[%s4191 + $0x118] sm:$0xff]
    %v4228 = vld [vmem:[%s4191 + $0x120] sm:$0xff]
    %v4229 = vld [vmem:[%s4191 + $0x128] sm:$0xff]
    %v4230 = vld [vmem:[%s4191 + $0x130] sm:$0xff]
    %v4231 = vld [vmem:[%s4191 + $0x138] sm:$0xff]
    %v4232 = vld [vmem:[%s4191 + $0x140] sm:$0xff]
    %v4233 = vld [vmem:[%s4191 + $0x148] sm:$0xff]
    %v4234 = vld [vmem:[%s4191 + $0x150] sm:$0xff]
    %v4235 = vld [vmem:[%s4191 + $0x158] sm:$0xff]
    %v4236 = vld [vmem:[%s4191 + $0x160] sm:$0xff]
    %v4237 = vld [vmem:[%s4191 + $0x168] sm:$0xff]
    %v4238 = vld [vmem:[%s4191 + $0x170] sm:$0xff]
    %v4239 = vld [vmem:[%s4191 + $0x178] sm:$0xff]
    %v4240 = vld [vmem:[%s4191 + $0x180] sm:$0xff]
    %v4241 = vld [vmem:[%s4191 + $0x188] sm:$0xff]
    %v4242 = vld [vmem:[%s4191 + $0x190] sm:$0xff]
    %v4243 = vld [vmem:[%s4191 + $0x198] sm:$0xff]
    %v4244 = vld [vmem:[%s4191 + $0x1a0] sm:$0xff]
    %v4245 = vld [vmem:[%s4191 + $0x1a8] sm:$0xff]
    %v4246 = vld [vmem:[%s4191 + $0x1b0] sm:$0xff]
    %v4247 = vld [vmem:[%s4191 + $0x1b8] sm:$0xff]
    %v4248 = vld [vmem:[%s4191 + $0x1c0] sm:$0xff]
    %v4249 = vld [vmem:[%s4191 + $0x1c8] sm:$0xff]
    %v4250 = vld [vmem:[%s4191 + $0x1d0] sm:$0xff]
    %v4251 = vld [vmem:[%s4191 + $0x1d8] sm:$0xff]
    %v4252 = vld [vmem:[%s4191 + $0x1e0] sm:$0xff]
    %v4253 = vld [vmem:[%s4191 + $0x1e8] sm:$0xff]
    %v4254 = vld [vmem:[%s4191 + $0x1f0] sm:$0xff]
    %v4255 = vld [vmem:[%s4191 + $0x1f8] sm:$0xff]
    %s4256 = scalar_lea.vmem [#allocation7], 9728
    %v4257 = vld [vmem:[%s4256] sm:$0xff]
    %v4258 = vld [vmem:[%s4256 + $0x8] sm:$0xff]
    %v4259 = vld [vmem:[%s4256 + $0x10] sm:$0xff]
    %v4260 = vld [vmem:[%s4256 + $0x18] sm:$0xff]
    %v4261 = vld [vmem:[%s4256 + $0x20] sm:$0xff]
    %v4262 = vld [vmem:[%s4256 + $0x28] sm:$0xff]
    %v4263 = vld [vmem:[%s4256 + $0x30] sm:$0xff]
    %v4264 = vld [vmem:[%s4256 + $0x38] sm:$0xff]
    %v4265 = vld [vmem:[%s4256 + $0x40] sm:$0xff]
    %v4266 = vld [vmem:[%s4256 + $0x48] sm:$0xff]
    %v4267 = vld [vmem:[%s4256 + $0x50] sm:$0xff]
    %v4268 = vld [vmem:[%s4256 + $0x58] sm:$0xff]
    %v4269 = vld [vmem:[%s4256 + $0x60] sm:$0xff]
    %v4270 = vld [vmem:[%s4256 + $0x68] sm:$0xff]
    %v4271 = vld [vmem:[%s4256 + $0x70] sm:$0xff]
    %v4272 = vld [vmem:[%s4256 + $0x78] sm:$0xff]
    %v4273 = vld [vmem:[%s4256 + $0x80] sm:$0xff]
    %v4274 = vld [vmem:[%s4256 + $0x88] sm:$0xff]
    %v4275 = vld [vmem:[%s4256 + $0x90] sm:$0xff]
    %v4276 = vld [vmem:[%s4256 + $0x98] sm:$0xff]
    %v4277 = vld [vmem:[%s4256 + $0xa0] sm:$0xff]
    %v4278 = vld [vmem:[%s4256 + $0xa8] sm:$0xff]
    %v4279 = vld [vmem:[%s4256 + $0xb0] sm:$0xff]
    %v4280 = vld [vmem:[%s4256 + $0xb8] sm:$0xff]
    %v4281 = vld [vmem:[%s4256 + $0xc0] sm:$0xff]
    %v4282 = vld [vmem:[%s4256 + $0xc8] sm:$0xff]
    %v4283 = vld [vmem:[%s4256 + $0xd0] sm:$0xff]
    %v4284 = vld [vmem:[%s4256 + $0xd8] sm:$0xff]
    %v4285 = vld [vmem:[%s4256 + $0xe0] sm:$0xff]
    %v4286 = vld [vmem:[%s4256 + $0xe8] sm:$0xff]
    %v4287 = vld [vmem:[%s4256 + $0xf0] sm:$0xff]
    %v4288 = vld [vmem:[%s4256 + $0xf8] sm:$0xff]
    %v4289 = vld [vmem:[%s4256 + $0x100] sm:$0xff]
    %v4290 = vld [vmem:[%s4256 + $0x108] sm:$0xff]
    %v4291 = vld [vmem:[%s4256 + $0x110] sm:$0xff]
    %v4292 = vld [vmem:[%s4256 + $0x118] sm:$0xff]
    %v4293 = vld [vmem:[%s4256 + $0x120] sm:$0xff]
    %v4294 = vld [vmem:[%s4256 + $0x128] sm:$0xff]
    %v4295 = vld [vmem:[%s4256 + $0x130] sm:$0xff]
    %v4296 = vld [vmem:[%s4256 + $0x138] sm:$0xff]
    %v4297 = vld [vmem:[%s4256 + $0x140] sm:$0xff]
    %v4298 = vld [vmem:[%s4256 + $0x148] sm:$0xff]
    %v4299 = vld [vmem:[%s4256 + $0x150] sm:$0xff]
    %v4300 = vld [vmem:[%s4256 + $0x158] sm:$0xff]
    %v4301 = vld [vmem:[%s4256 + $0x160] sm:$0xff]
    %v4302 = vld [vmem:[%s4256 + $0x168] sm:$0xff]
    %v4303 = vld [vmem:[%s4256 + $0x170] sm:$0xff]
    %v4304 = vld [vmem:[%s4256 + $0x178] sm:$0xff]
    %v4305 = vld [vmem:[%s4256 + $0x180] sm:$0xff]
    %v4306 = vld [vmem:[%s4256 + $0x188] sm:$0xff]
    %v4307 = vld [vmem:[%s4256 + $0x190] sm:$0xff]
    %v4308 = vld [vmem:[%s4256 + $0x198] sm:$0xff]
    %v4309 = vld [vmem:[%s4256 + $0x1a0] sm:$0xff]
    %v4310 = vld [vmem:[%s4256 + $0x1a8] sm:$0xff]
    %v4311 = vld [vmem:[%s4256 + $0x1b0] sm:$0xff]
    %v4312 = vld [vmem:[%s4256 + $0x1b8] sm:$0xff]
    %v4313 = vld [vmem:[%s4256 + $0x1c0] sm:$0xff]
    %v4314 = vld [vmem:[%s4256 + $0x1c8] sm:$0xff]
    %v4315 = vld [vmem:[%s4256 + $0x1d0] sm:$0xff]
    %v4316 = vld [vmem:[%s4256 + $0x1d8] sm:$0xff]
    %v4317 = vld [vmem:[%s4256 + $0x1e0] sm:$0xff]
    %v4318 = vld [vmem:[%s4256 + $0x1e8] sm:$0xff]
    %v4319 = vld [vmem:[%s4256 + $0x1f0] sm:$0xff]
    %v4320 = vld [vmem:[%s4256 + $0x1f8] sm:$0xff]
    %s4321 = scalar_lea.vmem [#allocation7], 10240
    %v4322 = vld [vmem:[%s4321] sm:$0xff]
    %v4323 = vld [vmem:[%s4321 + $0x8] sm:$0xff]
    %v4324 = vld [vmem:[%s4321 + $0x10] sm:$0xff]
    %v4325 = vld [vmem:[%s4321 + $0x18] sm:$0xff]
    %v4326 = vld [vmem:[%s4321 + $0x20] sm:$0xff]
    %v4327 = vld [vmem:[%s4321 + $0x28] sm:$0xff]
    %v4328 = vld [vmem:[%s4321 + $0x30] sm:$0xff]
    %v4329 = vld [vmem:[%s4321 + $0x38] sm:$0xff]
    %v4330 = vld [vmem:[%s4321 + $0x40] sm:$0xff]
    %v4331 = vld [vmem:[%s4321 + $0x48] sm:$0xff]
    %v4332 = vld [vmem:[%s4321 + $0x50] sm:$0xff]
    %v4333 = vld [vmem:[%s4321 + $0x58] sm:$0xff]
    %v4334 = vld [vmem:[%s4321 + $0x60] sm:$0xff]
    %v4335 = vld [vmem:[%s4321 + $0x68] sm:$0xff]
    %v4336 = vld [vmem:[%s4321 + $0x70] sm:$0xff]
    %v4337 = vld [vmem:[%s4321 + $0x78] sm:$0xff]
    %v4338 = vld [vmem:[%s4321 + $0x80] sm:$0xff]
    %v4339 = vld [vmem:[%s4321 + $0x88] sm:$0xff]
    %v4340 = vld [vmem:[%s4321 + $0x90] sm:$0xff]
    %v4341 = vld [vmem:[%s4321 + $0x98] sm:$0xff]
    %v4342 = vld [vmem:[%s4321 + $0xa0] sm:$0xff]
    %v4343 = vld [vmem:[%s4321 + $0xa8] sm:$0xff]
    %v4344 = vld [vmem:[%s4321 + $0xb0] sm:$0xff]
    %v4345 = vld [vmem:[%s4321 + $0xb8] sm:$0xff]
    %v4346 = vld [vmem:[%s4321 + $0xc0] sm:$0xff]
    %v4347 = vld [vmem:[%s4321 + $0xc8] sm:$0xff]
    %v4348 = vld [vmem:[%s4321 + $0xd0] sm:$0xff]
    %v4349 = vld [vmem:[%s4321 + $0xd8] sm:$0xff]
    %v4350 = vld [vmem:[%s4321 + $0xe0] sm:$0xff]
    %v4351 = vld [vmem:[%s4321 + $0xe8] sm:$0xff]
    %v4352 = vld [vmem:[%s4321 + $0xf0] sm:$0xff]
    %v4353 = vld [vmem:[%s4321 + $0xf8] sm:$0xff]
    %v4354 = vld [vmem:[%s4321 + $0x100] sm:$0xff]
    %v4355 = vld [vmem:[%s4321 + $0x108] sm:$0xff]
    %v4356 = vld [vmem:[%s4321 + $0x110] sm:$0xff]
    %v4357 = vld [vmem:[%s4321 + $0x118] sm:$0xff]
    %v4358 = vld [vmem:[%s4321 + $0x120] sm:$0xff]
    %v4359 = vld [vmem:[%s4321 + $0x128] sm:$0xff]
    %v4360 = vld [vmem:[%s4321 + $0x130] sm:$0xff]
    %v4361 = vld [vmem:[%s4321 + $0x138] sm:$0xff]
    %v4362 = vld [vmem:[%s4321 + $0x140] sm:$0xff]
    %v4363 = vld [vmem:[%s4321 + $0x148] sm:$0xff]
    %v4364 = vld [vmem:[%s4321 + $0x150] sm:$0xff]
    %v4365 = vld [vmem:[%s4321 + $0x158] sm:$0xff]
    %v4366 = vld [vmem:[%s4321 + $0x160] sm:$0xff]
    %v4367 = vld [vmem:[%s4321 + $0x168] sm:$0xff]
    %v4368 = vld [vmem:[%s4321 + $0x170] sm:$0xff]
    %v4369 = vld [vmem:[%s4321 + $0x178] sm:$0xff]
    %v4370 = vld [vmem:[%s4321 + $0x180] sm:$0xff]
    %v4371 = vld [vmem:[%s4321 + $0x188] sm:$0xff]
    %v4372 = vld [vmem:[%s4321 + $0x190] sm:$0xff]
    %v4373 = vld [vmem:[%s4321 + $0x198] sm:$0xff]
    %v4374 = vld [vmem:[%s4321 + $0x1a0] sm:$0xff]
    %v4375 = vld [vmem:[%s4321 + $0x1a8] sm:$0xff]
    %v4376 = vld [vmem:[%s4321 + $0x1b0] sm:$0xff]
    %v4377 = vld [vmem:[%s4321 + $0x1b8] sm:$0xff]
    %v4378 = vld [vmem:[%s4321 + $0x1c0] sm:$0xff]
    %v4379 = vld [vmem:[%s4321 + $0x1c8] sm:$0xff]
    %v4380 = vld [vmem:[%s4321 + $0x1d0] sm:$0xff]
    %v4381 = vld [vmem:[%s4321 + $0x1d8] sm:$0xff]
    %v4382 = vld [vmem:[%s4321 + $0x1e0] sm:$0xff]
    %v4383 = vld [vmem:[%s4321 + $0x1e8] sm:$0xff]
    %v4384 = vld [vmem:[%s4321 + $0x1f0] sm:$0xff]
    %v4385 = vld [vmem:[%s4321 + $0x1f8] sm:$0xff]
    %s4386 = scalar_lea.vmem [#allocation8], 12
    %v4387 = vld [vmem:[%s4386] sm:$0x3]
    %v4388 = vrot.slane %v4183, 7
    %v4389 = vrot.slane %v4184, 7
    %v4390 = vrot.slane %v4185, 7
    %v4391 = vrot.slane %v4186, 7
    %v4392 = vrot.slane %v4187, 7
    %v4393 = vrot.slane %v4188, 7
    %v4394 = vrot.slane %v4189, 7
    %v4395 = vrot.slane %v4190, 7
    %v4396 = vsel %vm208, %v4392, %v4394
    %v4397 = vsel %vm208, %v4393, %v4395
    %v4398 = vsel %vm208, %v4390, %v4392
    %v4399 = vsel %vm208, %v4391, %v4393
    %v4400 = vsel %vm208, %v4388, %v4390
    %v4401 = vsel %vm208, %v4389, %v4391
    %v4402 = vsel %vm208, %v4394, %v4388
    %v4403 = vsel %vm208, %v4395, %v4389
    %v4404 = vrot.slane %v4183, 1
    %v4405 = vrot.slane %v4184, 1
    %v4406 = vrot.slane %v4185, 1
    %v4407 = vrot.slane %v4186, 1
    %v4408 = vrot.slane %v4187, 1
    %v4409 = vrot.slane %v4188, 1
    %v4410 = vrot.slane %v4189, 1
    %v4411 = vrot.slane %v4190, 1
    %v4412 = vsel %vm217, %v4408, %v4410
    %v4413 = vsel %vm217, %v4409, %v4411
    %v4414 = vsel %vm217, %v4406, %v4408
    %v4415 = vsel %vm217, %v4407, %v4409
    %v4416 = vsel %vm217, %v4404, %v4406
    %v4417 = vsel %vm217, %v4405, %v4407
    %v4418 = vsel %vm217, %v4410, %v4404
    %v4419 = vsel %vm217, %v4411, %v4405
    %4420 = vmatpush.msra.mxu0 %v4287
    %4421 = vmatpush.msra.mxu0 %v4285
    %4422 = vmatpush.msra.mxu0 %v4283
    %4423 = vmatpush.msra.mxu0 %v4281
    %4424 = vmatpush.msra.mxu0 %v4279
    %4425 = vmatpush.msra.mxu0 %v4277
    %4426 = vmatpush.msra.mxu0 %v4275
    %4427 = vmatpush.msra.mxu0 %v4273
    %4428 = vmatpush.msra.mxu0 %v4271
    %4429 = vmatpush.msra.mxu0 %v4269
    %4430 = vmatpush.msra.mxu0 %v4267
    %4431 = vmatpush.msra.mxu0 %v4265
    %4432 = vmatpush.msra.mxu0 %v4263
    %4433 = vmatpush.msra.mxu0 %v4261
    %4434 = vmatpush.msra.mxu0 %v4259
    %4435 = vmatpush.msra.mxu0 %v4257
    %4436 = vmatmul.f32.gmra.mxu0 %v4183
    %v4437 = vpop.f32.mrf.mxu0
    %v4438 = vadd.f32 0.0, %v4437
    %4439 = vmatmul.f32.gmra.mxu0 %v4185
    %v4440 = vpop.f32.mrf.mxu0
    %v4441 = vadd.f32 0.0, %v4440
    %4442 = vmatmul.f32.gmra.mxu0 %v4187
    %v4443 = vpop.f32.mrf.mxu0
    %v4444 = vadd.f32 0.0, %v4443
    %4445 = vmatmul.f32.gmra.mxu0 %v4189
    %v4446 = vpop.f32.mrf.mxu0
    %v4447 = vadd.f32 0.0, %v4446
    %4448 = vdwg.mxu0
    %4449 = vmatpush.msra.mxu0 %v4319
    %4450 = vmatpush.msra.mxu0 %v4317
    %4451 = vmatpush.msra.mxu0 %v4315
    %4452 = vmatpush.msra.mxu0 %v4313
    %4453 = vmatpush.msra.mxu0 %v4311
    %4454 = vmatpush.msra.mxu0 %v4309
    %4455 = vmatpush.msra.mxu0 %v4307
    %4456 = vmatpush.msra.mxu0 %v4305
    %4457 = vmatpush.msra.mxu0 %v4303
    %4458 = vmatpush.msra.mxu0 %v4301
    %4459 = vmatpush.msra.mxu0 %v4299
    %4460 = vmatpush.msra.mxu0 %v4297
    %4461 = vmatpush.msra.mxu0 %v4295
    %4462 = vmatpush.msra.mxu0 %v4293
    %4463 = vmatpush.msra.mxu0 %v4291
    %4464 = vmatpush.msra.mxu0 %v4289
    %4465 = vmatmul.f32.gmra.mxu0 %v4184
    %v4466 = vpop.f32.mrf.mxu0
    %v4467 = vadd.f32 %v4438, %v4466
    %4468 = vmatmul.f32.gmra.mxu0 %v4186
    %v4469 = vpop.f32.mrf.mxu0
    %v4470 = vadd.f32 %v4441, %v4469
    %4471 = vmatmul.f32.gmra.mxu0 %v4188
    %v4472 = vpop.f32.mrf.mxu0
    %v4473 = vadd.f32 %v4444, %v4472
    %4474 = vmatmul.f32.gmra.mxu0 %v4190
    %v4475 = vpop.f32.mrf.mxu0
    %v4476 = vadd.f32 %v4447, %v4475
    %4477 = vdwg.mxu0
    %4478 = vmatpush.msra.mxu0 %v4288
    %4479 = vmatpush.msra.mxu0 %v4286
    %4480 = vmatpush.msra.mxu0 %v4284
    %4481 = vmatpush.msra.mxu0 %v4282
    %4482 = vmatpush.msra.mxu0 %v4280
    %4483 = vmatpush.msra.mxu0 %v4278
    %4484 = vmatpush.msra.mxu0 %v4276
    %4485 = vmatpush.msra.mxu0 %v4274
    %4486 = vmatpush.msra.mxu0 %v4272
    %4487 = vmatpush.msra.mxu0 %v4270
    %4488 = vmatpush.msra.mxu0 %v4268
    %4489 = vmatpush.msra.mxu0 %v4266
    %4490 = vmatpush.msra.mxu0 %v4264
    %4491 = vmatpush.msra.mxu0 %v4262
    %4492 = vmatpush.msra.mxu0 %v4260
    %4493 = vmatpush.msra.mxu0 %v4258
    %4494 = vmatmul.f32.gmra.mxu0 %v4183
    %v4495 = vpop.f32.mrf.mxu0
    %v4496 = vadd.f32 0.0, %v4495
    %4497 = vmatmul.f32.gmra.mxu0 %v4185
    %v4498 = vpop.f32.mrf.mxu0
    %v4499 = vadd.f32 0.0, %v4498
    %4500 = vmatmul.f32.gmra.mxu0 %v4187
    %v4501 = vpop.f32.mrf.mxu0
    %v4502 = vadd.f32 0.0, %v4501
    %4503 = vmatmul.f32.gmra.mxu0 %v4189
    %v4504 = vpop.f32.mrf.mxu0
    %v4505 = vadd.f32 0.0, %v4504
    %4506 = vdwg.mxu0
    %4507 = vmatpush.msra.mxu0 %v4320
    %4508 = vmatpush.msra.mxu0 %v4318
    %4509 = vmatpush.msra.mxu0 %v4316
    %4510 = vmatpush.msra.mxu0 %v4314
    %4511 = vmatpush.msra.mxu0 %v4312
    %4512 = vmatpush.msra.mxu0 %v4310
    %4513 = vmatpush.msra.mxu0 %v4308
    %4514 = vmatpush.msra.mxu0 %v4306
    %4515 = vmatpush.msra.mxu0 %v4304
    %4516 = vmatpush.msra.mxu0 %v4302
    %4517 = vmatpush.msra.mxu0 %v4300
    %4518 = vmatpush.msra.mxu0 %v4298
    %4519 = vmatpush.msra.mxu0 %v4296
    %4520 = vmatpush.msra.mxu0 %v4294
    %4521 = vmatpush.msra.mxu0 %v4292
    %4522 = vmatpush.msra.mxu0 %v4290
    %4523 = vmatmul.f32.gmra.mxu0 %v4184
    %v4524 = vpop.f32.mrf.mxu0
    %v4525 = vadd.f32 %v4496, %v4524
    %4526 = vmatmul.f32.gmra.mxu0 %v4186
    %v4527 = vpop.f32.mrf.mxu0
    %v4528 = vadd.f32 %v4499, %v4527
    %4529 = vmatmul.f32.gmra.mxu0 %v4188
    %v4530 = vpop.f32.mrf.mxu0
    %v4531 = vadd.f32 %v4502, %v4530
    %4532 = vmatmul.f32.gmra.mxu0 %v4190
    %v4533 = vpop.f32.mrf.mxu0
    %v4534 = vadd.f32 %v4505, %v4533
    %4535 = vdwg.mxu0
    %4536 = vmatpush.msra.mxu0 %v4222
    %4537 = vmatpush.msra.mxu0 %v4220
    %4538 = vmatpush.msra.mxu0 %v4218
    %4539 = vmatpush.msra.mxu0 %v4216
    %4540 = vmatpush.msra.mxu0 %v4214
    %4541 = vmatpush.msra.mxu0 %v4212
    %4542 = vmatpush.msra.mxu0 %v4210
    %4543 = vmatpush.msra.mxu0 %v4208
    %4544 = vmatpush.msra.mxu0 %v4206
    %4545 = vmatpush.msra.mxu0 %v4204
    %4546 = vmatpush.msra.mxu0 %v4202
    %4547 = vmatpush.msra.mxu0 %v4200
    %4548 = vmatpush.msra.mxu0 %v4198
    %4549 = vmatpush.msra.mxu0 %v4196
    %4550 = vmatpush.msra.mxu0 %v4194
    %4551 = vmatpush.msra.mxu0 %v4192
    %4552 = vmatmul.f32.gmra.mxu0 %v4402
    %v4553 = vpop.f32.mrf.mxu0
    %v4554 = vadd.f32 %v4467, %v4553
    %4555 = vmatmul.f32.gmra.mxu0 %v4400
    %v4556 = vpop.f32.mrf.mxu0
    %v4557 = vadd.f32 %v4470, %v4556
    %4558 = vmatmul.f32.gmra.mxu0 %v4398
    %v4559 = vpop.f32.mrf.mxu0
    %v4560 = vadd.f32 %v4473, %v4559
    %4561 = vmatmul.f32.gmra.mxu0 %v4396
    %v4562 = vpop.f32.mrf.mxu0
    %v4563 = vadd.f32 %v4476, %v4562
    %4564 = vdwg.mxu0
    %4565 = vmatpush.msra.mxu0 %v4254
    %4566 = vmatpush.msra.mxu0 %v4252
    %4567 = vmatpush.msra.mxu0 %v4250
    %4568 = vmatpush.msra.mxu0 %v4248
    %4569 = vmatpush.msra.mxu0 %v4246
    %4570 = vmatpush.msra.mxu0 %v4244
    %4571 = vmatpush.msra.mxu0 %v4242
    %4572 = vmatpush.msra.mxu0 %v4240
    %4573 = vmatpush.msra.mxu0 %v4238
    %4574 = vmatpush.msra.mxu0 %v4236
    %4575 = vmatpush.msra.mxu0 %v4234
    %4576 = vmatpush.msra.mxu0 %v4232
    %4577 = vmatpush.msra.mxu0 %v4230
    %4578 = vmatpush.msra.mxu0 %v4228
    %4579 = vmatpush.msra.mxu0 %v4226
    %4580 = vmatpush.msra.mxu0 %v4224
    %4581 = vmatmul.f32.gmra.mxu0 %v4403
    %v4582 = vpop.f32.mrf.mxu0
    %v4583 = vadd.f32 %v4554, %v4582
    %4584 = vmatmul.f32.gmra.mxu0 %v4401
    %v4585 = vpop.f32.mrf.mxu0
    %v4586 = vadd.f32 %v4557, %v4585
    %4587 = vmatmul.f32.gmra.mxu0 %v4399
    %v4588 = vpop.f32.mrf.mxu0
    %v4589 = vadd.f32 %v4560, %v4588
    %4590 = vmatmul.f32.gmra.mxu0 %v4397
    %v4591 = vpop.f32.mrf.mxu0
    %v4592 = vadd.f32 %v4563, %v4591
    %4593 = vdwg.mxu0
    %4594 = vmatpush.msra.mxu0 %v4223
    %4595 = vmatpush.msra.mxu0 %v4221
    %4596 = vmatpush.msra.mxu0 %v4219
    %4597 = vmatpush.msra.mxu0 %v4217
    %4598 = vmatpush.msra.mxu0 %v4215
    %4599 = vmatpush.msra.mxu0 %v4213
    %4600 = vmatpush.msra.mxu0 %v4211
    %4601 = vmatpush.msra.mxu0 %v4209
    %4602 = vmatpush.msra.mxu0 %v4207
    %4603 = vmatpush.msra.mxu0 %v4205
    %4604 = vmatpush.msra.mxu0 %v4203
    %4605 = vmatpush.msra.mxu0 %v4201
    %4606 = vmatpush.msra.mxu0 %v4199
    %4607 = vmatpush.msra.mxu0 %v4197
    %4608 = vmatpush.msra.mxu0 %v4195
    %4609 = vmatpush.msra.mxu0 %v4193
    %4610 = vmatmul.f32.gmra.mxu0 %v4402
    %v4611 = vpop.f32.mrf.mxu0
    %v4612 = vadd.f32 %v4525, %v4611
    %4613 = vmatmul.f32.gmra.mxu0 %v4400
    %v4614 = vpop.f32.mrf.mxu0
    %v4615 = vadd.f32 %v4528, %v4614
    %4616 = vmatmul.f32.gmra.mxu0 %v4398
    %v4617 = vpop.f32.mrf.mxu0
    %v4618 = vadd.f32 %v4531, %v4617
    %4619 = vmatmul.f32.gmra.mxu0 %v4396
    %v4620 = vpop.f32.mrf.mxu0
    %v4621 = vadd.f32 %v4534, %v4620
    %4622 = vdwg.mxu0
    %4623 = vmatpush.msra.mxu0 %v4255
    %4624 = vmatpush.msra.mxu0 %v4253
    %4625 = vmatpush.msra.mxu0 %v4251
    %4626 = vmatpush.msra.mxu0 %v4249
    %4627 = vmatpush.msra.mxu0 %v4247
    %4628 = vmatpush.msra.mxu0 %v4245
    %4629 = vmatpush.msra.mxu0 %v4243
    %4630 = vmatpush.msra.mxu0 %v4241
    %4631 = vmatpush.msra.mxu0 %v4239
    %4632 = vmatpush.msra.mxu0 %v4237
    %4633 = vmatpush.msra.mxu0 %v4235
    %4634 = vmatpush.msra.mxu0 %v4233
    %4635 = vmatpush.msra.mxu0 %v4231
    %4636 = vmatpush.msra.mxu0 %v4229
    %4637 = vmatpush.msra.mxu0 %v4227
    %4638 = vmatpush.msra.mxu0 %v4225
    %4639 = vmatmul.f32.gmra.mxu0 %v4403
    %v4640 = vpop.f32.mrf.mxu0
    %v4641 = vadd.f32 %v4612, %v4640
    %4642 = vmatmul.f32.gmra.mxu0 %v4401
    %v4643 = vpop.f32.mrf.mxu0
    %v4644 = vadd.f32 %v4615, %v4643
    %4645 = vmatmul.f32.gmra.mxu0 %v4399
    %v4646 = vpop.f32.mrf.mxu0
    %v4647 = vadd.f32 %v4618, %v4646
    %4648 = vmatmul.f32.gmra.mxu0 %v4397
    %v4649 = vpop.f32.mrf.mxu0
    %v4650 = vadd.f32 %v4621, %v4649
    %4651 = vdwg.mxu0
    %4652 = vmatpush.msra.mxu0 %v4352
    %4653 = vmatpush.msra.mxu0 %v4350
    %4654 = vmatpush.msra.mxu0 %v4348
    %4655 = vmatpush.msra.mxu0 %v4346
    %4656 = vmatpush.msra.mxu0 %v4344
    %4657 = vmatpush.msra.mxu0 %v4342
    %4658 = vmatpush.msra.mxu0 %v4340
    %4659 = vmatpush.msra.mxu0 %v4338
    %4660 = vmatpush.msra.mxu0 %v4336
    %4661 = vmatpush.msra.mxu0 %v4334
    %4662 = vmatpush.msra.mxu0 %v4332
    %4663 = vmatpush.msra.mxu0 %v4330
    %4664 = vmatpush.msra.mxu0 %v4328
    %4665 = vmatpush.msra.mxu0 %v4326
    %4666 = vmatpush.msra.mxu0 %v4324
    %4667 = vmatpush.msra.mxu0 %v4322
    %4668 = vmatmul.f32.gmra.mxu0 %v4416
    %v4669 = vpop.f32.mrf.mxu0
    %v4670 = vadd.f32 0.0, %v4669
    %4671 = vmatmul.f32.gmra.mxu0 %v4414
    %v4672 = vpop.f32.mrf.mxu0
    %v4673 = vadd.f32 0.0, %v4672
    %4674 = vmatmul.f32.gmra.mxu0 %v4412
    %v4675 = vpop.f32.mrf.mxu0
    %v4676 = vadd.f32 0.0, %v4675
    %4677 = vmatmul.f32.gmra.mxu0 %v4418
    %v4678 = vpop.f32.mrf.mxu0
    %v4679 = vadd.f32 0.0, %v4678
    %4680 = vdwg.mxu0
    %4681 = vmatpush.msra.mxu0 %v4384
    %4682 = vmatpush.msra.mxu0 %v4382
    %4683 = vmatpush.msra.mxu0 %v4380
    %4684 = vmatpush.msra.mxu0 %v4378
    %4685 = vmatpush.msra.mxu0 %v4376
    %4686 = vmatpush.msra.mxu0 %v4374
    %4687 = vmatpush.msra.mxu0 %v4372
    %4688 = vmatpush.msra.mxu0 %v4370
    %4689 = vmatpush.msra.mxu0 %v4368
    %4690 = vmatpush.msra.mxu0 %v4366
    %4691 = vmatpush.msra.mxu0 %v4364
    %4692 = vmatpush.msra.mxu0 %v4362
    %4693 = vmatpush.msra.mxu0 %v4360
    %4694 = vmatpush.msra.mxu0 %v4358
    %4695 = vmatpush.msra.mxu0 %v4356
    %4696 = vmatpush.msra.mxu0 %v4354
    %4697 = vmatmul.f32.gmra.mxu0 %v4417
    %v4698 = vpop.f32.mrf.mxu0
    %v4699 = vadd.f32 %v4670, %v4698
    %4700 = vmatmul.f32.gmra.mxu0 %v4415
    %v4701 = vpop.f32.mrf.mxu0
    %v4702 = vadd.f32 %v4673, %v4701
    %4703 = vmatmul.f32.gmra.mxu0 %v4413
    %v4704 = vpop.f32.mrf.mxu0
    %v4705 = vadd.f32 %v4676, %v4704
    %4706 = vmatmul.f32.gmra.mxu0 %v4419
    %v4707 = vpop.f32.mrf.mxu0
    %v4708 = vadd.f32 %v4679, %v4707
    %4709 = vdwg.mxu0
    %4710 = vmatpush.msra.mxu0 %v4353
    %4711 = vmatpush.msra.mxu0 %v4351
    %4712 = vmatpush.msra.mxu0 %v4349
    %4713 = vmatpush.msra.mxu0 %v4347
    %4714 = vmatpush.msra.mxu0 %v4345
    %4715 = vmatpush.msra.mxu0 %v4343
    %4716 = vmatpush.msra.mxu0 %v4341
    %4717 = vmatpush.msra.mxu0 %v4339
    %4718 = vmatpush.msra.mxu0 %v4337
    %4719 = vmatpush.msra.mxu0 %v4335
    %4720 = vmatpush.msra.mxu0 %v4333
    %4721 = vmatpush.msra.mxu0 %v4331
    %4722 = vmatpush.msra.mxu0 %v4329
    %4723 = vmatpush.msra.mxu0 %v4327
    %4724 = vmatpush.msra.mxu0 %v4325
    %4725 = vmatpush.msra.mxu0 %v4323
    %4726 = vmatmul.f32.gmra.mxu0 %v4416
    %v4727 = vpop.f32.mrf.mxu0
    %v4728 = vadd.f32 0.0, %v4727
    %4729 = vmatmul.f32.gmra.mxu0 %v4414
    %v4730 = vpop.f32.mrf.mxu0
    %v4731 = vadd.f32 0.0, %v4730
    %4732 = vmatmul.f32.gmra.mxu0 %v4412
    %v4733 = vpop.f32.mrf.mxu0
    %v4734 = vadd.f32 0.0, %v4733
    %4735 = vmatmul.f32.gmra.mxu0 %v4418
    %v4736 = vpop.f32.mrf.mxu0
    %v4737 = vadd.f32 0.0, %v4736
    %4738 = vdwg.mxu0
    %4739 = vmatpush.msra.mxu0 %v4385
    %4740 = vmatpush.msra.mxu0 %v4383
    %4741 = vmatpush.msra.mxu0 %v4381
    %4742 = vmatpush.msra.mxu0 %v4379
    %4743 = vmatpush.msra.mxu0 %v4377
    %4744 = vmatpush.msra.mxu0 %v4375
    %4745 = vmatpush.msra.mxu0 %v4373
    %4746 = vmatpush.msra.mxu0 %v4371
    %4747 = vmatpush.msra.mxu0 %v4369
    %4748 = vmatpush.msra.mxu0 %v4367
    %4749 = vmatpush.msra.mxu0 %v4365
    %4750 = vmatpush.msra.mxu0 %v4363
    %4751 = vmatpush.msra.mxu0 %v4361
    %4752 = vmatpush.msra.mxu0 %v4359
    %4753 = vmatpush.msra.mxu0 %v4357
    %4754 = vmatpush.msra.mxu0 %v4355
    %4755 = vmatmul.f32.gmra.mxu0 %v4417
    %v4756 = vpop.f32.mrf.mxu0
    %v4757 = vadd.f32 %v4728, %v4756
    %4758 = vmatmul.f32.gmra.mxu0 %v4415
    %v4759 = vpop.f32.mrf.mxu0
    %v4760 = vadd.f32 %v4731, %v4759
    %4761 = vmatmul.f32.gmra.mxu0 %v4413
    %v4762 = vpop.f32.mrf.mxu0
    %v4763 = vadd.f32 %v4734, %v4762
    %4764 = vmatmul.f32.gmra.mxu0 %v4419
    %v4765 = vpop.f32.mrf.mxu0
    %v4766 = vadd.f32 %v4737, %v4765
    %4767 = vdwg.mxu0
    %v4768 = vadd.f32 %v4583, %v4699
    %v4769 = vadd.f32 %v4641, %v4757
    %v4770 = vadd.f32 %v4586, %v4702
    %v4771 = vadd.f32 %v4644, %v4760
    %v4772 = vadd.f32 %v4589, %v4705
    %v4773 = vadd.f32 %v4647, %v4763
    %v4774 = vadd.f32 %v4592, %v4708
    %v4775 = vadd.f32 %v4650, %v4766
    %v4777 = vperm.slane %v4387, 0
    %v4778 = vperm.slane %v4387, 1
    %v4781 = vadd.f32 %v4768, %v4777
    %v4782 = vadd.f32 %v4769, %v4778
    %v4783 = vadd.f32 %v4770, %v4777
    %v4784 = vadd.f32 %v4771, %v4778
    %v4785 = vadd.f32 %v4772, %v4777
    %v4786 = vadd.f32 %v4773, %v4778
    %v4787 = vadd.f32 %v4774, %v4777
    %v4788 = vadd.f32 %v4775, %v4778
    %v4789 = vmax.f32 %v4781, 0.0
    %v4790 = vmax.f32 %v4782, 0.0
    %v4791 = vmax.f32 %v4783, 0.0
    %v4792 = vmax.f32 %v4784, 0.0
    %v4793 = vmax.f32 %v4785, 0.0
    %v4794 = vmax.f32 %v4786, 0.0
    %v4795 = vmax.f32 %v4787, 0.0
    %v4796 = vmax.f32 %v4788, 0.0
    %v4797 = vmul.f32 %v4789, %v484
    %v4798 = vmul.f32 %v4790, %v484
    %v4799 = vmul.f32 %v4791, %v489
    %v4800 = vmul.f32 %v4792, %v489
    %v4801 = vmul.f32 %v4793, %v494
    %v4802 = vmul.f32 %v4794, %v494
    %v4803 = vmul.f32 %v4795, %v499
    %v4804 = vmul.f32 %v4796, %v499
    %v4805 = vadd.f32 %v4797, %v4799
    %v4806 = vrot.slane %v4805, 4
    %v4807 = vadd.f32 %v4805, %v4806
    %v4808 = vrot.slane %v4807, 2
    %v4809 = vadd.f32 %v4807, %v4808
    %v4810 = vrot.slane %v4809, 1
    %v4811 = vadd.f32 %v4809, %v4810
    %v4812 = vadd.f32 %v4798, %v4800
    %v4813 = vrot.slane %v4812, 4
    %v4814 = vadd.f32 %v4812, %v4813
    %v4815 = vrot.slane %v4814, 2
    %v4816 = vadd.f32 %v4814, %v4815
    %v4817 = vrot.slane %v4816, 1
    %v4818 = vadd.f32 %v4816, %v4817
    %v4819 = vadd.f32 %v4801, %v4803
    %v4820 = vrot.slane %v4819, 4
    %v4821 = vadd.f32 %v4819, %v4820
    %v4822 = vrot.slane %v4821, 2
    %v4823 = vadd.f32 %v4821, %v4822
    %v4824 = vrot.slane %v4823, 1
    %v4825 = vadd.f32 %v4823, %v4824
    %v4826 = vadd.f32 %v4802, %v4804
    %v4827 = vrot.slane %v4826, 4
    %v4828 = vadd.f32 %v4826, %v4827
    %v4829 = vrot.slane %v4828, 2
    %v4830 = vadd.f32 %v4828, %v4829
    %v4831 = vrot.slane %v4830, 1
    %v4832 = vadd.f32 %v4830, %v4831
    %v4833 = vmul.f32 %v4811, 0.06666667
    %v4834 = vmul.f32 %v4818, 0.06666667
    %v4835 = vmul.f32 %v4825, 0.06666667
    %v4836 = vmul.f32 %v4832, 0.06666667
    %v4837 = vld [vmem:[#allocation10] sm:$0xff]
    %v4838 = vld [vmem:[#allocation10 + $0x8] sm:$0xff]
    %v4839 = vld [vmem:[#allocation10 + $0x10] sm:$0xff]
    %v4840 = vld [vmem:[#allocation10 + $0x18] sm:$0xff]
    %v4841 = vld [vmem:[#allocation10 + $0x20] sm:$0xff]
    %v4842 = vld [vmem:[#allocation10 + $0x28] sm:$0xff]
    %v4843 = vld [vmem:[#allocation10 + $0x30] sm:$0xff]
    %v4844 = vld [vmem:[#allocation10 + $0x38] sm:$0xff]
    %v4845 = vld [vmem:[#allocation10 + $0x40] sm:$0xff]
    %v4846 = vld [vmem:[#allocation10 + $0x48] sm:$0xff]
    %v4847 = vld [vmem:[#allocation10 + $0x50] sm:$0xff]
    %v4848 = vld [vmem:[#allocation10 + $0x58] sm:$0xff]
    %v4849 = vld [vmem:[#allocation10 + $0x60] sm:$0xff]
    %v4850 = vld [vmem:[#allocation10 + $0x68] sm:$0xff]
    %v4851 = vld [vmem:[#allocation10 + $0x70] sm:$0xff]
    %v4852 = vld [vmem:[#allocation10 + $0x78] sm:$0xff]
    %v4853 = vld [vmem:[#allocation10 + $0x80] sm:$0xff]
    %v4854 = vld [vmem:[#allocation10 + $0x88] sm:$0xff]
    %v4855 = vld [vmem:[#allocation10 + $0x90] sm:$0xff]
    %v4856 = vld [vmem:[#allocation10 + $0x98] sm:$0xff]
    %v4857 = vld [vmem:[#allocation10 + $0xa0] sm:$0xff]
    %v4858 = vld [vmem:[#allocation10 + $0xa8] sm:$0xff]
    %v4859 = vld [vmem:[#allocation10 + $0xb0] sm:$0xff]
    %v4860 = vld [vmem:[#allocation10 + $0xb8] sm:$0xff]
    %v4861 = vld [vmem:[#allocation10 + $0xc0] sm:$0xff]
    %v4862 = vld [vmem:[#allocation10 + $0xc8] sm:$0xff]
    %v4863 = vld [vmem:[#allocation10 + $0xd0] sm:$0xff]
    %v4864 = vld [vmem:[#allocation10 + $0xd8] sm:$0xff]
    %v4865 = vld [vmem:[#allocation10 + $0xe0] sm:$0xff]
    %v4866 = vld [vmem:[#allocation10 + $0xe8] sm:$0xff]
    %v4867 = vld [vmem:[#allocation10 + $0xf0] sm:$0xff]
    %v4868 = vld [vmem:[#allocation10 + $0xf8] sm:$0xff]
    %v4869 = vld [vmem:[#allocation11] sm:$0x1]
    %v4871 = vperm.slane %v4869, 0
    %vm4877 = vcmask 1041409
    %v4878 = vsel %vm4877, %v4835, %v4833
    %v4879 = vsel %vm4877, %v4836, %v4834
    %4882 = vmatpush.msra.mxu0 %v4852
    %4883 = vmatpush.msra.mxu0 %v4851
    %4884 = vmatpush.msra.mxu0 %v4850
    %4885 = vmatpush.msra.mxu0 %v4849
    %4886 = vmatpush.msra.mxu0 %v4848
    %4887 = vmatpush.msra.mxu0 %v4847
    %4888 = vmatpush.msra.mxu0 %v4846
    %4889 = vmatpush.msra.mxu0 %v4845
    %4890 = vmatpush.msra.mxu0 %v4844
    %4891 = vmatpush.msra.mxu0 %v4843
    %4892 = vmatpush.msra.mxu0 %v4842
    %4893 = vmatpush.msra.mxu0 %v4841
    %4894 = vmatpush.msra.mxu0 %v4840
    %4895 = vmatpush.msra.mxu0 %v4839
    %4896 = vmatpush.msra.mxu0 %v4838
    %4897 = vmatpush.msra.mxu0 %v4837
    %4898 = vmatmul.f32.gmra.mxu0 %v4878
    %v4899 = vpop.f32.mrf.mxu0
    %v4900 = vadd.f32 %v4871, %v4899
    %4901 = vdwg.mxu0
    %4902 = vmatpush.msra.mxu0 %v4868
    %4903 = vmatpush.msra.mxu0 %v4867
    %4904 = vmatpush.msra.mxu0 %v4866
    %4905 = vmatpush.msra.mxu0 %v4865
    %4906 = vmatpush.msra.mxu0 %v4864
    %4907 = vmatpush.msra.mxu0 %v4863
    %4908 = vmatpush.msra.mxu0 %v4862
    %4909 = vmatpush.msra.mxu0 %v4861
    %4910 = vmatpush.msra.mxu0 %v4860
    %4911 = vmatpush.msra.mxu0 %v4859
    %4912 = vmatpush.msra.mxu0 %v4858
    %4913 = vmatpush.msra.mxu0 %v4857
    %4914 = vmatpush.msra.mxu0 %v4856
    %4915 = vmatpush.msra.mxu0 %v4855
    %4916 = vmatpush.msra.mxu0 %v4854
    %4917 = vmatpush.msra.mxu0 %v4853
    %4918 = vmatmul.f32.gmra.mxu0 %v4879
    %v4919 = vpop.f32.mrf.mxu0
    %v4920 = vadd.f32 %v4900, %v4919
    %4921 = vdwg.mxu0
    %v4922 = vmax.f32 %v4920, 0.0
    %v4923 = vld [vmem:[#allocation13] sm:$0xff]
    %v4924 = vld [vmem:[#allocation13 + $0x8] sm:$0xff]
    %v4925 = vld [vmem:[#allocation13 + $0x10] sm:$0xff]
    %v4926 = vld [vmem:[#allocation13 + $0x18] sm:$0xff]
    %v4927 = vld [vmem:[#allocation13 + $0x20] sm:$0xff]
    %v4928 = vld [vmem:[#allocation13 + $0x28] sm:$0xff]
    %v4929 = vld [vmem:[#allocation13 + $0x30] sm:$0xff]
    %v4930 = vld [vmem:[#allocation13 + $0x38] sm:$0xff]
    %v4931 = vld [vmem:[#allocation13 + $0x40] sm:$0xff]
    %v4932 = vld [vmem:[#allocation13 + $0x48] sm:$0xff]
    %v4933 = vld [vmem:[#allocation13 + $0x50] sm:$0xff]
    %v4934 = vld [vmem:[#allocation13 + $0x58] sm:$0xff]
    %v4935 = vld [vmem:[#allocation13 + $0x60] sm:$0xff]
    %v4936 = vld [vmem:[#allocation13 + $0x68] sm:$0xff]
    %v4937 = vld [vmem:[#allocation13 + $0x70] sm:$0xff]
    %v4938 = vld [vmem:[#allocation13 + $0x78] sm:$0xff]
    %v4939 = vld [vmem:[#allocation14] sm:$0x1]
    %v4941 = vperm.slane %v4939, 0
    %4943 = vmatpush.msra.mxu0 %v4938
    %4944 = vmatpush.msra.mxu0 %v4937
    %4945 = vmatpush.msra.mxu0 %v4936
    %4946 = vmatpush.msra.mxu0 %v4935
    %4947 = vmatpush.msra.mxu0 %v4934
    %4948 = vmatpush.msra.mxu0 %v4933
    %4949 = vmatpush.msra.mxu0 %v4932
    %4950 = vmatpush.msra.mxu0 %v4931
    %4951 = vmatpush.msra.mxu0 %v4930
    %4952 = vmatpush.msra.mxu0 %v4929
    %4953 = vmatpush.msra.mxu0 %v4928
    %4954 = vmatpush.msra.mxu0 %v4927
    %4955 = vmatpush.msra.mxu0 %v4926
    %4956 = vmatpush.msra.mxu0 %v4925
    %4957 = vmatpush.msra.mxu0 %v4924
    %4958 = vmatpush.msra.mxu0 %v4923
    %4959 = vmatmul.f32.gmra.mxu0 %v4922
    %v4960 = vpop.f32.mrf.mxu0
    %v4961 = vadd.f32 %v4941, %v4960
    %4962 = vdwg.mxu0
    %4963 = vst [vmem:[#allocation16] sm:$0x3] %v4961
    // Predicated region
    $region74: #{_forward.1} parent=1 // pred_check
      _
    $region75: #{_forward.1} parent=1 // pred_check_branch
      %4965 = sbr.rel (0) target = $region77
    $region76: #{_forward.1} parent=1 // pred_region
      %4967 = vsyncadd [#allocation4], 0
      %s4969 = sshll.u32 [#allocation16], 4
      %s4970 = int_to_ptr.vmem [resolvable:$true] %s4969
      %s4971 = sshll.u32 %s10, 4
      %s4972 = int_to_ptr.hbm [resolvable:$true] %s4971
      %4974 = dma.vmem_to_hbm [thread:$0]  %s4970, 32, %s4972, [#allocation4]
    $region77: #{_forward.1} parent=1 // pred_fallthru
      _
    // Predicated region
    $region78: #{_forward.1} parent=1 // pred_check
      _
    $region79: #{_forward.1} parent=1 // pred_check_branch
      %4976 = sbr.rel (0) target = $region81
    $region80: #{_forward.1} parent=1 // pred_region
      %4978 = dma.done [#allocation4], 32
    $region81: #{_forward.1} parent=1 // pred_fallthru
      _
    %4979 = vsyncpa [#allocation3], 1
    %4980 = vsyncpa [#allocation6], 1
    %4981 = vsyncpa [#allocation9], 1
    %4982 = vsyncpa [#allocation12], 1
    %4983 = vsyncpa [#allocation15], 1
    %4984 = vsyncpa [#allocation4], 1

</llo_original>
